<compile_context>
chip_gen: v6e
topology: v6e:2x2x1
jax: 0.10.0
libtpu: 0.0.40
codegen_flags: <defaults>
</compile_context>

<pallas_src>
import jax
import jax.numpy as jnp
from jax import lax
from jax.experimental import pallas as pl
from jax.experimental.pallas import tpu as pltpu

B_J0 = 0.01   # b_j0
BETA = 1.8    # isAdapt=1
DT = 1.0
R_M = 1.0
LANE = 128
SUBLANE = 8


# ------------------------- Pallas kernel -------------------------

def _make_kernel(tb, nb, h1p, h2p, h3p, unroll_full):
    """Build the time-block kernel with static sizes closed over."""

    def kernel(
        # inputs
        xp_ref,                        # (tb, nb, h1p)  precomputed i2h_1(x) + bi1 + bh1
        wh1_ref,                       # (h1p, h1p)
        wi2_ref, wh2_ref, b2_ref,      # (h1p, h2p), (h2p, h2p), (1, h2p)
        wi3_ref, wh3_ref, b3_ref,      # (h2p, h3p), (h3p, h3p), (1, h3p)
        dp1_ref, dp2_ref, dp3_ref,     # (4, h): rows = [alpha, 1-alpha, ro, 1-ro]
        # outputs
        seq_ref,                       # (tb, nb, 2*h3p) packed [mem3 | spike3] per step
        fmem1_ref, fsp1_ref, fb1_ref,  # (nb, h1p) final state (written at last time block)
        fmem2_ref, fsp2_ref, fb2_ref,  # (nb, h2p)
        fb3_ref,                       # (nb, h3p) (mem3/sp3 finals come from seq output)
        # scratch: persistent recurrent state
        st1m, st1s, st1b,
        st2m, st2s, st2b,
        st3m, st3s, st3b,
    ):
        t_blk = pl.program_id(1)
        n_tblk = pl.num_programs(1)

        @pl.when(t_blk == 0)
        def _init_state():
            for r in (st1m, st1s, st2m, st2s, st3m, st3s):
                r[...] = jnp.zeros_like(r)
            for r in (st1b, st2b, st3b):
                r[...] = jnp.full_like(r, B_J0)

        # ---- loop-invariant values, hoisted & pre-broadcast once per block ----
        def bcast4(dp_ref, h):
            return tuple(jnp.broadcast_to(dp_ref[r:r + 1, :], (nb, h)) for r in range(4))

        a1, oma1, ro1, omr1 = bcast4(dp1_ref, h1p)
        a2, oma2, ro2, omr2 = bcast4(dp2_ref, h2p)
        a3, oma3, ro3, omr3 = bcast4(dp3_ref, h3p)

        wh1 = wh1_ref[...]
        wi2 = wi2_ref[...]
        wh2 = wh2_ref[...]
        wi3 = wi3_ref[...]
        wh3 = wh3_ref[...]
        bias2 = jnp.broadcast_to(b2_ref[...], (nb, h2p))
        bias3 = jnp.broadcast_to(b3_ref[...], (nb, h3p))
        wdt = wh1.dtype   # f32 by default, bf16 if bf16_weights=True in the wrapper

        def alif(inp, mem, sp_prev, b, alpha, oma, ro, omr):
            # mem_update_adp semantics (isAdapt=1, R_m=1, dt=1)
            b_new = ro * b + omr * sp_prev
            theta = B_J0 + BETA * b_new
            mem_new = mem * alpha + oma * inp - theta * sp_prev
            spike = (mem_new - theta > 0.0).astype(jnp.float32)   # ActFun_adp fwd: gt(0).float()
            return mem_new, spike, b_new

        def step(i, carry):
            m1, s1, b1, m2, s2, b2c, m3, s3, b3c = carry

            # layer 1: i2h_1(x)+biases precomputed; only the recurrent dot here
            u1 = xp_ref[i] + jnp.dot(s1.astype(wdt), wh1,
                                     preferred_element_type=jnp.float32)
            m1, s1, b1 = alif(u1, m1, s1, b1, a1, oma1, ro1, omr1)

            # layer 2: two small dots (no VMEM concat staging)
            u2 = (jnp.dot(s1.astype(wdt), wi2, preferred_element_type=jnp.float32)
                  + jnp.dot(s2.astype(wdt), wh2, preferred_element_type=jnp.float32)
                  + bias2)
            m2, s2, b2c = alif(u2, m2, s2, b2c, a2, oma2, ro2, omr2)

            # layer 3
            u3 = (jnp.dot(s2.astype(wdt), wi3, preferred_element_type=jnp.float32)
                  + jnp.dot(s3.astype(wdt), wh3, preferred_element_type=jnp.float32)
                  + bias3)
            m3, s3, b3c = alif(u3, m3, s3, b3c, a3, oma3, ro3, omr3)

            # packed per-step output: both stores are lane-aligned (h3p % 128 == 0)
            seq_ref[i, :, :h3p] = m3
            seq_ref[i, :, h3p:] = s3
            return (m1, s1, b1, m2, s2, b2c, m3, s3, b3c)

        carry0 = (st1m[...], st1s[...], st1b[...],
                  st2m[...], st2s[...], st2b[...],
                  st3m[...], st3s[...], st3b[...])

        if unroll_full:
            carry = carry0
            for i in range(tb):
                carry = step(i, carry)
        else:
            carry = lax.fori_loop(0, tb, step, carry0, unroll=4)

        m1, s1, b1, m2, s2, b2c, m3, s3, b3c = carry

        # persist recurrent state across time blocks
        st1m[...] = m1; st1s[...] = s1; st1b[...] = b1
        st2m[...] = m2; st2s[...] = s2; st2b[...] = b2c
        st3m[...] = m3; st3s[...] = s3; st3b[...] = b3c

        # final-state writeback only on the last time block
        @pl.when(t_blk == n_tblk - 1)
        def _finalize():
            fmem1_ref[...] = m1; fsp1_ref[...] = s1; fb1_ref[...] = b1
            fmem2_ref[...] = m2; fsp2_ref[...] = s2; fb2_ref[...] = b2c
            fb3_ref[...] = b3c

    return kernel


# ------------------------- wrapper helpers -------------------------

def _round_up(x, m):
    return -(-int(x) // m) * m


def _pick_div_block(total, target):
    blk = max(1, min(int(target), int(total)))
    while total % blk:
        blk -= 1
    return blk


def _pick_batch_block(n_pad, target):
    """Largest multiple-of-8 divisor of n_pad that is <= target (fallback n_pad)."""
    target = max(SUBLANE, min(int(target), int(n_pad)))
    best = None
    c = SUBLANE
    while c <= n_pad:
        if n_pad % c == 0 and c <= target:
            best = c
        c += SUBLANE
    return best if best is not None else n_pad


def _pad2(a, rows, cols, value=0.0):
    r, c = a.shape
    return jnp.pad(a, ((0, rows - r), (0, cols - c)), constant_values=value)


# ------------------------- wrapper -------------------------

def srnn_alif_forward(x_nti, params, *, time_block=16, batch_block=None,
                      bf16_weights=False, vmem_limit_bytes=None):
    """x_nti: (N, T, in_size) float32. Returns (output, final_state, fire_rate, hidden_spike)."""
    N, T, IN = x_nti.shape
    H1 = params["wi1"].shape[1]
    H2 = params["wi2"].shape[1]
    H3 = params["wi3"].shape[1]
    h1p, h2p, h3p = (_round_up(h, LANE) for h in (H1, H2, H3))

    # pad batch to a sublane multiple (8)
    n_pad = _round_up(N, SUBLANE)
    if batch_block is None:
        # >=2 batch blocks when possible so the "parallel" axis can shard across
        # TensorCores (v7x megacore); single block otherwise.
        batch_block = n_pad // 2 if n_pad >= 2 * SUBLANE else n_pad
    nb = _pick_batch_block(n_pad, batch_block)
    tb = _pick_div_block(T, time_block)
    n_bblk, n_tblk = n_pad // nb, T // tb

    x_t = jnp.transpose(x_nti, (1, 0, 2))                      # (T, N, IN) time-major
    if n_pad != N:
        x_t = jnp.pad(x_t, ((0, 0), (0, n_pad - N), (0, 0)))

    # --- hoisted loop-invariant precomputation (plain XLA, lane-dense) ---
    wi1p = _pad2(params["wi1"], IN, h1p)
    b1f = _pad2(params["bi1"] + params["bh1"], 1, h1p)
    xproj = jnp.einsum("tni,ih->tnh", x_t, wi1p) + b1f         # (T, n_pad, h1p)

    wh1p = _pad2(params["wh1"], h1p, h1p)
    wi2p = _pad2(params["wi2"], h1p, h2p)
    wh2p = _pad2(params["wh2"], h2p, h2p)
    b2f = _pad2(params["bi2"] + params["bh2"], 1, h2p)
    wi3p = _pad2(params["wi3"], h2p, h3p)
    wh3p = _pad2(params["wh3"], h3p, h3p)
    b3f = _pad2(params["bi3"] + params["bh3"], 1, h3p)

    if bf16_weights:
        # spikes are exactly {0,1} (lossless LHS cast); only weight rounding differs.
        wh1p, wi2p, wh2p, wi3p, wh3p = (
            w.astype(jnp.bfloat16) for w in (wh1p, wi2p, wh2p, wi3p, wh3p))

    def decay_table(tau_m, tau_adp, hp):
        alpha = jnp.exp(-DT / tau_m)       # (1, H)
        ro = jnp.exp(-DT / tau_adp)        # (1, H)
        h = alpha.shape[1]
        # pad with alpha=ro=1 -> padded neurons keep mem=0, b=b_j0 and never spike
        alpha = jnp.pad(alpha, ((0, 0), (0, hp - h)), constant_values=1.0)
        ro = jnp.pad(ro, ((0, 0), (0, hp - h)), constant_values=1.0)
        return jnp.concatenate([alpha, 1.0 - alpha, ro, 1.0 - ro],
                               axis=0).astype(jnp.float32)

    dp1 = decay_table(params["tau_m_h1"], params["tau_adp_h1"], h1p)
    dp2 = decay_table(params["tau_m_h2"], params["tau_adp_h2"], h2p)
    dp3 = decay_table(params["tau_m_h3"], params["tau_adp_h3"], h3p)

    kernel = _make_kernel(tb, nb, h1p, h2p, h3p, unroll_full=(tb <= 32))

    def const_spec(arr):
        nd = arr.ndim
        return pl.BlockSpec(arr.shape, lambda b, t, _nd=nd: (0,) * _nd)

    in_specs = [
        pl.BlockSpec((tb, nb, h1p), lambda b, t: (t, b, 0)),   # xproj
        const_spec(wh1p),
        const_spec(wi2p), const_spec(wh2p), const_spec(b2f),
        const_spec(wi3p), const_spec(wh3p), const_spec(b3f),
        const_spec(dp1), const_spec(dp2), const_spec(dp3),
    ]

    fin_spec = lambda: pl.BlockSpec(None, None)  # placeholder (overwritten below)
    out_shapes = (
        jax.ShapeDtypeStruct((T, n_pad, 2 * h3p), jnp.float32),   # packed [mem3 | spike3]
        jax.ShapeDtypeStruct((n_pad, h1p), jnp.float32),          # final mem1
        jax.ShapeDtypeStruct((n_pad, h1p), jnp.float32),          # final spike1
        jax.ShapeDtypeStruct((n_pad, h1p), jnp.float32),          # final b1
        jax.ShapeDtypeStruct((n_pad, h2p), jnp.float32),          # final mem2
        jax.ShapeDtypeStruct((n_pad, h2p), jnp.float32),          # final spike2
        jax.ShapeDtypeStruct((n_pad, h2p), jnp.float32),          # final b2
        jax.ShapeDtypeStruct((n_pad, h3p), jnp.float32),          # final b3
    )
    out_specs = (
        pl.BlockSpec((tb, nb, 2 * h3p), lambda b, t: (t, b, 0)),
        pl.BlockSpec((nb, h1p), lambda b, t: (b, 0)),
        pl.BlockSpec((nb, h1p), lambda b, t: (b, 0)),
        pl.BlockSpec((nb, h1p), lambda b, t: (b, 0)),
        pl.BlockSpec((nb, h2p), lambda b, t: (b, 0)),
        pl.BlockSpec((nb, h2p), lambda b, t: (b, 0)),
        pl.BlockSpec((nb, h2p), lambda b, t: (b, 0)),
        pl.BlockSpec((nb, h3p), lambda b, t: (b, 0)),
    )
    scratch_shapes = [
        pltpu.VMEM((nb, h1p), jnp.float32), pltpu.VMEM((nb, h1p), jnp.float32),
        pltpu.VMEM((nb, h1p), jnp.float32),
        pltpu.VMEM((nb, h2p), jnp.float32), pltpu.VMEM((nb, h2p), jnp.float32),
        pltpu.VMEM((nb, h2p), jnp.float32),
        pltpu.VMEM((nb, h3p), jnp.float32), pltpu.VMEM((nb, h3p), jnp.float32),
        pltpu.VMEM((nb, h3p), jnp.float32),
    ]

    # rough VMEM budget (double-buffered tiles + weights + finals + scratch)
    wbytes = 2 if bf16_weights else 4
    est = int(1.3 * (
        2 * (tb * nb * h1p * 4                                   # xproj tile
             + tb * nb * 2 * h3p * 4                             # seq output tile
             + (h1p * h1p + h1p * h2p + h2p * h2p + h2p * h3p + h3p * h3p) * wbytes
             + (h2p + h3p + 4 * (h1p + h2p + h3p)) * 4           # biases + decay tables
             + nb * (3 * h1p + 3 * h2p + h3p) * 4)               # final-state tiles
        + nb * 3 * (h1p + h2p + h3p) * 4))                       # scratch state
    if vmem_limit_bytes is None and est > (30 << 20):
        # NOTE: on v7x (64 MiB physical VMEM) pass vmem_limit_bytes / smaller
        # (time_block, batch_block) explicitly.
        vmem_limit_bytes = min(est, 100 << 20)

    results = pl.pallas_call(
        kernel,
        out_shape=out_shapes,
        grid_spec=pltpu.PrefetchScalarGridSpec(
            num_scalar_prefetch=0,
            grid=(n_bblk, n_tblk),
            in_specs=in_specs,
            out_specs=out_specs,
            scratch_shapes=scratch_shapes,
        ),
        compiler_params=pltpu.CompilerParams(
            # batch shards across TensorCores (v7x); time is the serial recurrence
            dimension_semantics=("parallel", "arbitrary"),
            vmem_limit_bytes=vmem_limit_bytes,
        ),
    )(xproj, wh1p, wi2p, wh2p, b2f, wi3p, wh3p, b3f, dp1, dp2, dp3)

    seq, fmem1, fsp1, fb1, fmem2, fsp2, fb2, fb3 = results

    # drop batch padding; keep lane-padded H3 for the readout matmul
    mem3_seq = seq[:, :N, :h3p]                                  # (T, N, h3p)
    spk3_seq = seq[:, :N, h3p:h3p + H3]                          # (T, N, H3)

    # hoisted readout: one big lane-dense matmul instead of T tiny in-kernel dots
    wo_p = jnp.pad(params["wo"], ((0, h3p - H3), (0, 0)))
    output = jnp.einsum("tnh,ho->tno", mem3_seq, wo_p) + params["bo"]
    output = jnp.transpose(output, (1, 0, 2))                    # (N, T, OUT)
    # TODO(synk): the (T,N,H3)->(N,T,H3) transpose below is an extra HBM round
    # trip over the spike sequence; fuse into the downstream consumer if hot.
    hidden_spike = jnp.transpose(spk3_seq, (1, 0, 2))            # (N, T, H3)

    sp1, sp2, sp3 = fsp1[:N, :H1], fsp2[:N, :H2], spk3_seq[-1]
    final_state = {
        "mem_list": [fmem1[:N, :H1], fmem2[:N, :H2], mem3_seq[-1, :, :H3]],
        "spike_list": [sp1, sp2, sp3],
        "b_list": [fb1[:N, :H1], fb2[:N, :H2], fb3[:N, :H3]],
    }
    # matches the reference: fire rate of the FINAL-step spikes only
    n_nonzeros = (jnp.count_nonzero(sp1) + jnp.count_nonzero(sp2)
                  + jnp.count_nonzero(sp3))
    n_neurons = sp1.size + sp2.size + sp3.size
    fire_rate = n_nonzeros / n_neurons
    return output, final_state, fire_rate, hidden_spike


# ------------------------- deterministic parameter init -------------------------

def init_params(key, in_size, cfg_fc, out_size):
    ks = iter(jax.random.split(key, 32))

    def xavier(k, fan_in, fan_out):
        bound = (6.0 / (fan_in + fan_out)) ** 0.5
        # stored as (in, out), i.e. W.T relative to nn.Linear
        return jax.random.uniform(k, (fan_in, fan_out), jnp.float32, -bound, bound)

    def orthogonal(k, n):
        a = jax.random.normal(k, (n, n), jnp.float32)
        q, r = jnp.linalg.qr(a)
        return (q * jnp.sign(jnp.diag(r))).astype(jnp.float32)

    def tau(k, shape, mean, std):
        t = mean + std * jax.random.normal(k, shape, jnp.float32)
        # guard the synthetic init against non-positive draws (harness-only)
        return jnp.maximum(t, 0.1)

    H1, H2, H3 = cfg_fc
    p = {
        "wi1": xavier(next(ks), in_size, H1), "bi1": jnp.zeros((1, H1), jnp.float32),
        "wh1": orthogonal(next(ks), H1),      "bh1": jnp.zeros((1, H1), jnp.float32),
        "wi2": xavier(next(ks), H1, H2),      "bi2": jnp.zeros((1, H2), jnp.float32),
        "wh2": orthogonal(next(ks), H2),      "bh2": jnp.zeros((1, H2), jnp.float32),
        "wi3": xavier(next(ks), H2, H3),      "bi3": jnp.zeros((1, H3), jnp.float32),
        "wh3": orthogonal(next(ks), H3),      "bh3": jnp.zeros((1, H3), jnp.float32),
        "wo":  xavier(next(ks), H3, out_size),
        "bo":  jnp.zeros((1, out_size), jnp.float32),
        "tau_adp_h1": tau(next(ks), (1, H1), 700.0, 25.0),
        "tau_adp_h2": tau(next(ks), (1, H2), 700.0, 25.0),
        "tau_adp_h3": tau(next(ks), (1, H3), 700.0, 25.0),
        "tau_m_h1": tau(next(ks), (1, H1), 5.0, 1.0),
        "tau_m_h2": tau(next(ks), (1, H2), 5.0, 1.0),
        "tau_m_h3": tau(next(ks), (1, H3), 5.0, 1.0),
    }
    # TODO(synk): tau_adp_o / tau_m_o are declared in the PyTorch __init__ but unused in forward; omitted.
    return p


# ------------------------- main -------------------------

if __name__ == "__main__":
    key = jax.random.PRNGKey(0)
    N, T, IN = 2, 8, 16          # batch=2, seq=8, in_size=16
    cfg_fc = (32, 32, 32)        # hidden sizes
    OUT = 4                      # n_out

    kp, kx = jax.random.split(key)
    params = init_params(kp, IN, cfg_fc, OUT)
    x = jax.random.normal(kx, (N, T, IN), jnp.float32)   # (batch, seq, in_size)

    fwd = jax.jit(srnn_alif_forward)
    output, final_state, fire_rate, hidden_spike = fwd(x, params)
    jax.block_until_ready((output, hidden_spike, fire_rate,
                           final_state["mem_list"][0]))

    assert output.shape == (N, T, OUT)
    assert hidden_spike.shape == (N, T, cfg_fc[2])
    assert final_state["b_list"][0].shape == (N, cfg_fc[0])
    assert final_state["mem_list"][2].shape == (N, cfg_fc[2])
    assert bool(jnp.all(jnp.isfinite(output)))
    print("KERNEL_OK")
</pallas_src>

<mosaic_0001>
module attributes {stable_mosaic.version = 11 : i64} {
  func.func @kernel(%arg0: i32, %arg1: i32, %arg2: memref<8x8x128xf32, #tpu.memory_space<vmem>>, %arg3: memref<128x128xf32, #tpu.memory_space<vmem>>, %arg4: memref<128x128xf32, #tpu.memory_space<vmem>>, %arg5: memref<128x128xf32, #tpu.memory_space<vmem>>, %arg6: memref<1x128xf32, #tpu.memory_space<vmem>>, %arg7: memref<128x128xf32, #tpu.memory_space<vmem>>, %arg8: memref<128x128xf32, #tpu.memory_space<vmem>>, %arg9: memref<1x128xf32, #tpu.memory_space<vmem>>, %arg10: memref<4x128xf32, #tpu.memory_space<vmem>>, %arg11: memref<4x128xf32, #tpu.memory_space<vmem>>, %arg12: memref<4x128xf32, #tpu.memory_space<vmem>>, %arg13: memref<8x8x256xf32, #tpu.memory_space<vmem>>, %arg14: memref<8x128xf32, #tpu.memory_space<vmem>>, %arg15: memref<8x128xf32, #tpu.memory_space<vmem>>, %arg16: memref<8x128xf32, #tpu.memory_space<vmem>>, %arg17: memref<8x128xf32, #tpu.memory_space<vmem>>, %arg18: memref<8x128xf32, #tpu.memory_space<vmem>>, %arg19: memref<8x128xf32, #tpu.memory_space<vmem>>, %arg20: memref<8x128xf32, #tpu.memory_space<vmem>>, %arg21: memref<8x128xf32, #tpu.memory_space<vmem>>, %arg22: memref<8x128xf32, #tpu.memory_space<vmem>>, %arg23: memref<8x128xf32, #tpu.memory_space<vmem>>, %arg24: memref<8x128xf32, #tpu.memory_space<vmem>>, %arg25: memref<8x128xf32, #tpu.memory_space<vmem>>, %arg26: memref<8x128xf32, #tpu.memory_space<vmem>>, %arg27: memref<8x128xf32, #tpu.memory_space<vmem>>, %arg28: memref<8x128xf32, #tpu.memory_space<vmem>>, %arg29: memref<8x128xf32, #tpu.memory_space<vmem>>) attributes {dimension_semantics = [#tpu.dimension_semantics<parallel>, #tpu.dimension_semantics<arbitrary>], iteration_bounds = array<i64: 1, 1>, scalar_prefetch = 0 : i64, scratch_operands = 9 : i64, tpu.core_type = #tpu.core_type<tc>, window_params = [{transform_indices = @transform_0, window_bounds = array<i64: 8, 8, 128>}, {pipeline_mode = #tpu.pipeline_mode<synchronous>, transform_indices = @transform_1, window_bounds = array<i64: 128, 128>}, {pipeline_mode = #tpu.pipeline_mode<synchronous>, transform_indices = @transform_2, window_bounds = array<i64: 128, 128>}, {pipeline_mode = #tpu.pipeline_mode<synchronous>, transform_indices = @transform_3, window_bounds = array<i64: 128, 128>}, {pipeline_mode = #tpu.pipeline_mode<synchronous>, transform_indices = @transform_4, window_bounds = array<i64: 1, 128>}, {pipeline_mode = #tpu.pipeline_mode<synchronous>, transform_indices = @transform_5, window_bounds = array<i64: 128, 128>}, {pipeline_mode = #tpu.pipeline_mode<synchronous>, transform_indices = @transform_6, window_bounds = array<i64: 128, 128>}, {pipeline_mode = #tpu.pipeline_mode<synchronous>, transform_indices = @transform_7, window_bounds = array<i64: 1, 128>}, {pipeline_mode = #tpu.pipeline_mode<synchronous>, transform_indices = @transform_8, window_bounds = array<i64: 4, 128>}, {pipeline_mode = #tpu.pipeline_mode<synchronous>, transform_indices = @transform_9, window_bounds = array<i64: 4, 128>}, {pipeline_mode = #tpu.pipeline_mode<synchronous>, transform_indices = @transform_10, window_bounds = array<i64: 4, 128>}, {transform_indices = @transform_11, window_bounds = array<i64: 8, 8, 256>}, {transform_indices = @transform_12, window_bounds = array<i64: 8, 128>}, {transform_indices = @transform_13, window_bounds = array<i64: 8, 128>}, {transform_indices = @transform_14, window_bounds = array<i64: 8, 128>}, {transform_indices = @transform_15, window_bounds = array<i64: 8, 128>}, {transform_indices = @transform_16, window_bounds = array<i64: 8, 128>}, {transform_indices = @transform_17, window_bounds = array<i64: 8, 128>}, {transform_indices = @transform_18, window_bounds = array<i64: 8, 128>}]} {
    %c0_i32 = arith.constant 0 : i32
    %0 = arith.cmpi eq, %arg1, %c0_i32 : i32
    %1 = arith.extui %0 : i1 to i32
    %c0_i32_0 = arith.constant 0 : i32
    %2 = arith.cmpi ne, %1, %c0_i32_0 : i32
    scf.if %2 {
      %cst_251 = arith.constant 0.000000e+00 : f32
      %623 = vector.broadcast %cst_251 : f32 to vector<8x128xf32>
      %c0_252 = arith.constant 0 : index
      %c0_253 = arith.constant 0 : index
      %624 = vector.load %arg21[%c0_252, %c0_253] : memref<8x128xf32, #tpu.memory_space<vmem>>, vector<8x128xf32>
      tpu.vector_store %arg21[%c0_252, %c0_253], %623 {strides = array<i32>} : memref<8x128xf32, #tpu.memory_space<vmem>>, vector<8x128xf32>,
      %cst_254 = arith.constant 0.000000e+00 : f32
      %625 = vector.broadcast %cst_254 : f32 to vector<8x128xf32>
      %c0_255 = arith.constant 0 : index
      %c0_256 = arith.constant 0 : index
      %626 = vector.load %arg22[%c0_255, %c0_256] : memref<8x128xf32, #tpu.memory_space<vmem>>, vector<8x128xf32>
      tpu.vector_store %arg22[%c0_255, %c0_256], %625 {strides = array<i32>} : memref<8x128xf32, #tpu.memory_space<vmem>>, vector<8x128xf32>,
      %cst_257 = arith.constant 0.000000e+00 : f32
      %627 = vector.broadcast %cst_257 : f32 to vector<8x128xf32>
      %c0_258 = arith.constant 0 : index
      %c0_259 = arith.constant 0 : index
      %628 = vector.load %arg24[%c0_258, %c0_259] : memref<8x128xf32, #tpu.memory_space<vmem>>, vector<8x128xf32>
      tpu.vector_store %arg24[%c0_258, %c0_259], %627 {strides = array<i32>} : memref<8x128xf32, #tpu.memory_space<vmem>>, vector<8x128xf32>,
      %cst_260 = arith.constant 0.000000e+00 : f32
      %629 = vector.broadcast %cst_260 : f32 to vector<8x128xf32>
      %c0_261 = arith.constant 0 : index
      %c0_262 = arith.constant 0 : index
      %630 = vector.load %arg25[%c0_261, %c0_262] : memref<8x128xf32, #tpu.memory_space<vmem>>, vector<8x128xf32>
      tpu.vector_store %arg25[%c0_261, %c0_262], %629 {strides = array<i32>} : memref<8x128xf32, #tpu.memory_space<vmem>>, vector<8x128xf32>,
      %cst_263 = arith.constant 0.000000e+00 : f32
      %631 = vector.broadcast %cst_263 : f32 to vector<8x128xf32>
      %c0_264 = arith.constant 0 : index
      %c0_265 = arith.constant 0 : index
      %632 = vector.load %arg27[%c0_264, %c0_265] : memref<8x128xf32, #tpu.memory_space<vmem>>, vector<8x128xf32>
      tpu.vector_store %arg27[%c0_264, %c0_265], %631 {strides = array<i32>} : memref<8x128xf32, #tpu.memory_space<vmem>>, vector<8x128xf32>,
      %cst_266 = arith.constant 0.000000e+00 : f32
      %633 = vector.broadcast %cst_266 : f32 to vector<8x128xf32>
      %c0_267 = arith.constant 0 : index
      %c0_268 = arith.constant 0 : index
      %634 = vector.load %arg28[%c0_267, %c0_268] : memref<8x128xf32, #tpu.memory_space<vmem>>, vector<8x128xf32>
      tpu.vector_store %arg28[%c0_267, %c0_268], %633 {strides = array<i32>} : memref<8x128xf32, #tpu.memory_space<vmem>>, vector<8x128xf32>,
      %cst_269 = arith.constant 0.00999999977 : f32
      %635 = vector.broadcast %cst_269 : f32 to vector<8x128xf32>
      %c0_270 = arith.constant 0 : index
      %c0_271 = arith.constant 0 : index
      %636 = vector.load %arg23[%c0_270, %c0_271] : memref<8x128xf32, #tpu.memory_space<vmem>>, vector<8x128xf32>
      tpu.vector_store %arg23[%c0_270, %c0_271], %635 {strides = array<i32>} : memref<8x128xf32, #tpu.memory_space<vmem>>, vector<8x128xf32>,
      %cst_272 = arith.constant 0.00999999977 : f32
      %637 = vector.broadcast %cst_272 : f32 to vector<8x128xf32>
      %c0_273 = arith.constant 0 : index
      %c0_274 = arith.constant 0 : index
      %638 = vector.load %arg26[%c0_273, %c0_274] : memref<8x128xf32, #tpu.memory_space<vmem>>, vector<8x128xf32>
      tpu.vector_store %arg26[%c0_273, %c0_274], %637 {strides = array<i32>} : memref<8x128xf32, #tpu.memory_space<vmem>>, vector<8x128xf32>,
      %cst_275 = arith.constant 0.00999999977 : f32
      %639 = vector.broadcast %cst_275 : f32 to vector<8x128xf32>
      %c0_276 = arith.constant 0 : index
      %c0_277 = arith.constant 0 : index
      %640 = vector.load %arg29[%c0_276, %c0_277] : memref<8x128xf32, #tpu.memory_space<vmem>>, vector<8x128xf32>
      tpu.vector_store %arg29[%c0_276, %c0_277], %639 {strides = array<i32>} : memref<8x128xf32, #tpu.memory_space<vmem>>, vector<8x128xf32>,
    } else {
    }
    %c0 = arith.constant 0 : index
    %c0_1 = arith.constant 0 : index
    %3 = vector.load %arg10[%c0, %c0_1] : memref<4x128xf32, #tpu.memory_space<vmem>>, vector<1x128xf32>
    %4 = vector.shape_cast %3 : vector<1x128xf32> to vector<1x128xf32>
    %5 = vector.broadcast %4 : vector<1x128xf32> to vector<8x128xf32>
    %c1 = arith.constant 1 : index
    %c0_2 = arith.constant 0 : index
    %6 = vector.load %arg10[%c1, %c0_2] : memref<4x128xf32, #tpu.memory_space<vmem>>, vector<1x128xf32>
    %7 = vector.shape_cast %6 : vector<1x128xf32> to vector<1x128xf32>
    %8 = vector.broadcast %7 : vector<1x128xf32> to vector<8x128xf32>
    %c2 = arith.constant 2 : index
    %c0_3 = arith.constant 0 : index
    %9 = vector.load %arg10[%c2, %c0_3] : memref<4x128xf32, #tpu.memory_space<vmem>>, vector<1x128xf32>
    %10 = vector.shape_cast %9 : vector<1x128xf32> to vector<1x128xf32>
    %11 = vector.broadcast %10 : vector<1x128xf32> to vector<8x128xf32>
    %c3 = arith.constant 3 : index
    %c0_4 = arith.constant 0 : index
    %12 = vector.load %arg10[%c3, %c0_4] : memref<4x128xf32, #tpu.memory_space<vmem>>, vector<1x128xf32>
    %13 = vector.shape_cast %12 : vector<1x128xf32> to vector<1x128xf32>
    %14 = vector.broadcast %13 : vector<1x128xf32> to vector<8x128xf32>
    %c0_5 = arith.constant 0 : index
    %c0_6 = arith.constant 0 : index
    %15 = vector.load %arg11[%c0_5, %c0_6] : memref<4x128xf32, #tpu.memory_space<vmem>>, vector<1x128xf32>
    %16 = vector.shape_cast %15 : vector<1x128xf32> to vector<1x128xf32>
    %17 = vector.broadcast %16 : vector<1x128xf32> to vector<8x128xf32>
    %c1_7 = arith.constant 1 : index
    %c0_8 = arith.constant 0 : index
    %18 = vector.load %arg11[%c1_7, %c0_8] : memref<4x128xf32, #tpu.memory_space<vmem>>, vector<1x128xf32>
    %19 = vector.shape_cast %18 : vector<1x128xf32> to vector<1x128xf32>
    %20 = vector.broadcast %19 : vector<1x128xf32> to vector<8x128xf32>
    %c2_9 = arith.constant 2 : index
    %c0_10 = arith.constant 0 : index
    %21 = vector.load %arg11[%c2_9, %c0_10] : memref<4x128xf32, #tpu.memory_space<vmem>>, vector<1x128xf32>
    %22 = vector.shape_cast %21 : vector<1x128xf32> to vector<1x128xf32>
    %23 = vector.broadcast %22 : vector<1x128xf32> to vector<8x128xf32>
    %c3_11 = arith.constant 3 : index
    %c0_12 = arith.constant 0 : index
    %24 = vector.load %arg11[%c3_11, %c0_12] : memref<4x128xf32, #tpu.memory_space<vmem>>, vector<1x128xf32>
    %25 = vector.shape_cast %24 : vector<1x128xf32> to vector<1x128xf32>
    %26 = vector.broadcast %25 : vector<1x128xf32> to vector<8x128xf32>
    %c0_13 = arith.constant 0 : index
    %c0_14 = arith.constant 0 : index
    %27 = vector.load %arg12[%c0_13, %c0_14] : memref<4x128xf32, #tpu.memory_space<vmem>>, vector<1x128xf32>
    %28 = vector.shape_cast %27 : vector<1x128xf32> to vector<1x128xf32>
    %29 = vector.broadcast %28 : vector<1x128xf32> to vector<8x128xf32>
    %c1_15 = arith.constant 1 : index
    %c0_16 = arith.constant 0 : index
    %30 = vector.load %arg12[%c1_15, %c0_16] : memref<4x128xf32, #tpu.memory_space<vmem>>, vector<1x128xf32>
    %31 = vector.shape_cast %30 : vector<1x128xf32> to vector<1x128xf32>
    %32 = vector.broadcast %31 : vector<1x128xf32> to vector<8x128xf32>
    %c2_17 = arith.constant 2 : index
    %c0_18 = arith.constant 0 : index
    %33 = vector.load %arg12[%c2_17, %c0_18] : memref<4x128xf32, #tpu.memory_space<vmem>>, vector<1x128xf32>
    %34 = vector.shape_cast %33 : vector<1x128xf32> to vector<1x128xf32>
    %35 = vector.broadcast %34 : vector<1x128xf32> to vector<8x128xf32>
    %c3_19 = arith.constant 3 : index
    %c0_20 = arith.constant 0 : index
    %36 = vector.load %arg12[%c3_19, %c0_20] : memref<4x128xf32, #tpu.memory_space<vmem>>, vector<1x128xf32>
    %37 = vector.shape_cast %36 : vector<1x128xf32> to vector<1x128xf32>
    %38 = vector.broadcast %37 : vector<1x128xf32> to vector<8x128xf32>
    %c0_21 = arith.constant 0 : index
    %c0_22 = arith.constant 0 : index
    %39 = vector.load %arg3[%c0_21, %c0_22] : memref<128x128xf32, #tpu.memory_space<vmem>>, vector<128x128xf32>
    %c0_23 = arith.constant 0 : index
    %c0_24 = arith.constant 0 : index
    %40 = vector.load %arg4[%c0_23, %c0_24] : memref<128x128xf32, #tpu.memory_space<vmem>>, vector<128x128xf32>
    %c0_25 = arith.constant 0 : index
    %c0_26 = arith.constant 0 : index
    %41 = vector.load %arg5[%c0_25, %c0_26] : memref<128x128xf32, #tpu.memory_space<vmem>>, vector<128x128xf32>
    %c0_27 = arith.constant 0 : index
    %c0_28 = arith.constant 0 : index
    %42 = vector.load %arg7[%c0_27, %c0_28] : memref<128x128xf32, #tpu.memory_space<vmem>>, vector<128x128xf32>
    %c0_29 = arith.constant 0 : index
    %c0_30 = arith.constant 0 : index
    %43 = vector.load %arg8[%c0_29, %c0_30] : memref<128x128xf32, #tpu.memory_space<vmem>>, vector<128x128xf32>
    %c0_31 = arith.constant 0 : index
    %c0_32 = arith.constant 0 : index
    %44 = vector.load %arg6[%c0_31, %c0_32] : memref<1x128xf32, #tpu.memory_space<vmem>>, vector<1x128xf32>
    %45 = vector.shape_cast %44 : vector<1x128xf32> to vector<1x128xf32>
    %46 = vector.broadcast %45 : vector<1x128xf32> to vector<8x128xf32>
    %c0_33 = arith.constant 0 : index
    %c0_34 = arith.constant 0 : index
    %47 = vector.load %arg9[%c0_33, %c0_34] : memref<1x128xf32, #tpu.memory_space<vmem>>, vector<1x128xf32>
    %48 = vector.shape_cast %47 : vector<1x128xf32> to vector<1x128xf32>
    %49 = vector.broadcast %48 : vector<1x128xf32> to vector<8x128xf32>
    %c0_35 = arith.constant 0 : index
    %c0_36 = arith.constant 0 : index
    %50 = vector.load %arg21[%c0_35, %c0_36] : memref<8x128xf32, #tpu.memory_space<vmem>>, vector<8x128xf32>
    %c0_37 = arith.constant 0 : index
    %c0_38 = arith.constant 0 : index
    %51 = vector.load %arg22[%c0_37, %c0_38] : memref<8x128xf32, #tpu.memory_space<vmem>>, vector<8x128xf32>
    %c0_39 = arith.constant 0 : index
    %c0_40 = arith.constant 0 : index
    %52 = vector.load %arg23[%c0_39, %c0_40] : memref<8x128xf32, #tpu.memory_space<vmem>>, vector<8x128xf32>
    %c0_41 = arith.constant 0 : index
    %c0_42 = arith.constant 0 : index
    %53 = vector.load %arg24[%c0_41, %c0_42] : memref<8x128xf32, #tpu.memory_space<vmem>>, vector<8x128xf32>
    %c0_43 = arith.constant 0 : index
    %c0_44 = arith.constant 0 : index
    %54 = vector.load %arg25[%c0_43, %c0_44] : memref<8x128xf32, #tpu.memory_space<vmem>>, vector<8x128xf32>
    %c0_45 = arith.constant 0 : index
    %c0_46 = arith.constant 0 : index
    %55 = vector.load %arg26[%c0_45, %c0_46] : memref<8x128xf32, #tpu.memory_space<vmem>>, vector<8x128xf32>
    %c0_47 = arith.constant 0 : index
    %c0_48 = arith.constant 0 : index
    %56 = vector.load %arg27[%c0_47, %c0_48] : memref<8x128xf32, #tpu.memory_space<vmem>>, vector<8x128xf32>
    %c0_49 = arith.constant 0 : index
    %c0_50 = arith.constant 0 : index
    %57 = vector.load %arg28[%c0_49, %c0_50] : memref<8x128xf32, #tpu.memory_space<vmem>>, vector<8x128xf32>
    %c0_51 = arith.constant 0 : index
    %c0_52 = arith.constant 0 : index
    %58 = vector.load %arg29[%c0_51, %c0_52] : memref<8x128xf32, #tpu.memory_space<vmem>>, vector<8x128xf32>
    %c0_53 = arith.constant 0 : index
    %c0_54 = arith.constant 0 : index
    %c0_55 = arith.constant 0 : index
    %59 = vector.load %arg2[%c0_53, %c0_54, %c0_55] : memref<8x8x128xf32, #tpu.memory_space<vmem>>, vector<1x8x128xf32>
    %60 = vector.shape_cast %59 : vector<1x8x128xf32> to vector<8x128xf32>
    %cst = arith.constant dense<0.000000e+00> : vector<8x128xf32>
    %61 = tpu.matmul %51, %39, %cst {dimension_numbers = #tpu.dot_dimension_numbers<[1], [0], [0], [1], [0, 0, 1, 1], [], []>} : vector<8x128xf32>, vector<128x128xf32>, vector<8x128xf32> -> vector<8x128xf32>
    %62 = arith.addf %60, %61 : vector<8x128xf32>
    %63 = arith.mulf %11, %52 : vector<8x128xf32>
    %64 = arith.mulf %14, %51 : vector<8x128xf32>
    %65 = arith.addf %63, %64 : vector<8x128xf32>
    %cst_56 = arith.constant 1.800000e+00 : f32
    %66 = vector.broadcast %cst_56 : f32 to vector<8x128xf32>
    %67 = arith.mulf %66, %65 : vector<8x128xf32>
    %cst_57 = arith.constant 0.00999999977 : f32
    %68 = vector.broadcast %cst_57 : f32 to vector<8x128xf32>
    %69 = arith.addf %68, %67 : vector<8x128xf32>
    %70 = arith.mulf %50, %5 : vector<8x128xf32>
    %71 = arith.mulf %8, %62 : vector<8x128xf32>
    %72 = arith.addf %70, %71 : vector<8x128xf32>
    %73 = arith.mulf %69, %51 : vector<8x128xf32>
    %74 = arith.subf %72, %73 : vector<8x128xf32>
    %75 = arith.subf %74, %69 : vector<8x128xf32>
    %cst_58 = arith.constant 0.000000e+00 : f32
    %76 = vector.broadcast %cst_58 : f32 to vector<8x128xf32>
    %77 = arith.cmpf ogt, %75, %76 : vector<8x128xf32>
    %78 = arith.extui %77 : vector<8x128xi1> to vector<8x128xi32>
    %79 = arith.sitofp %78 : vector<8x128xi32> to vector<8x128xf32>
    %cst_59 = arith.constant dense<0.000000e+00> : vector<8x128xf32>
    %80 = tpu.matmul %79, %40, %cst_59 {dimension_numbers = #tpu.dot_dimension_numbers<[1], [0], [0], [1], [0, 0, 1, 1], [], []>} : vector<8x128xf32>, vector<128x128xf32>, vector<8x128xf32> -> vector<8x128xf32>
    %cst_60 = arith.constant dense<0.000000e+00> : vector<8x128xf32>
    %81 = tpu.matmul %54, %41, %cst_60 {dimension_numbers = #tpu.dot_dimension_numbers<[1], [0], [0], [1], [0, 0, 1, 1], [], []>} : vector<8x128xf32>, vector<128x128xf32>, vector<8x128xf32> -> vector<8x128xf32>
    %82 = arith.addf %80, %81 : vector<8x128xf32>
    %83 = arith.addf %82, %46 : vector<8x128xf32>
    %84 = arith.mulf %23, %55 : vector<8x128xf32>
    %85 = arith.mulf %26, %54 : vector<8x128xf32>
    %86 = arith.addf %84, %85 : vector<8x128xf32>
    %cst_61 = arith.constant 1.800000e+00 : f32
    %87 = vector.broadcast %cst_61 : f32 to vector<8x128xf32>
    %88 = arith.mulf %87, %86 : vector<8x128xf32>
    %cst_62 = arith.constant 0.00999999977 : f32
    %89 = vector.broadcast %cst_62 : f32 to vector<8x128xf32>
    %90 = arith.addf %89, %88 : vector<8x128xf32>
    %91 = arith.mulf %53, %17 : vector<8x128xf32>
    %92 = arith.mulf %20, %83 : vector<8x128xf32>
    %93 = arith.addf %91, %92 : vector<8x128xf32>
    %94 = arith.mulf %90, %54 : vector<8x128xf32>
    %95 = arith.subf %93, %94 : vector<8x128xf32>
    %96 = arith.subf %95, %90 : vector<8x128xf32>
    %cst_63 = arith.constant 0.000000e+00 : f32
    %97 = vector.broadcast %cst_63 : f32 to vector<8x128xf32>
    %98 = arith.cmpf ogt, %96, %97 : vector<8x128xf32>
    %99 = arith.extui %98 : vector<8x128xi1> to vector<8x128xi32>
    %100 = arith.sitofp %99 : vector<8x128xi32> to vector<8x128xf32>
    %cst_64 = arith.constant dense<0.000000e+00> : vector<8x128xf32>
    %101 = tpu.matmul %100, %42, %cst_64 {dimension_numbers = #tpu.dot_dimension_numbers<[1], [0], [0], [1], [0, 0, 1, 1], [], []>} : vector<8x128xf32>, vector<128x128xf32>, vector<8x128xf32> -> vector<8x128xf32>
    %cst_65 = arith.constant dense<0.000000e+00> : vector<8x128xf32>
    %102 = tpu.matmul %57, %43, %cst_65 {dimension_numbers = #tpu.dot_dimension_numbers<[1], [0], [0], [1], [0, 0, 1, 1], [], []>} : vector<8x128xf32>, vector<128x128xf32>, vector<8x128xf32> -> vector<8x128xf32>
    %103 = arith.addf %101, %102 : vector<8x128xf32>
    %104 = arith.addf %103, %49 : vector<8x128xf32>
    %105 = arith.mulf %35, %58 : vector<8x128xf32>
    %106 = arith.mulf %38, %57 : vector<8x128xf32>
    %107 = arith.addf %105, %106 : vector<8x128xf32>
    %cst_66 = arith.constant 1.800000e+00 : f32
    %108 = vector.broadcast %cst_66 : f32 to vector<8x128xf32>
    %109 = arith.mulf %108, %107 : vector<8x128xf32>
    %cst_67 = arith.constant 0.00999999977 : f32
    %110 = vector.broadcast %cst_67 : f32 to vector<8x128xf32>
    %111 = arith.addf %110, %109 : vector<8x128xf32>
    %112 = arith.mulf %56, %29 : vector<8x128xf32>
    %113 = arith.mulf %32, %104 : vector<8x128xf32>
    %114 = arith.addf %112, %113 : vector<8x128xf32>
    %115 = arith.mulf %111, %57 : vector<8x128xf32>
    %116 = arith.subf %114, %115 : vector<8x128xf32>
    %117 = arith.subf %116, %111 : vector<8x128xf32>
    %cst_68 = arith.constant 0.000000e+00 : f32
    %118 = vector.broadcast %cst_68 : f32 to vector<8x128xf32>
    %119 = arith.cmpf ogt, %117, %118 : vector<8x128xf32>
    %120 = arith.extui %119 : vector<8x128xi1> to vector<8x128xi32>
    %121 = arith.sitofp %120 : vector<8x128xi32> to vector<8x128xf32>
    %c0_69 = arith.constant 0 : index
    %c0_70 = arith.constant 0 : index
    %c0_71 = arith.constant 0 : index
    %122 = vector.load %arg13[%c0_69, %c0_70, %c0_71] : memref<8x8x256xf32, #tpu.memory_space<vmem>>, vector<1x8x128xf32>
    %123 = vector.shape_cast %122 : vector<1x8x128xf32> to vector<8x128xf32>
    %124 = vector.shape_cast %116 : vector<8x128xf32> to vector<1x8x128xf32>
    tpu.vector_store %arg13[%c0_69, %c0_70, %c0_71], %124 {strides = array<i32>} : memref<8x8x256xf32, #tpu.memory_space<vmem>>, vector<1x8x128xf32>,
    %c0_72 = arith.constant 0 : index
    %c0_73 = arith.constant 0 : index
    %c128 = arith.constant 128 : index
    %125 = vector.load %arg13[%c0_72, %c0_73, %c128] : memref<8x8x256xf32, #tpu.memory_space<vmem>>, vector<1x8x128xf32>
    %126 = vector.shape_cast %125 : vector<1x8x128xf32> to vector<8x128xf32>
    %127 = vector.shape_cast %121 : vector<8x128xf32> to vector<1x8x128xf32>
    tpu.vector_store %arg13[%c0_72, %c0_73, %c128], %127 {strides = array<i32>} : memref<8x8x256xf32, #tpu.memory_space<vmem>>, vector<1x8x128xf32>,
    %c1_74 = arith.constant 1 : index
    %c0_75 = arith.constant 0 : index
    %c0_76 = arith.constant 0 : index
    %128 = vector.load %arg2[%c1_74, %c0_75, %c0_76] : memref<8x8x128xf32, #tpu.memory_space<vmem>>, vector<1x8x128xf32>
    %129 = vector.shape_cast %128 : vector<1x8x128xf32> to vector<8x128xf32>
    %cst_77 = arith.constant dense<0.000000e+00> : vector<8x128xf32>
    %130 = tpu.matmul %79, %39, %cst_77 {dimension_numbers = #tpu.dot_dimension_numbers<[1], [0], [0], [1], [0, 0, 1, 1], [], []>} : vector<8x128xf32>, vector<128x128xf32>, vector<8x128xf32> -> vector<8x128xf32>
    %131 = arith.addf %129, %130 : vector<8x128xf32>
    %132 = arith.mulf %11, %65 : vector<8x128xf32>
    %133 = arith.mulf %14, %79 : vector<8x128xf32>
    %134 = arith.addf %132, %133 : vector<8x128xf32>
    %cst_78 = arith.constant 1.800000e+00 : f32
    %135 = vector.broadcast %cst_78 : f32 to vector<8x128xf32>
    %136 = arith.mulf %135, %134 : vector<8x128xf32>
    %cst_79 = arith.constant 0.00999999977 : f32
    %137 = vector.broadcast %cst_79 : f32 to vector<8x128xf32>
    %138 = arith.addf %137, %136 : vector<8x128xf32>
    %139 = arith.mulf %74, %5 : vector<8x128xf32>
    %140 = arith.mulf %8, %131 : vector<8x128xf32>
    %141 = arith.addf %139, %140 : vector<8x128xf32>
    %142 = arith.mulf %138, %79 : vector<8x128xf32>
    %143 = arith.subf %141, %142 : vector<8x128xf32>
    %144 = arith.subf %143, %138 : vector<8x128xf32>
    %cst_80 = arith.constant 0.000000e+00 : f32
    %145 = vector.broadcast %cst_80 : f32 to vector<8x128xf32>
    %146 = arith.cmpf ogt, %144, %145 : vector<8x128xf32>
    %147 = arith.extui %146 : vector<8x128xi1> to vector<8x128xi32>
    %148 = arith.sitofp %147 : vector<8x128xi32> to vector<8x128xf32>
    %cst_81 = arith.constant dense<0.000000e+00> : vector<8x128xf32>
    %149 = tpu.matmul %148, %40, %cst_81 {dimension_numbers = #tpu.dot_dimension_numbers<[1], [0], [0], [1], [0, 0, 1, 1], [], []>} : vector<8x128xf32>, vector<128x128xf32>, vector<8x128xf32> -> vector<8x128xf32>
    %cst_82 = arith.constant dense<0.000000e+00> : vector<8x128xf32>
    %150 = tpu.matmul %100, %41, %cst_82 {dimension_numbers = #tpu.dot_dimension_numbers<[1], [0], [0], [1], [0, 0, 1, 1], [], []>} : vector<8x128xf32>, vector<128x128xf32>, vector<8x128xf32> -> vector<8x128xf32>
    %151 = arith.addf %149, %150 : vector<8x128xf32>
    %152 = arith.addf %151, %46 : vector<8x128xf32>
    %153 = arith.mulf %23, %86 : vector<8x128xf32>
    %154 = arith.mulf %26, %100 : vector<8x128xf32>
    %155 = arith.addf %153, %154 : vector<8x128xf32>
    %cst_83 = arith.constant 1.800000e+00 : f32
    %156 = vector.broadcast %cst_83 : f32 to vector<8x128xf32>
    %157 = arith.mulf %156, %155 : vector<8x128xf32>
    %cst_84 = arith.constant 0.00999999977 : f32
    %158 = vector.broadcast %cst_84 : f32 to vector<8x128xf32>
    %159 = arith.addf %158, %157 : vector<8x128xf32>
    %160 = arith.mulf %95, %17 : vector<8x128xf32>
    %161 = arith.mulf %20, %152 : vector<8x128xf32>
    %162 = arith.addf %160, %161 : vector<8x128xf32>
    %163 = arith.mulf %159, %100 : vector<8x128xf32>
    %164 = arith.subf %162, %163 : vector<8x128xf32>
    %165 = arith.subf %164, %159 : vector<8x128xf32>
    %cst_85 = arith.constant 0.000000e+00 : f32
    %166 = vector.broadcast %cst_85 : f32 to vector<8x128xf32>
    %167 = arith.cmpf ogt, %165, %166 : vector<8x128xf32>
    %168 = arith.extui %167 : vector<8x128xi1> to vector<8x128xi32>
    %169 = arith.sitofp %168 : vector<8x128xi32> to vector<8x128xf32>
    %cst_86 = arith.constant dense<0.000000e+00> : vector<8x128xf32>
    %170 = tpu.matmul %169, %42, %cst_86 {dimension_numbers = #tpu.dot_dimension_numbers<[1], [0], [0], [1], [0, 0, 1, 1], [], []>} : vector<8x128xf32>, vector<128x128xf32>, vector<8x128xf32> -> vector<8x128xf32>
    %cst_87 = arith.constant dense<0.000000e+00> : vector<8x128xf32>
    %171 = tpu.matmul %121, %43, %cst_87 {dimension_numbers = #tpu.dot_dimension_numbers<[1], [0], [0], [1], [0, 0, 1, 1], [], []>} : vector<8x128xf32>, vector<128x128xf32>, vector<8x128xf32> -> vector<8x128xf32>
    %172 = arith.addf %170, %171 : vector<8x128xf32>
    %173 = arith.addf %172, %49 : vector<8x128xf32>
    %174 = arith.mulf %35, %107 : vector<8x128xf32>
    %175 = arith.mulf %38, %121 : vector<8x128xf32>
    %176 = arith.addf %174, %175 : vector<8x128xf32>
    %cst_88 = arith.constant 1.800000e+00 : f32
    %177 = vector.broadcast %cst_88 : f32 to vector<8x128xf32>
    %178 = arith.mulf %177, %176 : vector<8x128xf32>
    %cst_89 = arith.constant 0.00999999977 : f32
    %179 = vector.broadcast %cst_89 : f32 to vector<8x128xf32>
    %180 = arith.addf %179, %178 : vector<8x128xf32>
    %181 = arith.mulf %116, %29 : vector<8x128xf32>
    %182 = arith.mulf %32, %173 : vector<8x128xf32>
    %183 = arith.addf %181, %182 : vector<8x128xf32>
    %184 = arith.mulf %180, %121 : vector<8x128xf32>
    %185 = arith.subf %183, %184 : vector<8x128xf32>
    %186 = arith.subf %185, %180 : vector<8x128xf32>
    %cst_90 = arith.constant 0.000000e+00 : f32
    %187 = vector.broadcast %cst_90 : f32 to vector<8x128xf32>
    %188 = arith.cmpf ogt, %186, %187 : vector<8x128xf32>
    %189 = arith.extui %188 : vector<8x128xi1> to vector<8x128xi32>
    %190 = arith.sitofp %189 : vector<8x128xi32> to vector<8x128xf32>
    %c1_91 = arith.constant 1 : index
    %c0_92 = arith.constant 0 : index
    %c0_93 = arith.constant 0 : index
    %191 = vector.load %arg13[%c1_91, %c0_92, %c0_93] : memref<8x8x256xf32, #tpu.memory_space<vmem>>, vector<1x8x128xf32>
    %192 = vector.shape_cast %191 : vector<1x8x128xf32> to vector<8x128xf32>
    %193 = vector.shape_cast %185 : vector<8x128xf32> to vector<1x8x128xf32>
    tpu.vector_store %arg13[%c1_91, %c0_92, %c0_93], %193 {strides = array<i32>} : memref<8x8x256xf32, #tpu.memory_space<vmem>>, vector<1x8x128xf32>,
    %c1_94 = arith.constant 1 : index
    %c0_95 = arith.constant 0 : index
    %c128_96 = arith.constant 128 : index
    %194 = vector.load %arg13[%c1_94, %c0_95, %c128_96] : memref<8x8x256xf32, #tpu.memory_space<vmem>>, vector<1x8x128xf32>
    %195 = vector.shape_cast %194 : vector<1x8x128xf32> to vector<8x128xf32>
    %196 = vector.shape_cast %190 : vector<8x128xf32> to vector<1x8x128xf32>
    tpu.vector_store %arg13[%c1_94, %c0_95, %c128_96], %196 {strides = array<i32>} : memref<8x8x256xf32, #tpu.memory_space<vmem>>, vector<1x8x128xf32>,
    %c2_97 = arith.constant 2 : index
    %c0_98 = arith.constant 0 : index
    %c0_99 = arith.constant 0 : index
    %197 = vector.load %arg2[%c2_97, %c0_98, %c0_99] : memref<8x8x128xf32, #tpu.memory_space<vmem>>, vector<1x8x128xf32>
    %198 = vector.shape_cast %197 : vector<1x8x128xf32> to vector<8x128xf32>
    %cst_100 = arith.constant dense<0.000000e+00> : vector<8x128xf32>
    %199 = tpu.matmul %148, %39, %cst_100 {dimension_numbers = #tpu.dot_dimension_numbers<[1], [0], [0], [1], [0, 0, 1, 1], [], []>} : vector<8x128xf32>, vector<128x128xf32>, vector<8x128xf32> -> vector<8x128xf32>
    %200 = arith.addf %198, %199 : vector<8x128xf32>
    %201 = arith.mulf %11, %134 : vector<8x128xf32>
    %202 = arith.mulf %14, %148 : vector<8x128xf32>
    %203 = arith.addf %201, %202 : vector<8x128xf32>
    %cst_101 = arith.constant 1.800000e+00 : f32
    %204 = vector.broadcast %cst_101 : f32 to vector<8x128xf32>
    %205 = arith.mulf %204, %203 : vector<8x128xf32>
    %cst_102 = arith.constant 0.00999999977 : f32
    %206 = vector.broadcast %cst_102 : f32 to vector<8x128xf32>
    %207 = arith.addf %206, %205 : vector<8x128xf32>
    %208 = arith.mulf %143, %5 : vector<8x128xf32>
    %209 = arith.mulf %8, %200 : vector<8x128xf32>
    %210 = arith.addf %208, %209 : vector<8x128xf32>
    %211 = arith.mulf %207, %148 : vector<8x128xf32>
    %212 = arith.subf %210, %211 : vector<8x128xf32>
    %213 = arith.subf %212, %207 : vector<8x128xf32>
    %cst_103 = arith.constant 0.000000e+00 : f32
    %214 = vector.broadcast %cst_103 : f32 to vector<8x128xf32>
    %215 = arith.cmpf ogt, %213, %214 : vector<8x128xf32>
    %216 = arith.extui %215 : vector<8x128xi1> to vector<8x128xi32>
    %217 = arith.sitofp %216 : vector<8x128xi32> to vector<8x128xf32>
    %cst_104 = arith.constant dense<0.000000e+00> : vector<8x128xf32>
    %218 = tpu.matmul %217, %40, %cst_104 {dimension_numbers = #tpu.dot_dimension_numbers<[1], [0], [0], [1], [0, 0, 1, 1], [], []>} : vector<8x128xf32>, vector<128x128xf32>, vector<8x128xf32> -> vector<8x128xf32>
    %cst_105 = arith.constant dense<0.000000e+00> : vector<8x128xf32>
    %219 = tpu.matmul %169, %41, %cst_105 {dimension_numbers = #tpu.dot_dimension_numbers<[1], [0], [0], [1], [0, 0, 1, 1], [], []>} : vector<8x128xf32>, vector<128x128xf32>, vector<8x128xf32> -> vector<8x128xf32>
    %220 = arith.addf %218, %219 : vector<8x128xf32>
    %221 = arith.addf %220, %46 : vector<8x128xf32>
    %222 = arith.mulf %23, %155 : vector<8x128xf32>
    %223 = arith.mulf %26, %169 : vector<8x128xf32>
    %224 = arith.addf %222, %223 : vector<8x128xf32>
    %cst_106 = arith.constant 1.800000e+00 : f32
    %225 = vector.broadcast %cst_106 : f32 to vector<8x128xf32>
    %226 = arith.mulf %225, %224 : vector<8x128xf32>
    %cst_107 = arith.constant 0.00999999977 : f32
    %227 = vector.broadcast %cst_107 : f32 to vector<8x128xf32>
    %228 = arith.addf %227, %226 : vector<8x128xf32>
    %229 = arith.mulf %164, %17 : vector<8x128xf32>
    %230 = arith.mulf %20, %221 : vector<8x128xf32>
    %231 = arith.addf %229, %230 : vector<8x128xf32>
    %232 = arith.mulf %228, %169 : vector<8x128xf32>
    %233 = arith.subf %231, %232 : vector<8x128xf32>
    %234 = arith.subf %233, %228 : vector<8x128xf32>
    %cst_108 = arith.constant 0.000000e+00 : f32
    %235 = vector.broadcast %cst_108 : f32 to vector<8x128xf32>
    %236 = arith.cmpf ogt, %234, %235 : vector<8x128xf32>
    %237 = arith.extui %236 : vector<8x128xi1> to vector<8x128xi32>
    %238 = arith.sitofp %237 : vector<8x128xi32> to vector<8x128xf32>
    %cst_109 = arith.constant dense<0.000000e+00> : vector<8x128xf32>
    %239 = tpu.matmul %238, %42, %cst_109 {dimension_numbers = #tpu.dot_dimension_numbers<[1], [0], [0], [1], [0, 0, 1, 1], [], []>} : vector<8x128xf32>, vector<128x128xf32>, vector<8x128xf32> -> vector<8x128xf32>
    %cst_110 = arith.constant dense<0.000000e+00> : vector<8x128xf32>
    %240 = tpu.matmul %190, %43, %cst_110 {dimension_numbers = #tpu.dot_dimension_numbers<[1], [0], [0], [1], [0, 0, 1, 1], [], []>} : vector<8x128xf32>, vector<128x128xf32>, vector<8x128xf32> -> vector<8x128xf32>
    %241 = arith.addf %239, %240 : vector<8x128xf32>
    %242 = arith.addf %241, %49 : vector<8x128xf32>
    %243 = arith.mulf %35, %176 : vector<8x128xf32>
    %244 = arith.mulf %38, %190 : vector<8x128xf32>
    %245 = arith.addf %243, %244 : vector<8x128xf32>
    %cst_111 = arith.constant 1.800000e+00 : f32
    %246 = vector.broadcast %cst_111 : f32 to vector<8x128xf32>
    %247 = arith.mulf %246, %245 : vector<8x128xf32>
    %cst_112 = arith.constant 0.00999999977 : f32
    %248 = vector.broadcast %cst_112 : f32 to vector<8x128xf32>
    %249 = arith.addf %248, %247 : vector<8x128xf32>
    %250 = arith.mulf %185, %29 : vector<8x128xf32>
    %251 = arith.mulf %32, %242 : vector<8x128xf32>
    %252 = arith.addf %250, %251 : vector<8x128xf32>
    %253 = arith.mulf %249, %190 : vector<8x128xf32>
    %254 = arith.subf %252, %253 : vector<8x128xf32>
    %255 = arith.subf %254, %249 : vector<8x128xf32>
    %cst_113 = arith.constant 0.000000e+00 : f32
    %256 = vector.broadcast %cst_113 : f32 to vector<8x128xf32>
    %257 = arith.cmpf ogt, %255, %256 : vector<8x128xf32>
    %258 = arith.extui %257 : vector<8x128xi1> to vector<8x128xi32>
    %259 = arith.sitofp %258 : vector<8x128xi32> to vector<8x128xf32>
    %c2_114 = arith.constant 2 : index
    %c0_115 = arith.constant 0 : index
    %c0_116 = arith.constant 0 : index
    %260 = vector.load %arg13[%c2_114, %c0_115, %c0_116] : memref<8x8x256xf32, #tpu.memory_space<vmem>>, vector<1x8x128xf32>
    %261 = vector.shape_cast %260 : vector<1x8x128xf32> to vector<8x128xf32>
    %262 = vector.shape_cast %254 : vector<8x128xf32> to vector<1x8x128xf32>
    tpu.vector_store %arg13[%c2_114, %c0_115, %c0_116], %262 {strides = array<i32>} : memref<8x8x256xf32, #tpu.memory_space<vmem>>, vector<1x8x128xf32>,
    %c2_117 = arith.constant 2 : index
    %c0_118 = arith.constant 0 : index
    %c128_119 = arith.constant 128 : index
    %263 = vector.load %arg13[%c2_117, %c0_118, %c128_119] : memref<8x8x256xf32, #tpu.memory_space<vmem>>, vector<1x8x128xf32>
    %264 = vector.shape_cast %263 : vector<1x8x128xf32> to vector<8x128xf32>
    %265 = vector.shape_cast %259 : vector<8x128xf32> to vector<1x8x128xf32>
    tpu.vector_store %arg13[%c2_117, %c0_118, %c128_119], %265 {strides = array<i32>} : memref<8x8x256xf32, #tpu.memory_space<vmem>>, vector<1x8x128xf32>,
    %c3_120 = arith.constant 3 : index
    %c0_121 = arith.constant 0 : index
    %c0_122 = arith.constant 0 : index
    %266 = vector.load %arg2[%c3_120, %c0_121, %c0_122] : memref<8x8x128xf32, #tpu.memory_space<vmem>>, vector<1x8x128xf32>
    %267 = vector.shape_cast %266 : vector<1x8x128xf32> to vector<8x128xf32>
    %cst_123 = arith.constant dense<0.000000e+00> : vector<8x128xf32>
    %268 = tpu.matmul %217, %39, %cst_123 {dimension_numbers = #tpu.dot_dimension_numbers<[1], [0], [0], [1], [0, 0, 1, 1], [], []>} : vector<8x128xf32>, vector<128x128xf32>, vector<8x128xf32> -> vector<8x128xf32>
    %269 = arith.addf %267, %268 : vector<8x128xf32>
    %270 = arith.mulf %11, %203 : vector<8x128xf32>
    %271 = arith.mulf %14, %217 : vector<8x128xf32>
    %272 = arith.addf %270, %271 : vector<8x128xf32>
    %cst_124 = arith.constant 1.800000e+00 : f32
    %273 = vector.broadcast %cst_124 : f32 to vector<8x128xf32>
    %274 = arith.mulf %273, %272 : vector<8x128xf32>
    %cst_125 = arith.constant 0.00999999977 : f32
    %275 = vector.broadcast %cst_125 : f32 to vector<8x128xf32>
    %276 = arith.addf %275, %274 : vector<8x128xf32>
    %277 = arith.mulf %212, %5 : vector<8x128xf32>
    %278 = arith.mulf %8, %269 : vector<8x128xf32>
    %279 = arith.addf %277, %278 : vector<8x128xf32>
    %280 = arith.mulf %276, %217 : vector<8x128xf32>
    %281 = arith.subf %279, %280 : vector<8x128xf32>
    %282 = arith.subf %281, %276 : vector<8x128xf32>
    %cst_126 = arith.constant 0.000000e+00 : f32
    %283 = vector.broadcast %cst_126 : f32 to vector<8x128xf32>
    %284 = arith.cmpf ogt, %282, %283 : vector<8x128xf32>
    %285 = arith.extui %284 : vector<8x128xi1> to vector<8x128xi32>
    %286 = arith.sitofp %285 : vector<8x128xi32> to vector<8x128xf32>
    %cst_127 = arith.constant dense<0.000000e+00> : vector<8x128xf32>
    %287 = tpu.matmul %286, %40, %cst_127 {dimension_numbers = #tpu.dot_dimension_numbers<[1], [0], [0], [1], [0, 0, 1, 1], [], []>} : vector<8x128xf32>, vector<128x128xf32>, vector<8x128xf32> -> vector<8x128xf32>
    %cst_128 = arith.constant dense<0.000000e+00> : vector<8x128xf32>
    %288 = tpu.matmul %238, %41, %cst_128 {dimension_numbers = #tpu.dot_dimension_numbers<[1], [0], [0], [1], [0, 0, 1, 1], [], []>} : vector<8x128xf32>, vector<128x128xf32>, vector<8x128xf32> -> vector<8x128xf32>
    %289 = arith.addf %287, %288 : vector<8x128xf32>
    %290 = arith.addf %289, %46 : vector<8x128xf32>
    %291 = arith.mulf %23, %224 : vector<8x128xf32>
    %292 = arith.mulf %26, %238 : vector<8x128xf32>
    %293 = arith.addf %291, %292 : vector<8x128xf32>
    %cst_129 = arith.constant 1.800000e+00 : f32
    %294 = vector.broadcast %cst_129 : f32 to vector<8x128xf32>
    %295 = arith.mulf %294, %293 : vector<8x128xf32>
    %cst_130 = arith.constant 0.00999999977 : f32
    %296 = vector.broadcast %cst_130 : f32 to vector<8x128xf32>
    %297 = arith.addf %296, %295 : vector<8x128xf32>
    %298 = arith.mulf %233, %17 : vector<8x128xf32>
    %299 = arith.mulf %20, %290 : vector<8x128xf32>
    %300 = arith.addf %298, %299 : vector<8x128xf32>
    %301 = arith.mulf %297, %238 : vector<8x128xf32>
    %302 = arith.subf %300, %301 : vector<8x128xf32>
    %303 = arith.subf %302, %297 : vector<8x128xf32>
    %cst_131 = arith.constant 0.000000e+00 : f32
    %304 = vector.broadcast %cst_131 : f32 to vector<8x128xf32>
    %305 = arith.cmpf ogt, %303, %304 : vector<8x128xf32>
    %306 = arith.extui %305 : vector<8x128xi1> to vector<8x128xi32>
    %307 = arith.sitofp %306 : vector<8x128xi32> to vector<8x128xf32>
    %cst_132 = arith.constant dense<0.000000e+00> : vector<8x128xf32>
    %308 = tpu.matmul %307, %42, %cst_132 {dimension_numbers = #tpu.dot_dimension_numbers<[1], [0], [0], [1], [0, 0, 1, 1], [], []>} : vector<8x128xf32>, vector<128x128xf32>, vector<8x128xf32> -> vector<8x128xf32>
    %cst_133 = arith.constant dense<0.000000e+00> : vector<8x128xf32>
    %309 = tpu.matmul %259, %43, %cst_133 {dimension_numbers = #tpu.dot_dimension_numbers<[1], [0], [0], [1], [0, 0, 1, 1], [], []>} : vector<8x128xf32>, vector<128x128xf32>, vector<8x128xf32> -> vector<8x128xf32>
    %310 = arith.addf %308, %309 : vector<8x128xf32>
    %311 = arith.addf %310, %49 : vector<8x128xf32>
    %312 = arith.mulf %35, %245 : vector<8x128xf32>
    %313 = arith.mulf %38, %259 : vector<8x128xf32>
    %314 = arith.addf %312, %313 : vector<8x128xf32>
    %cst_134 = arith.constant 1.800000e+00 : f32
    %315 = vector.broadcast %cst_134 : f32 to vector<8x128xf32>
    %316 = arith.mulf %315, %314 : vector<8x128xf32>
    %cst_135 = arith.constant 0.00999999977 : f32
    %317 = vector.broadcast %cst_135 : f32 to vector<8x128xf32>
    %318 = arith.addf %317, %316 : vector<8x128xf32>
    %319 = arith.mulf %254, %29 : vector<8x128xf32>
    %320 = arith.mulf %32, %311 : vector<8x128xf32>
    %321 = arith.addf %319, %320 : vector<8x128xf32>
    %322 = arith.mulf %318, %259 : vector<8x128xf32>
    %323 = arith.subf %321, %322 : vector<8x128xf32>
    %324 = arith.subf %323, %318 : vector<8x128xf32>
    %cst_136 = arith.constant 0.000000e+00 : f32
    %325 = vector.broadcast %cst_136 : f32 to vector<8x128xf32>
    %326 = arith.cmpf ogt, %324, %325 : vector<8x128xf32>
    %327 = arith.extui %326 : vector<8x128xi1> to vector<8x128xi32>
    %328 = arith.sitofp %327 : vector<8x128xi32> to vector<8x128xf32>
    %c3_137 = arith.constant 3 : index
    %c0_138 = arith.constant 0 : index
    %c0_139 = arith.constant 0 : index
    %329 = vector.load %arg13[%c3_137, %c0_138, %c0_139] : memref<8x8x256xf32, #tpu.memory_space<vmem>>, vector<1x8x128xf32>
    %330 = vector.shape_cast %329 : vector<1x8x128xf32> to vector<8x128xf32>
    %331 = vector.shape_cast %323 : vector<8x128xf32> to vector<1x8x128xf32>
    tpu.vector_store %arg13[%c3_137, %c0_138, %c0_139], %331 {strides = array<i32>} : memref<8x8x256xf32, #tpu.memory_space<vmem>>, vector<1x8x128xf32>,
    %c3_140 = arith.constant 3 : index
    %c0_141 = arith.constant 0 : index
    %c128_142 = arith.constant 128 : index
    %332 = vector.load %arg13[%c3_140, %c0_141, %c128_142] : memref<8x8x256xf32, #tpu.memory_space<vmem>>, vector<1x8x128xf32>
    %333 = vector.shape_cast %332 : vector<1x8x128xf32> to vector<8x128xf32>
    %334 = vector.shape_cast %328 : vector<8x128xf32> to vector<1x8x128xf32>
    tpu.vector_store %arg13[%c3_140, %c0_141, %c128_142], %334 {strides = array<i32>} : memref<8x8x256xf32, #tpu.memory_space<vmem>>, vector<1x8x128xf32>,
    %c4 = arith.constant 4 : index
    %c0_143 = arith.constant 0 : index
    %c0_144 = arith.constant 0 : index
    %335 = vector.load %arg2[%c4, %c0_143, %c0_144] : memref<8x8x128xf32, #tpu.memory_space<vmem>>, vector<1x8x128xf32>
    %336 = vector.shape_cast %335 : vector<1x8x128xf32> to vector<8x128xf32>
    %cst_145 = arith.constant dense<0.000000e+00> : vector<8x128xf32>
    %337 = tpu.matmul %286, %39, %cst_145 {dimension_numbers = #tpu.dot_dimension_numbers<[1], [0], [0], [1], [0, 0, 1, 1], [], []>} : vector<8x128xf32>, vector<128x128xf32>, vector<8x128xf32> -> vector<8x128xf32>
    %338 = arith.addf %336, %337 : vector<8x128xf32>
    %339 = arith.mulf %11, %272 : vector<8x128xf32>
    %340 = arith.mulf %14, %286 : vector<8x128xf32>
    %341 = arith.addf %339, %340 : vector<8x128xf32>
    %cst_146 = arith.constant 1.800000e+00 : f32
    %342 = vector.broadcast %cst_146 : f32 to vector<8x128xf32>
    %343 = arith.mulf %342, %341 : vector<8x128xf32>
    %cst_147 = arith.constant 0.00999999977 : f32
    %344 = vector.broadcast %cst_147 : f32 to vector<8x128xf32>
    %345 = arith.addf %344, %343 : vector<8x128xf32>
    %346 = arith.mulf %281, %5 : vector<8x128xf32>
    %347 = arith.mulf %8, %338 : vector<8x128xf32>
    %348 = arith.addf %346, %347 : vector<8x128xf32>
    %349 = arith.mulf %345, %286 : vector<8x128xf32>
    %350 = arith.subf %348, %349 : vector<8x128xf32>
    %351 = arith.subf %350, %345 : vector<8x128xf32>
    %cst_148 = arith.constant 0.000000e+00 : f32
    %352 = vector.broadcast %cst_148 : f32 to vector<8x128xf32>
    %353 = arith.cmpf ogt, %351, %352 : vector<8x128xf32>
    %354 = arith.extui %353 : vector<8x128xi1> to vector<8x128xi32>
    %355 = arith.sitofp %354 : vector<8x128xi32> to vector<8x128xf32>
    %cst_149 = arith.constant dense<0.000000e+00> : vector<8x128xf32>
    %356 = tpu.matmul %355, %40, %cst_149 {dimension_numbers = #tpu.dot_dimension_numbers<[1], [0], [0], [1], [0, 0, 1, 1], [], []>} : vector<8x128xf32>, vector<128x128xf32>, vector<8x128xf32> -> vector<8x128xf32>
    %cst_150 = arith.constant dense<0.000000e+00> : vector<8x128xf32>
    %357 = tpu.matmul %307, %41, %cst_150 {dimension_numbers = #tpu.dot_dimension_numbers<[1], [0], [0], [1], [0, 0, 1, 1], [], []>} : vector<8x128xf32>, vector<128x128xf32>, vector<8x128xf32> -> vector<8x128xf32>
    %358 = arith.addf %356, %357 : vector<8x128xf32>
    %359 = arith.addf %358, %46 : vector<8x128xf32>
    %360 = arith.mulf %23, %293 : vector<8x128xf32>
    %361 = arith.mulf %26, %307 : vector<8x128xf32>
    %362 = arith.addf %360, %361 : vector<8x128xf32>
    %cst_151 = arith.constant 1.800000e+00 : f32
    %363 = vector.broadcast %cst_151 : f32 to vector<8x128xf32>
    %364 = arith.mulf %363, %362 : vector<8x128xf32>
    %cst_152 = arith.constant 0.00999999977 : f32
    %365 = vector.broadcast %cst_152 : f32 to vector<8x128xf32>
    %366 = arith.addf %365, %364 : vector<8x128xf32>
    %367 = arith.mulf %302, %17 : vector<8x128xf32>
    %368 = arith.mulf %20, %359 : vector<8x128xf32>
    %369 = arith.addf %367, %368 : vector<8x128xf32>
    %370 = arith.mulf %366, %307 : vector<8x128xf32>
    %371 = arith.subf %369, %370 : vector<8x128xf32>
    %372 = arith.subf %371, %366 : vector<8x128xf32>
    %cst_153 = arith.constant 0.000000e+00 : f32
    %373 = vector.broadcast %cst_153 : f32 to vector<8x128xf32>
    %374 = arith.cmpf ogt, %372, %373 : vector<8x128xf32>
    %375 = arith.extui %374 : vector<8x128xi1> to vector<8x128xi32>
    %376 = arith.sitofp %375 : vector<8x128xi32> to vector<8x128xf32>
    %cst_154 = arith.constant dense<0.000000e+00> : vector<8x128xf32>
    %377 = tpu.matmul %376, %42, %cst_154 {dimension_numbers = #tpu.dot_dimension_numbers<[1], [0], [0], [1], [0, 0, 1, 1], [], []>} : vector<8x128xf32>, vector<128x128xf32>, vector<8x128xf32> -> vector<8x128xf32>
    %cst_155 = arith.constant dense<0.000000e+00> : vector<8x128xf32>
    %378 = tpu.matmul %328, %43, %cst_155 {dimension_numbers = #tpu.dot_dimension_numbers<[1], [0], [0], [1], [0, 0, 1, 1], [], []>} : vector<8x128xf32>, vector<128x128xf32>, vector<8x128xf32> -> vector<8x128xf32>
    %379 = arith.addf %377, %378 : vector<8x128xf32>
    %380 = arith.addf %379, %49 : vector<8x128xf32>
    %381 = arith.mulf %35, %314 : vector<8x128xf32>
    %382 = arith.mulf %38, %328 : vector<8x128xf32>
    %383 = arith.addf %381, %382 : vector<8x128xf32>
    %cst_156 = arith.constant 1.800000e+00 : f32
    %384 = vector.broadcast %cst_156 : f32 to vector<8x128xf32>
    %385 = arith.mulf %384, %383 : vector<8x128xf32>
    %cst_157 = arith.constant 0.00999999977 : f32
    %386 = vector.broadcast %cst_157 : f32 to vector<8x128xf32>
    %387 = arith.addf %386, %385 : vector<8x128xf32>
    %388 = arith.mulf %323, %29 : vector<8x128xf32>
    %389 = arith.mulf %32, %380 : vector<8x128xf32>
    %390 = arith.addf %388, %389 : vector<8x128xf32>
    %391 = arith.mulf %387, %328 : vector<8x128xf32>
    %392 = arith.subf %390, %391 : vector<8x128xf32>
    %393 = arith.subf %392, %387 : vector<8x128xf32>
    %cst_158 = arith.constant 0.000000e+00 : f32
    %394 = vector.broadcast %cst_158 : f32 to vector<8x128xf32>
    %395 = arith.cmpf ogt, %393, %394 : vector<8x128xf32>
    %396 = arith.extui %395 : vector<8x128xi1> to vector<8x128xi32>
    %397 = arith.sitofp %396 : vector<8x128xi32> to vector<8x128xf32>
    %c4_159 = arith.constant 4 : index
    %c0_160 = arith.constant 0 : index
    %c0_161 = arith.constant 0 : index
    %398 = vector.load %arg13[%c4_159, %c0_160, %c0_161] : memref<8x8x256xf32, #tpu.memory_space<vmem>>, vector<1x8x128xf32>
    %399 = vector.shape_cast %398 : vector<1x8x128xf32> to vector<8x128xf32>
    %400 = vector.shape_cast %392 : vector<8x128xf32> to vector<1x8x128xf32>
    tpu.vector_store %arg13[%c4_159, %c0_160, %c0_161], %400 {strides = array<i32>} : memref<8x8x256xf32, #tpu.memory_space<vmem>>, vector<1x8x128xf32>,
    %c4_162 = arith.constant 4 : index
    %c0_163 = arith.constant 0 : index
    %c128_164 = arith.constant 128 : index
    %401 = vector.load %arg13[%c4_162, %c0_163, %c128_164] : memref<8x8x256xf32, #tpu.memory_space<vmem>>, vector<1x8x128xf32>
    %402 = vector.shape_cast %401 : vector<1x8x128xf32> to vector<8x128xf32>
    %403 = vector.shape_cast %397 : vector<8x128xf32> to vector<1x8x128xf32>
    tpu.vector_store %arg13[%c4_162, %c0_163, %c128_164], %403 {strides = array<i32>} : memref<8x8x256xf32, #tpu.memory_space<vmem>>, vector<1x8x128xf32>,
    %c5 = arith.constant 5 : index
    %c0_165 = arith.constant 0 : index
    %c0_166 = arith.constant 0 : index
    %404 = vector.load %arg2[%c5, %c0_165, %c0_166] : memref<8x8x128xf32, #tpu.memory_space<vmem>>, vector<1x8x128xf32>
    %405 = vector.shape_cast %404 : vector<1x8x128xf32> to vector<8x128xf32>
    %cst_167 = arith.constant dense<0.000000e+00> : vector<8x128xf32>
    %406 = tpu.matmul %355, %39, %cst_167 {dimension_numbers = #tpu.dot_dimension_numbers<[1], [0], [0], [1], [0, 0, 1, 1], [], []>} : vector<8x128xf32>, vector<128x128xf32>, vector<8x128xf32> -> vector<8x128xf32>
    %407 = arith.addf %405, %406 : vector<8x128xf32>
    %408 = arith.mulf %11, %341 : vector<8x128xf32>
    %409 = arith.mulf %14, %355 : vector<8x128xf32>
    %410 = arith.addf %408, %409 : vector<8x128xf32>
    %cst_168 = arith.constant 1.800000e+00 : f32
    %411 = vector.broadcast %cst_168 : f32 to vector<8x128xf32>
    %412 = arith.mulf %411, %410 : vector<8x128xf32>
    %cst_169 = arith.constant 0.00999999977 : f32
    %413 = vector.broadcast %cst_169 : f32 to vector<8x128xf32>
    %414 = arith.addf %413, %412 : vector<8x128xf32>
    %415 = arith.mulf %350, %5 : vector<8x128xf32>
    %416 = arith.mulf %8, %407 : vector<8x128xf32>
    %417 = arith.addf %415, %416 : vector<8x128xf32>
    %418 = arith.mulf %414, %355 : vector<8x128xf32>
    %419 = arith.subf %417, %418 : vector<8x128xf32>
    %420 = arith.subf %419, %414 : vector<8x128xf32>
    %cst_170 = arith.constant 0.000000e+00 : f32
    %421 = vector.broadcast %cst_170 : f32 to vector<8x128xf32>
    %422 = arith.cmpf ogt, %420, %421 : vector<8x128xf32>
    %423 = arith.extui %422 : vector<8x128xi1> to vector<8x128xi32>
    %424 = arith.sitofp %423 : vector<8x128xi32> to vector<8x128xf32>
    %cst_171 = arith.constant dense<0.000000e+00> : vector<8x128xf32>
    %425 = tpu.matmul %424, %40, %cst_171 {dimension_numbers = #tpu.dot_dimension_numbers<[1], [0], [0], [1], [0, 0, 1, 1], [], []>} : vector<8x128xf32>, vector<128x128xf32>, vector<8x128xf32> -> vector<8x128xf32>
    %cst_172 = arith.constant dense<0.000000e+00> : vector<8x128xf32>
    %426 = tpu.matmul %376, %41, %cst_172 {dimension_numbers = #tpu.dot_dimension_numbers<[1], [0], [0], [1], [0, 0, 1, 1], [], []>} : vector<8x128xf32>, vector<128x128xf32>, vector<8x128xf32> -> vector<8x128xf32>
    %427 = arith.addf %425, %426 : vector<8x128xf32>
    %428 = arith.addf %427, %46 : vector<8x128xf32>
    %429 = arith.mulf %23, %362 : vector<8x128xf32>
    %430 = arith.mulf %26, %376 : vector<8x128xf32>
    %431 = arith.addf %429, %430 : vector<8x128xf32>
    %cst_173 = arith.constant 1.800000e+00 : f32
    %432 = vector.broadcast %cst_173 : f32 to vector<8x128xf32>
    %433 = arith.mulf %432, %431 : vector<8x128xf32>
    %cst_174 = arith.constant 0.00999999977 : f32
    %434 = vector.broadcast %cst_174 : f32 to vector<8x128xf32>
    %435 = arith.addf %434, %433 : vector<8x128xf32>
    %436 = arith.mulf %371, %17 : vector<8x128xf32>
    %437 = arith.mulf %20, %428 : vector<8x128xf32>
    %438 = arith.addf %436, %437 : vector<8x128xf32>
    %439 = arith.mulf %435, %376 : vector<8x128xf32>
    %440 = arith.subf %438, %439 : vector<8x128xf32>
    %441 = arith.subf %440, %435 : vector<8x128xf32>
    %cst_175 = arith.constant 0.000000e+00 : f32
    %442 = vector.broadcast %cst_175 : f32 to vector<8x128xf32>
    %443 = arith.cmpf ogt, %441, %442 : vector<8x128xf32>
    %444 = arith.extui %443 : vector<8x128xi1> to vector<8x128xi32>
    %445 = arith.sitofp %444 : vector<8x128xi32> to vector<8x128xf32>
    %cst_176 = arith.constant dense<0.000000e+00> : vector<8x128xf32>
    %446 = tpu.matmul %445, %42, %cst_176 {dimension_numbers = #tpu.dot_dimension_numbers<[1], [0], [0], [1], [0, 0, 1, 1], [], []>} : vector<8x128xf32>, vector<128x128xf32>, vector<8x128xf32> -> vector<8x128xf32>
    %cst_177 = arith.constant dense<0.000000e+00> : vector<8x128xf32>
    %447 = tpu.matmul %397, %43, %cst_177 {dimension_numbers = #tpu.dot_dimension_numbers<[1], [0], [0], [1], [0, 0, 1, 1], [], []>} : vector<8x128xf32>, vector<128x128xf32>, vector<8x128xf32> -> vector<8x128xf32>
    %448 = arith.addf %446, %447 : vector<8x128xf32>
    %449 = arith.addf %448, %49 : vector<8x128xf32>
    %450 = arith.mulf %35, %383 : vector<8x128xf32>
    %451 = arith.mulf %38, %397 : vector<8x128xf32>
    %452 = arith.addf %450, %451 : vector<8x128xf32>
    %cst_178 = arith.constant 1.800000e+00 : f32
    %453 = vector.broadcast %cst_178 : f32 to vector<8x128xf32>
    %454 = arith.mulf %453, %452 : vector<8x128xf32>
    %cst_179 = arith.constant 0.00999999977 : f32
    %455 = vector.broadcast %cst_179 : f32 to vector<8x128xf32>
    %456 = arith.addf %455, %454 : vector<8x128xf32>
    %457 = arith.mulf %392, %29 : vector<8x128xf32>
    %458 = arith.mulf %32, %449 : vector<8x128xf32>
    %459 = arith.addf %457, %458 : vector<8x128xf32>
    %460 = arith.mulf %456, %397 : vector<8x128xf32>
    %461 = arith.subf %459, %460 : vector<8x128xf32>
    %462 = arith.subf %461, %456 : vector<8x128xf32>
    %cst_180 = arith.constant 0.000000e+00 : f32
    %463 = vector.broadcast %cst_180 : f32 to vector<8x128xf32>
    %464 = arith.cmpf ogt, %462, %463 : vector<8x128xf32>
    %465 = arith.extui %464 : vector<8x128xi1> to vector<8x128xi32>
    %466 = arith.sitofp %465 : vector<8x128xi32> to vector<8x128xf32>
    %c5_181 = arith.constant 5 : index
    %c0_182 = arith.constant 0 : index
    %c0_183 = arith.constant 0 : index
    %467 = vector.load %arg13[%c5_181, %c0_182, %c0_183] : memref<8x8x256xf32, #tpu.memory_space<vmem>>, vector<1x8x128xf32>
    %468 = vector.shape_cast %467 : vector<1x8x128xf32> to vector<8x128xf32>
    %469 = vector.shape_cast %461 : vector<8x128xf32> to vector<1x8x128xf32>
    tpu.vector_store %arg13[%c5_181, %c0_182, %c0_183], %469 {strides = array<i32>} : memref<8x8x256xf32, #tpu.memory_space<vmem>>, vector<1x8x128xf32>,
    %c5_184 = arith.constant 5 : index
    %c0_185 = arith.constant 0 : index
    %c128_186 = arith.constant 128 : index
    %470 = vector.load %arg13[%c5_184, %c0_185, %c128_186] : memref<8x8x256xf32, #tpu.memory_space<vmem>>, vector<1x8x128xf32>
    %471 = vector.shape_cast %470 : vector<1x8x128xf32> to vector<8x128xf32>
    %472 = vector.shape_cast %466 : vector<8x128xf32> to vector<1x8x128xf32>
    tpu.vector_store %arg13[%c5_184, %c0_185, %c128_186], %472 {strides = array<i32>} : memref<8x8x256xf32, #tpu.memory_space<vmem>>, vector<1x8x128xf32>,
    %c6 = arith.constant 6 : index
    %c0_187 = arith.constant 0 : index
    %c0_188 = arith.constant 0 : index
    %473 = vector.load %arg2[%c6, %c0_187, %c0_188] : memref<8x8x128xf32, #tpu.memory_space<vmem>>, vector<1x8x128xf32>
    %474 = vector.shape_cast %473 : vector<1x8x128xf32> to vector<8x128xf32>
    %cst_189 = arith.constant dense<0.000000e+00> : vector<8x128xf32>
    %475 = tpu.matmul %424, %39, %cst_189 {dimension_numbers = #tpu.dot_dimension_numbers<[1], [0], [0], [1], [0, 0, 1, 1], [], []>} : vector<8x128xf32>, vector<128x128xf32>, vector<8x128xf32> -> vector<8x128xf32>
    %476 = arith.addf %474, %475 : vector<8x128xf32>
    %477 = arith.mulf %11, %410 : vector<8x128xf32>
    %478 = arith.mulf %14, %424 : vector<8x128xf32>
    %479 = arith.addf %477, %478 : vector<8x128xf32>
    %cst_190 = arith.constant 1.800000e+00 : f32
    %480 = vector.broadcast %cst_190 : f32 to vector<8x128xf32>
    %481 = arith.mulf %480, %479 : vector<8x128xf32>
    %cst_191 = arith.constant 0.00999999977 : f32
    %482 = vector.broadcast %cst_191 : f32 to vector<8x128xf32>
    %483 = arith.addf %482, %481 : vector<8x128xf32>
    %484 = arith.mulf %419, %5 : vector<8x128xf32>
    %485 = arith.mulf %8, %476 : vector<8x128xf32>
    %486 = arith.addf %484, %485 : vector<8x128xf32>
    %487 = arith.mulf %483, %424 : vector<8x128xf32>
    %488 = arith.subf %486, %487 : vector<8x128xf32>
    %489 = arith.subf %488, %483 : vector<8x128xf32>
    %cst_192 = arith.constant 0.000000e+00 : f32
    %490 = vector.broadcast %cst_192 : f32 to vector<8x128xf32>
    %491 = arith.cmpf ogt, %489, %490 : vector<8x128xf32>
    %492 = arith.extui %491 : vector<8x128xi1> to vector<8x128xi32>
    %493 = arith.sitofp %492 : vector<8x128xi32> to vector<8x128xf32>
    %cst_193 = arith.constant dense<0.000000e+00> : vector<8x128xf32>
    %494 = tpu.matmul %493, %40, %cst_193 {dimension_numbers = #tpu.dot_dimension_numbers<[1], [0], [0], [1], [0, 0, 1, 1], [], []>} : vector<8x128xf32>, vector<128x128xf32>, vector<8x128xf32> -> vector<8x128xf32>
    %cst_194 = arith.constant dense<0.000000e+00> : vector<8x128xf32>
    %495 = tpu.matmul %445, %41, %cst_194 {dimension_numbers = #tpu.dot_dimension_numbers<[1], [0], [0], [1], [0, 0, 1, 1], [], []>} : vector<8x128xf32>, vector<128x128xf32>, vector<8x128xf32> -> vector<8x128xf32>
    %496 = arith.addf %494, %495 : vector<8x128xf32>
    %497 = arith.addf %496, %46 : vector<8x128xf32>
    %498 = arith.mulf %23, %431 : vector<8x128xf32>
    %499 = arith.mulf %26, %445 : vector<8x128xf32>
    %500 = arith.addf %498, %499 : vector<8x128xf32>
    %cst_195 = arith.constant 1.800000e+00 : f32
    %501 = vector.broadcast %cst_195 : f32 to vector<8x128xf32>
    %502 = arith.mulf %501, %500 : vector<8x128xf32>
    %cst_196 = arith.constant 0.00999999977 : f32
    %503 = vector.broadcast %cst_196 : f32 to vector<8x128xf32>
    %504 = arith.addf %503, %502 : vector<8x128xf32>
    %505 = arith.mulf %440, %17 : vector<8x128xf32>
    %506 = arith.mulf %20, %497 : vector<8x128xf32>
    %507 = arith.addf %505, %506 : vector<8x128xf32>
    %508 = arith.mulf %504, %445 : vector<8x128xf32>
    %509 = arith.subf %507, %508 : vector<8x128xf32>
    %510 = arith.subf %509, %504 : vector<8x128xf32>
    %cst_197 = arith.constant 0.000000e+00 : f32
    %511 = vector.broadcast %cst_197 : f32 to vector<8x128xf32>
    %512 = arith.cmpf ogt, %510, %511 : vector<8x128xf32>
    %513 = arith.extui %512 : vector<8x128xi1> to vector<8x128xi32>
    %514 = arith.sitofp %513 : vector<8x128xi32> to vector<8x128xf32>
    %cst_198 = arith.constant dense<0.000000e+00> : vector<8x128xf32>
    %515 = tpu.matmul %514, %42, %cst_198 {dimension_numbers = #tpu.dot_dimension_numbers<[1], [0], [0], [1], [0, 0, 1, 1], [], []>} : vector<8x128xf32>, vector<128x128xf32>, vector<8x128xf32> -> vector<8x128xf32>
    %cst_199 = arith.constant dense<0.000000e+00> : vector<8x128xf32>
    %516 = tpu.matmul %466, %43, %cst_199 {dimension_numbers = #tpu.dot_dimension_numbers<[1], [0], [0], [1], [0, 0, 1, 1], [], []>} : vector<8x128xf32>, vector<128x128xf32>, vector<8x128xf32> -> vector<8x128xf32>
    %517 = arith.addf %515, %516 : vector<8x128xf32>
    %518 = arith.addf %517, %49 : vector<8x128xf32>
    %519 = arith.mulf %35, %452 : vector<8x128xf32>
    %520 = arith.mulf %38, %466 : vector<8x128xf32>
    %521 = arith.addf %519, %520 : vector<8x128xf32>
    %cst_200 = arith.constant 1.800000e+00 : f32
    %522 = vector.broadcast %cst_200 : f32 to vector<8x128xf32>
    %523 = arith.mulf %522, %521 : vector<8x128xf32>
    %cst_201 = arith.constant 0.00999999977 : f32
    %524 = vector.broadcast %cst_201 : f32 to vector<8x128xf32>
    %525 = arith.addf %524, %523 : vector<8x128xf32>
    %526 = arith.mulf %461, %29 : vector<8x128xf32>
    %527 = arith.mulf %32, %518 : vector<8x128xf32>
    %528 = arith.addf %526, %527 : vector<8x128xf32>
    %529 = arith.mulf %525, %466 : vector<8x128xf32>
    %530 = arith.subf %528, %529 : vector<8x128xf32>
    %531 = arith.subf %530, %525 : vector<8x128xf32>
    %cst_202 = arith.constant 0.000000e+00 : f32
    %532 = vector.broadcast %cst_202 : f32 to vector<8x128xf32>
    %533 = arith.cmpf ogt, %531, %532 : vector<8x128xf32>
    %534 = arith.extui %533 : vector<8x128xi1> to vector<8x128xi32>
    %535 = arith.sitofp %534 : vector<8x128xi32> to vector<8x128xf32>
    %c6_203 = arith.constant 6 : index
    %c0_204 = arith.constant 0 : index
    %c0_205 = arith.constant 0 : index
    %536 = vector.load %arg13[%c6_203, %c0_204, %c0_205] : memref<8x8x256xf32, #tpu.memory_space<vmem>>, vector<1x8x128xf32>
    %537 = vector.shape_cast %536 : vector<1x8x128xf32> to vector<8x128xf32>
    %538 = vector.shape_cast %530 : vector<8x128xf32> to vector<1x8x128xf32>
    tpu.vector_store %arg13[%c6_203, %c0_204, %c0_205], %538 {strides = array<i32>} : memref<8x8x256xf32, #tpu.memory_space<vmem>>, vector<1x8x128xf32>,
    %c6_206 = arith.constant 6 : index
    %c0_207 = arith.constant 0 : index
    %c128_208 = arith.constant 128 : index
    %539 = vector.load %arg13[%c6_206, %c0_207, %c128_208] : memref<8x8x256xf32, #tpu.memory_space<vmem>>, vector<1x8x128xf32>
    %540 = vector.shape_cast %539 : vector<1x8x128xf32> to vector<8x128xf32>
    %541 = vector.shape_cast %535 : vector<8x128xf32> to vector<1x8x128xf32>
    tpu.vector_store %arg13[%c6_206, %c0_207, %c128_208], %541 {strides = array<i32>} : memref<8x8x256xf32, #tpu.memory_space<vmem>>, vector<1x8x128xf32>,
    %c7 = arith.constant 7 : index
    %c0_209 = arith.constant 0 : index
    %c0_210 = arith.constant 0 : index
    %542 = vector.load %arg2[%c7, %c0_209, %c0_210] : memref<8x8x128xf32, #tpu.memory_space<vmem>>, vector<1x8x128xf32>
    %543 = vector.shape_cast %542 : vector<1x8x128xf32> to vector<8x128xf32>
    %cst_211 = arith.constant dense<0.000000e+00> : vector<8x128xf32>
    %544 = tpu.matmul %493, %39, %cst_211 {dimension_numbers = #tpu.dot_dimension_numbers<[1], [0], [0], [1], [0, 0, 1, 1], [], []>} : vector<8x128xf32>, vector<128x128xf32>, vector<8x128xf32> -> vector<8x128xf32>
    %545 = arith.addf %543, %544 : vector<8x128xf32>
    %546 = arith.mulf %11, %479 : vector<8x128xf32>
    %547 = arith.mulf %14, %493 : vector<8x128xf32>
    %548 = arith.addf %546, %547 : vector<8x128xf32>
    %cst_212 = arith.constant 1.800000e+00 : f32
    %549 = vector.broadcast %cst_212 : f32 to vector<8x128xf32>
    %550 = arith.mulf %549, %548 : vector<8x128xf32>
    %cst_213 = arith.constant 0.00999999977 : f32
    %551 = vector.broadcast %cst_213 : f32 to vector<8x128xf32>
    %552 = arith.addf %551, %550 : vector<8x128xf32>
    %553 = arith.mulf %488, %5 : vector<8x128xf32>
    %554 = arith.mulf %8, %545 : vector<8x128xf32>
    %555 = arith.addf %553, %554 : vector<8x128xf32>
    %556 = arith.mulf %552, %493 : vector<8x128xf32>
    %557 = arith.subf %555, %556 : vector<8x128xf32>
    %558 = arith.subf %557, %552 : vector<8x128xf32>
    %cst_214 = arith.constant 0.000000e+00 : f32
    %559 = vector.broadcast %cst_214 : f32 to vector<8x128xf32>
    %560 = arith.cmpf ogt, %558, %559 : vector<8x128xf32>
    %561 = arith.extui %560 : vector<8x128xi1> to vector<8x128xi32>
    %562 = arith.sitofp %561 : vector<8x128xi32> to vector<8x128xf32>
    %cst_215 = arith.constant dense<0.000000e+00> : vector<8x128xf32>
    %563 = tpu.matmul %562, %40, %cst_215 {dimension_numbers = #tpu.dot_dimension_numbers<[1], [0], [0], [1], [0, 0, 1, 1], [], []>} : vector<8x128xf32>, vector<128x128xf32>, vector<8x128xf32> -> vector<8x128xf32>
    %cst_216 = arith.constant dense<0.000000e+00> : vector<8x128xf32>
    %564 = tpu.matmul %514, %41, %cst_216 {dimension_numbers = #tpu.dot_dimension_numbers<[1], [0], [0], [1], [0, 0, 1, 1], [], []>} : vector<8x128xf32>, vector<128x128xf32>, vector<8x128xf32> -> vector<8x128xf32>
    %565 = arith.addf %563, %564 : vector<8x128xf32>
    %566 = arith.addf %565, %46 : vector<8x128xf32>
    %567 = arith.mulf %23, %500 : vector<8x128xf32>
    %568 = arith.mulf %26, %514 : vector<8x128xf32>
    %569 = arith.addf %567, %568 : vector<8x128xf32>
    %cst_217 = arith.constant 1.800000e+00 : f32
    %570 = vector.broadcast %cst_217 : f32 to vector<8x128xf32>
    %571 = arith.mulf %570, %569 : vector<8x128xf32>
    %cst_218 = arith.constant 0.00999999977 : f32
    %572 = vector.broadcast %cst_218 : f32 to vector<8x128xf32>
    %573 = arith.addf %572, %571 : vector<8x128xf32>
    %574 = arith.mulf %509, %17 : vector<8x128xf32>
    %575 = arith.mulf %20, %566 : vector<8x128xf32>
    %576 = arith.addf %574, %575 : vector<8x128xf32>
    %577 = arith.mulf %573, %514 : vector<8x128xf32>
    %578 = arith.subf %576, %577 : vector<8x128xf32>
    %579 = arith.subf %578, %573 : vector<8x128xf32>
    %cst_219 = arith.constant 0.000000e+00 : f32
    %580 = vector.broadcast %cst_219 : f32 to vector<8x128xf32>
    %581 = arith.cmpf ogt, %579, %580 : vector<8x128xf32>
    %582 = arith.extui %581 : vector<8x128xi1> to vector<8x128xi32>
    %583 = arith.sitofp %582 : vector<8x128xi32> to vector<8x128xf32>
    %cst_220 = arith.constant dense<0.000000e+00> : vector<8x128xf32>
    %584 = tpu.matmul %583, %42, %cst_220 {dimension_numbers = #tpu.dot_dimension_numbers<[1], [0], [0], [1], [0, 0, 1, 1], [], []>} : vector<8x128xf32>, vector<128x128xf32>, vector<8x128xf32> -> vector<8x128xf32>
    %cst_221 = arith.constant dense<0.000000e+00> : vector<8x128xf32>
    %585 = tpu.matmul %535, %43, %cst_221 {dimension_numbers = #tpu.dot_dimension_numbers<[1], [0], [0], [1], [0, 0, 1, 1], [], []>} : vector<8x128xf32>, vector<128x128xf32>, vector<8x128xf32> -> vector<8x128xf32>
    %586 = arith.addf %584, %585 : vector<8x128xf32>
    %587 = arith.addf %586, %49 : vector<8x128xf32>
    %588 = arith.mulf %35, %521 : vector<8x128xf32>
    %589 = arith.mulf %38, %535 : vector<8x128xf32>
    %590 = arith.addf %588, %589 : vector<8x128xf32>
    %cst_222 = arith.constant 1.800000e+00 : f32
    %591 = vector.broadcast %cst_222 : f32 to vector<8x128xf32>
    %592 = arith.mulf %591, %590 : vector<8x128xf32>
    %cst_223 = arith.constant 0.00999999977 : f32
    %593 = vector.broadcast %cst_223 : f32 to vector<8x128xf32>
    %594 = arith.addf %593, %592 : vector<8x128xf32>
    %595 = arith.mulf %530, %29 : vector<8x128xf32>
    %596 = arith.mulf %32, %587 : vector<8x128xf32>
    %597 = arith.addf %595, %596 : vector<8x128xf32>
    %598 = arith.mulf %594, %535 : vector<8x128xf32>
    %599 = arith.subf %597, %598 : vector<8x128xf32>
    %600 = arith.subf %599, %594 : vector<8x128xf32>
    %cst_224 = arith.constant 0.000000e+00 : f32
    %601 = vector.broadcast %cst_224 : f32 to vector<8x128xf32>
    %602 = arith.cmpf ogt, %600, %601 : vector<8x128xf32>
    %603 = arith.extui %602 : vector<8x128xi1> to vector<8x128xi32>
    %604 = arith.sitofp %603 : vector<8x128xi32> to vector<8x128xf32>
    %c7_225 = arith.constant 7 : index
    %c0_226 = arith.constant 0 : index
    %c0_227 = arith.constant 0 : index
    %605 = vector.load %arg13[%c7_225, %c0_226, %c0_227] : memref<8x8x256xf32, #tpu.memory_space<vmem>>, vector<1x8x128xf32>
    %606 = vector.shape_cast %605 : vector<1x8x128xf32> to vector<8x128xf32>
    %607 = vector.shape_cast %599 : vector<8x128xf32> to vector<1x8x128xf32>
    tpu.vector_store %arg13[%c7_225, %c0_226, %c0_227], %607 {strides = array<i32>} : memref<8x8x256xf32, #tpu.memory_space<vmem>>, vector<1x8x128xf32>,
    %c7_228 = arith.constant 7 : index
    %c0_229 = arith.constant 0 : index
    %c128_230 = arith.constant 128 : index
    %608 = vector.load %arg13[%c7_228, %c0_229, %c128_230] : memref<8x8x256xf32, #tpu.memory_space<vmem>>, vector<1x8x128xf32>
    %609 = vector.shape_cast %608 : vector<1x8x128xf32> to vector<8x128xf32>
    %610 = vector.shape_cast %604 : vector<8x128xf32> to vector<1x8x128xf32>
    tpu.vector_store %arg13[%c7_228, %c0_229, %c128_230], %610 {strides = array<i32>} : memref<8x8x256xf32, #tpu.memory_space<vmem>>, vector<1x8x128xf32>,
    %c0_231 = arith.constant 0 : index
    %c0_232 = arith.constant 0 : index
    %611 = vector.load %arg21[%c0_231, %c0_232] : memref<8x128xf32, #tpu.memory_space<vmem>>, vector<8x128xf32>
    tpu.vector_store %arg21[%c0_231, %c0_232], %557 {strides = array<i32>} : memref<8x128xf32, #tpu.memory_space<vmem>>, vector<8x128xf32>,
    %c0_233 = arith.constant 0 : index
    %c0_234 = arith.constant 0 : index
    %612 = vector.load %arg22[%c0_233, %c0_234] : memref<8x128xf32, #tpu.memory_space<vmem>>, vector<8x128xf32>
    tpu.vector_store %arg22[%c0_233, %c0_234], %562 {strides = array<i32>} : memref<8x128xf32, #tpu.memory_space<vmem>>, vector<8x128xf32>,
    %c0_235 = arith.constant 0 : index
    %c0_236 = arith.constant 0 : index
    %613 = vector.load %arg23[%c0_235, %c0_236] : memref<8x128xf32, #tpu.memory_space<vmem>>, vector<8x128xf32>
    tpu.vector_store %arg23[%c0_235, %c0_236], %548 {strides = array<i32>} : memref<8x128xf32, #tpu.memory_space<vmem>>, vector<8x128xf32>,
    %c0_237 = arith.constant 0 : index
    %c0_238 = arith.constant 0 : index
    %614 = vector.load %arg24[%c0_237, %c0_238] : memref<8x128xf32, #tpu.memory_space<vmem>>, vector<8x128xf32>
    tpu.vector_store %arg24[%c0_237, %c0_238], %578 {strides = array<i32>} : memref<8x128xf32, #tpu.memory_space<vmem>>, vector<8x128xf32>,
    %c0_239 = arith.constant 0 : index
    %c0_240 = arith.constant 0 : index
    %615 = vector.load %arg25[%c0_239, %c0_240] : memref<8x128xf32, #tpu.memory_space<vmem>>, vector<8x128xf32>
    tpu.vector_store %arg25[%c0_239, %c0_240], %583 {strides = array<i32>} : memref<8x128xf32, #tpu.memory_space<vmem>>, vector<8x128xf32>,
    %c0_241 = arith.constant 0 : index
    %c0_242 = arith.constant 0 : index
    %616 = vector.load %arg26[%c0_241, %c0_242] : memref<8x128xf32, #tpu.memory_space<vmem>>, vector<8x128xf32>
    tpu.vector_store %arg26[%c0_241, %c0_242], %569 {strides = array<i32>} : memref<8x128xf32, #tpu.memory_space<vmem>>, vector<8x128xf32>,
    %c0_243 = arith.constant 0 : index
    %c0_244 = arith.constant 0 : index
    %617 = vector.load %arg27[%c0_243, %c0_244] : memref<8x128xf32, #tpu.memory_space<vmem>>, vector<8x128xf32>
    tpu.vector_store %arg27[%c0_243, %c0_244], %599 {strides = array<i32>} : memref<8x128xf32, #tpu.memory_space<vmem>>, vector<8x128xf32>,
    %c0_245 = arith.constant 0 : index
    %c0_246 = arith.constant 0 : index
    %618 = vector.load %arg28[%c0_245, %c0_246] : memref<8x128xf32, #tpu.memory_space<vmem>>, vector<8x128xf32>
    tpu.vector_store %arg28[%c0_245, %c0_246], %604 {strides = array<i32>} : memref<8x128xf32, #tpu.memory_space<vmem>>, vector<8x128xf32>,
    %c0_247 = arith.constant 0 : index
    %c0_248 = arith.constant 0 : index
    %619 = vector.load %arg29[%c0_247, %c0_248] : memref<8x128xf32, #tpu.memory_space<vmem>>, vector<8x128xf32>
    tpu.vector_store %arg29[%c0_247, %c0_248], %590 {strides = array<i32>} : memref<8x128xf32, #tpu.memory_space<vmem>>, vector<8x128xf32>,
    %c0_i32_249 = arith.constant 0 : i32
    %620 = arith.cmpi eq, %arg1, %c0_i32_249 : i32
    %621 = arith.extui %620 : i1 to i32
    %c0_i32_250 = arith.constant 0 : i32
    %622 = arith.cmpi ne, %621, %c0_i32_250 : i32
    scf.if %622 {
      %c0_251 = arith.constant 0 : index
      %c0_252 = arith.constant 0 : index
      %623 = vector.load %arg14[%c0_251, %c0_252] : memref<8x128xf32, #tpu.memory_space<vmem>>, vector<8x128xf32>
      tpu.vector_store %arg14[%c0_251, %c0_252], %557 {strides = array<i32>} : memref<8x128xf32, #tpu.memory_space<vmem>>, vector<8x128xf32>,
      %c0_253 = arith.constant 0 : index
      %c0_254 = arith.constant 0 : index
      %624 = vector.load %arg15[%c0_253, %c0_254] : memref<8x128xf32, #tpu.memory_space<vmem>>, vector<8x128xf32>
      tpu.vector_store %arg15[%c0_253, %c0_254], %562 {strides = array<i32>} : memref<8x128xf32, #tpu.memory_space<vmem>>, vector<8x128xf32>,
      %c0_255 = arith.constant 0 : index
      %c0_256 = arith.constant 0 : index
      %625 = vector.load %arg16[%c0_255, %c0_256] : memref<8x128xf32, #tpu.memory_space<vmem>>, vector<8x128xf32>
      tpu.vector_store %arg16[%c0_255, %c0_256], %548 {strides = array<i32>} : memref<8x128xf32, #tpu.memory_space<vmem>>, vector<8x128xf32>,
      %c0_257 = arith.constant 0 : index
      %c0_258 = arith.constant 0 : index
      %626 = vector.load %arg17[%c0_257, %c0_258] : memref<8x128xf32, #tpu.memory_space<vmem>>, vector<8x128xf32>
      tpu.vector_store %arg17[%c0_257, %c0_258], %578 {strides = array<i32>} : memref<8x128xf32, #tpu.memory_space<vmem>>, vector<8x128xf32>,
      %c0_259 = arith.constant 0 : index
      %c0_260 = arith.constant 0 : index
      %627 = vector.load %arg18[%c0_259, %c0_260] : memref<8x128xf32, #tpu.memory_space<vmem>>, vector<8x128xf32>
      tpu.vector_store %arg18[%c0_259, %c0_260], %583 {strides = array<i32>} : memref<8x128xf32, #tpu.memory_space<vmem>>, vector<8x128xf32>,
      %c0_261 = arith.constant 0 : index
      %c0_262 = arith.constant 0 : index
      %628 = vector.load %arg19[%c0_261, %c0_262] : memref<8x128xf32, #tpu.memory_space<vmem>>, vector<8x128xf32>
      tpu.vector_store %arg19[%c0_261, %c0_262], %569 {strides = array<i32>} : memref<8x128xf32, #tpu.memory_space<vmem>>, vector<8x128xf32>,
      %c0_263 = arith.constant 0 : index
      %c0_264 = arith.constant 0 : index
      %629 = vector.load %arg20[%c0_263, %c0_264] : memref<8x128xf32, #tpu.memory_space<vmem>>, vector<8x128xf32>
      tpu.vector_store %arg20[%c0_263, %c0_264], %590 {strides = array<i32>} : memref<8x128xf32, #tpu.memory_space<vmem>>, vector<8x128xf32>,
    } else {
    }
    return
  }
  func.func @transform_0(%arg0: i32, %arg1: i32) -> (i32, i32, i32) {
    %c0_i32 = arith.constant 0 : i32
    %c0_i32_0 = arith.constant 0 : i32
    return %arg1, %arg0, %c0_i32 : i32, i32, i32
  }
  func.func @transform_1(%arg0: i32, %arg1: i32) -> (i32, i32) {
    %c0_i32 = arith.constant 0 : i32
    %c0_i32_0 = arith.constant 0 : i32
    %c0_i32_1 = arith.constant 0 : i32
    return %c0_i32, %c0_i32_0 : i32, i32
  }
  func.func @transform_2(%arg0: i32, %arg1: i32) -> (i32, i32) {
    %c0_i32 = arith.constant 0 : i32
    %c0_i32_0 = arith.constant 0 : i32
    %c0_i32_1 = arith.constant 0 : i32
    return %c0_i32, %c0_i32_0 : i32, i32
  }
  func.func @transform_3(%arg0: i32, %arg1: i32) -> (i32, i32) {
    %c0_i32 = arith.constant 0 : i32
    %c0_i32_0 = arith.constant 0 : i32
    %c0_i32_1 = arith.constant 0 : i32
    return %c0_i32, %c0_i32_0 : i32, i32
  }
  func.func @transform_4(%arg0: i32, %arg1: i32) -> (i32, i32) {
    %c0_i32 = arith.constant 0 : i32
    %c0_i32_0 = arith.constant 0 : i32
    %c0_i32_1 = arith.constant 0 : i32
    return %c0_i32, %c0_i32_0 : i32, i32
  }
  func.func @transform_5(%arg0: i32, %arg1: i32) -> (i32, i32) {
    %c0_i32 = arith.constant 0 : i32
    %c0_i32_0 = arith.constant 0 : i32
    %c0_i32_1 = arith.constant 0 : i32
    return %c0_i32, %c0_i32_0 : i32, i32
  }
  func.func @transform_6(%arg0: i32, %arg1: i32) -> (i32, i32) {
    %c0_i32 = arith.constant 0 : i32
    %c0_i32_0 = arith.constant 0 : i32
    %c0_i32_1 = arith.constant 0 : i32
    return %c0_i32, %c0_i32_0 : i32, i32
  }
  func.func @transform_7(%arg0: i32, %arg1: i32) -> (i32, i32) {
    %c0_i32 = arith.constant 0 : i32
    %c0_i32_0 = arith.constant 0 : i32
    %c0_i32_1 = arith.constant 0 : i32
    return %c0_i32, %c0_i32_0 : i32, i32
  }
  func.func @transform_8(%arg0: i32, %arg1: i32) -> (i32, i32) {
    %c0_i32 = arith.constant 0 : i32
    %c0_i32_0 = arith.constant 0 : i32
    %c0_i32_1 = arith.constant 0 : i32
    return %c0_i32, %c0_i32_0 : i32, i32
  }
  func.func @transform_9(%arg0: i32, %arg1: i32) -> (i32, i32) {
    %c0_i32 = arith.constant 0 : i32
    %c0_i32_0 = arith.constant 0 : i32
    %c0_i32_1 = arith.constant 0 : i32
    return %c0_i32, %c0_i32_0 : i32, i32
  }
  func.func @transform_10(%arg0: i32, %arg1: i32) -> (i32, i32) {
    %c0_i32 = arith.constant 0 : i32
    %c0_i32_0 = arith.constant 0 : i32
    %c0_i32_1 = arith.constant 0 : i32
    return %c0_i32, %c0_i32_0 : i32, i32
  }
  func.func @transform_11(%arg0: i32, %arg1: i32) -> (i32, i32, i32) {
    %c0_i32 = arith.constant 0 : i32
    %c0_i32_0 = arith.constant 0 : i32
    return %arg1, %arg0, %c0_i32 : i32, i32, i32
  }
  func.func @transform_12(%arg0: i32, %arg1: i32) -> (i32, i32) {
    %c0_i32 = arith.constant 0 : i32
    %c0_i32_0 = arith.constant 0 : i32
    return %arg0, %c0_i32 : i32, i32
  }
  func.func @transform_13(%arg0: i32, %arg1: i32) -> (i32, i32) {
    %c0_i32 = arith.constant 0 : i32
    %c0_i32_0 = arith.constant 0 : i32
    return %arg0, %c0_i32 : i32, i32
  }
  func.func @transform_14(%arg0: i32, %arg1: i32) -> (i32, i32) {
    %c0_i32 = arith.constant 0 : i32
    %c0_i32_0 = arith.constant 0 : i32
    return %arg0, %c0_i32 : i32, i32
  }
  func.func @transform_15(%arg0: i32, %arg1: i32) -> (i32, i32) {
    %c0_i32 = arith.constant 0 : i32
    %c0_i32_0 = arith.constant 0 : i32
    return %arg0, %c0_i32 : i32, i32
  }
  func.func @transform_16(%arg0: i32, %arg1: i32) -> (i32, i32) {
    %c0_i32 = arith.constant 0 : i32
    %c0_i32_0 = arith.constant 0 : i32
    return %arg0, %c0_i32 : i32, i32
  }
  func.func @transform_17(%arg0: i32, %arg1: i32) -> (i32, i32) {
    %c0_i32 = arith.constant 0 : i32
    %c0_i32_0 = arith.constant 0 : i32
    return %arg0, %c0_i32 : i32, i32
  }
  func.func @transform_18(%arg0: i32, %arg1: i32) -> (i32, i32) {
    %c0_i32 = arith.constant 0 : i32
    %c0_i32_0 = arith.constant 0 : i32
    return %arg0, %c0_i32 : i32, i32
  }
}

</mosaic_0001>

<llo_original>
// kernel: srnn_alif_forward.1
$region0: #{srnn_alif_forward.1}
  #allocation0 [shape = 'u32[]', space=smem, size = 0x4, offset = 0x4, fixed_abs, tag = 'smem constant byte address 0x4 - core index']
  #allocation1 [shape = 'u32[144,128]{1,0:T(1,128)}', space=vmem, size = 0x12000, scoped, tag = 'internal scratch']
  #allocation2 [shape = 'f32[8,128]{1,0:T(8,128)}', space=vmem, size = 0x1000, scoped, tag = 'scratch operand']
  #allocation3 [shape = 'f32[8,128]{1,0:T(8,128)}', space=vmem, size = 0x1000, scoped, tag = 'scratch operand']
  #allocation4 [shape = 'f32[8,128]{1,0:T(8,128)}', space=vmem, size = 0x1000, scoped, tag = 'scratch operand']
  #allocation5 [shape = 'f32[8,128]{1,0:T(8,128)}', space=vmem, size = 0x1000, scoped, tag = 'scratch operand']
  #allocation6 [shape = 'f32[8,128]{1,0:T(8,128)}', space=vmem, size = 0x1000, scoped, tag = 'scratch operand']
  #allocation7 [shape = 'f32[8,128]{1,0:T(8,128)}', space=vmem, size = 0x1000, scoped, tag = 'scratch operand']
  #allocation8 [shape = 'f32[8,128]{1,0:T(8,128)}', space=vmem, size = 0x1000, scoped, tag = 'scratch operand']
  #allocation9 [shape = 'f32[8,128]{1,0:T(8,128)}', space=vmem, size = 0x1000, scoped, tag = 'scratch operand']
  #allocation10 [shape = 'f32[8,128]{1,0:T(8,128)}', space=vmem, size = 0x1000, scoped, tag = 'scratch operand']
  %s0 = inlined_call_operand.vmem [shape: f32[8,8,128], index: 0, kind: input, shape index: {}]
  %s1 = inlined_call_operand.vmem [shape: f32[128,128], index: 1, kind: input, shape index: {}]
  %s2 = inlined_call_operand.vmem [shape: f32[128,128], index: 2, kind: input, shape index: {}]
  %s3 = inlined_call_operand.vmem [shape: f32[128,128], index: 3, kind: input, shape index: {}]
  %s4 = inlined_call_operand.vmem [shape: f32[1,128], index: 4, kind: input, shape index: {}]
  %s5 = inlined_call_operand.vmem [shape: f32[128,128], index: 5, kind: input, shape index: {}]
  %s6 = inlined_call_operand.vmem [shape: f32[128,128], index: 6, kind: input, shape index: {}]
  %s7 = inlined_call_operand.vmem [shape: f32[1,128], index: 7, kind: input, shape index: {}]
  %s8 = inlined_call_operand.vmem [shape: f32[4,128], index: 8, kind: input, shape index: {}]
  %s9 = inlined_call_operand.vmem [shape: f32[4,128], index: 9, kind: input, shape index: {}]
  %s10 = inlined_call_operand.vmem [shape: f32[4,128], index: 10, kind: input, shape index: {}]
  %s11 = inlined_call_operand.vmem [shape: f32[8,8,256], index: 11, kind: output, shape index: {0}]
  %s12 = inlined_call_operand.vmem [shape: f32[8,128], index: 12, kind: output, shape index: {1}]
  %s13 = inlined_call_operand.vmem [shape: f32[8,128], index: 13, kind: output, shape index: {2}]
  %s14 = inlined_call_operand.vmem [shape: f32[8,128], index: 14, kind: output, shape index: {3}]
  %s15 = inlined_call_operand.vmem [shape: f32[8,128], index: 15, kind: output, shape index: {4}]
  %s16 = inlined_call_operand.vmem [shape: f32[8,128], index: 16, kind: output, shape index: {5}]
  %s17 = inlined_call_operand.vmem [shape: f32[8,128], index: 17, kind: output, shape index: {6}]
  %s18 = inlined_call_operand.vmem [shape: f32[8,128], index: 18, kind: output, shape index: {7}]
  %19 = xla_tuple %s11, %s12, %s13, %s14, %s15, %s16, %s17, %s18
  %s20 = sld [smem:[#allocation0]]
  $region118: #{srnn_alif_forward.1} parent=0
    _
  %s22 = ssub.s32 1, %s20
  %s23 = scalar_select 0, %s22, %s20
  // Predicated region
  $region2: #{srnn_alif_forward.1} parent=0 // pred_check
    _
  $region3: #{srnn_alif_forward.1} parent=0 // pred_check_branch
    %25 = sbr.rel (0) target = $region5
  $region4: #{srnn_alif_forward.1} parent=0 // pred_region
    _
  $region5: #{srnn_alif_forward.1} parent=0 // pred_fallthru
    _
  // Predicated region
  $region6: #{srnn_alif_forward.1} parent=0 // pred_check
    _
  $region7: #{srnn_alif_forward.1} parent=0 // pred_check_branch
    %27 = sbr.rel (0) target = $region9
  $region8: #{srnn_alif_forward.1} parent=0 // pred_region
    _
  $region9: #{srnn_alif_forward.1} parent=0 // pred_fallthru
    _
  // Predicated region
  $region10: #{srnn_alif_forward.1} parent=0 // pred_check
    _
  $region11: #{srnn_alif_forward.1} parent=0 // pred_check_branch
    %29 = sbr.rel (0) target = $region13
  $region12: #{srnn_alif_forward.1} parent=0 // pred_region
    _
  $region13: #{srnn_alif_forward.1} parent=0 // pred_fallthru
    _
  // Predicated region
  $region14: #{srnn_alif_forward.1} parent=0 // pred_check
    _
  $region15: #{srnn_alif_forward.1} parent=0 // pred_check_branch
    %31 = sbr.rel (0) target = $region17
  $region16: #{srnn_alif_forward.1} parent=0 // pred_region
    _
  $region17: #{srnn_alif_forward.1} parent=0 // pred_fallthru
    _
  // Predicated region
  $region18: #{srnn_alif_forward.1} parent=0 // pred_check
    _
  $region19: #{srnn_alif_forward.1} parent=0 // pred_check_branch
    %33 = sbr.rel (0) target = $region21
  $region20: #{srnn_alif_forward.1} parent=0 // pred_region
    _
  $region21: #{srnn_alif_forward.1} parent=0 // pred_fallthru
    _
  // Predicated region
  $region22: #{srnn_alif_forward.1} parent=0 // pred_check
    _
  $region23: #{srnn_alif_forward.1} parent=0 // pred_check_branch
    %35 = sbr.rel (0) target = $region25
  $region24: #{srnn_alif_forward.1} parent=0 // pred_region
    _
  $region25: #{srnn_alif_forward.1} parent=0 // pred_fallthru
    _
  // Predicated region
  $region26: #{srnn_alif_forward.1} parent=0 // pred_check
    _
  $region27: #{srnn_alif_forward.1} parent=0 // pred_check_branch
    %37 = sbr.rel (0) target = $region29
  $region28: #{srnn_alif_forward.1} parent=0 // pred_region
    _
  $region29: #{srnn_alif_forward.1} parent=0 // pred_fallthru
    _
  // Predicated region
  $region30: #{srnn_alif_forward.1} parent=0 // pred_check
    _
  $region31: #{srnn_alif_forward.1} parent=0 // pred_check_branch
    %39 = sbr.rel (0) target = $region33
  $region32: #{srnn_alif_forward.1} parent=0 // pred_region
    _
  $region33: #{srnn_alif_forward.1} parent=0 // pred_fallthru
    _
  // Predicated region
  $region34: #{srnn_alif_forward.1} parent=0 // pred_check
    _
  $region35: #{srnn_alif_forward.1} parent=0 // pred_check_branch
    %41 = sbr.rel (0) target = $region37
  $region36: #{srnn_alif_forward.1} parent=0 // pred_region
    _
  $region37: #{srnn_alif_forward.1} parent=0 // pred_fallthru
    _
  // Predicated region
  $region38: #{srnn_alif_forward.1} parent=0 // pred_check
    _
  $region39: #{srnn_alif_forward.1} parent=0 // pred_check_branch
    %43 = sbr.rel (0) target = $region41
  $region40: #{srnn_alif_forward.1} parent=0 // pred_region
    _
  $region41: #{srnn_alif_forward.1} parent=0 // pred_fallthru
    _
  // Predicated region
  $region42: #{srnn_alif_forward.1} parent=0 // pred_check
    _
  $region43: #{srnn_alif_forward.1} parent=0 // pred_check_branch
    %45 = sbr.rel (0) target = $region45
  $region44: #{srnn_alif_forward.1} parent=0 // pred_region
    _
  $region45: #{srnn_alif_forward.1} parent=0 // pred_fallthru
    _
  %p46 = scmp.eq.s32.totalorder 0, 0
  // Predicated region
  $region46: #{srnn_alif_forward.1} parent=0 // pred_check
    %p47 = pneg %p46
  $region47: #{srnn_alif_forward.1} parent=0 // pred_check_branch
    %49 = sbr.rel (%p47) target = $region49
  $region48: #{srnn_alif_forward.1} parent=0 // pred_region
    %50 = vst [vmem:[#allocation2] sm:$0xff] 0.0
    %51 = vst [vmem:[#allocation3] sm:$0xff] 0.0
    %52 = vst [vmem:[#allocation5] sm:$0xff] 0.0
    %53 = vst [vmem:[#allocation6] sm:$0xff] 0.0
    %54 = vst [vmem:[#allocation8] sm:$0xff] 0.0
    %55 = vst [vmem:[#allocation9] sm:$0xff] 0.0
    %56 = vst [vmem:[#allocation4] sm:$0xff] 0.01
    %57 = vst [vmem:[#allocation7] sm:$0xff] 0.01
    %58 = vst [vmem:[#allocation10] sm:$0xff] 0.01
  $region49: #{srnn_alif_forward.1} parent=0 // pred_fallthru
    _
  %v59 = vld [vmem:[%s8] sm:$0x1]
  %v60 = vlaneseq
  %v61 = vshrl.u32 %v60, 7
  %v62 = vsub.s32 0, %v61
  %v63 = vrot.slane %v59, %v62
  %v64 = vld [vmem:[%s8 + $0x1] sm:$0x1]
  %v65 = vlaneseq
  %v66 = vshrl.u32 %v65, 7
  %v67 = vsub.s32 0, %v66
  %v68 = vrot.slane %v64, %v67
  %v69 = vld [vmem:[%s8 + $0x2] sm:$0x1]
  %v70 = vlaneseq
  %v71 = vshrl.u32 %v70, 7
  %v72 = vsub.s32 0, %v71
  %v73 = vrot.slane %v69, %v72
  %v74 = vld [vmem:[%s8 + $0x3] sm:$0x1]
  %v75 = vlaneseq
  %v76 = vshrl.u32 %v75, 7
  %v77 = vsub.s32 0, %v76
  %v78 = vrot.slane %v74, %v77
  %v79 = vld [vmem:[%s9] sm:$0x1]
  %v80 = vlaneseq
  %v81 = vshrl.u32 %v80, 7
  %v82 = vsub.s32 0, %v81
  %v83 = vrot.slane %v79, %v82
  %v84 = vld [vmem:[%s9 + $0x1] sm:$0x1]
  %v85 = vlaneseq
  %v86 = vshrl.u32 %v85, 7
  %v87 = vsub.s32 0, %v86
  %v88 = vrot.slane %v84, %v87
  %v89 = vld [vmem:[%s9 + $0x2] sm:$0x1]
  %v90 = vlaneseq
  %v91 = vshrl.u32 %v90, 7
  %v92 = vsub.s32 0, %v91
  %v93 = vrot.slane %v89, %v92
  %v94 = vld [vmem:[%s9 + $0x3] sm:$0x1]
  %v95 = vlaneseq
  %v96 = vshrl.u32 %v95, 7
  %v97 = vsub.s32 0, %v96
  %v98 = vrot.slane %v94, %v97
  %v99 = vld [vmem:[%s10] sm:$0x1]
  %v100 = vlaneseq
  %v101 = vshrl.u32 %v100, 7
  %v102 = vsub.s32 0, %v101
  %v103 = vrot.slane %v99, %v102
  %v104 = vld [vmem:[%s10 + $0x1] sm:$0x1]
  %v105 = vlaneseq
  %v106 = vshrl.u32 %v105, 7
  %v107 = vsub.s32 0, %v106
  %v108 = vrot.slane %v104, %v107
  %v109 = vld [vmem:[%s10 + $0x2] sm:$0x1]
  %v110 = vlaneseq
  %v111 = vshrl.u32 %v110, 7
  %v112 = vsub.s32 0, %v111
  %v113 = vrot.slane %v109, %v112
  %v114 = vld [vmem:[%s10 + $0x3] sm:$0x1]
  %v115 = vlaneseq
  %v116 = vshrl.u32 %v115, 7
  %v117 = vsub.s32 0, %v116
  %v118 = vrot.slane %v114, %v117
  %v119 = vld [vmem:[%s1] sm:$0xff]
  %v120 = vld [vmem:[%s1 + $0x8] sm:$0xff]
  %v121 = vld [vmem:[%s1 + $0x10] sm:$0xff]
  %v122 = vld [vmem:[%s1 + $0x18] sm:$0xff]
  %v123 = vld [vmem:[%s1 + $0x20] sm:$0xff]
  %v124 = vld [vmem:[%s1 + $0x28] sm:$0xff]
  %v125 = vld [vmem:[%s1 + $0x30] sm:$0xff]
  %v126 = vld [vmem:[%s1 + $0x38] sm:$0xff]
  %v127 = vld [vmem:[%s1 + $0x40] sm:$0xff]
  %v128 = vld [vmem:[%s1 + $0x48] sm:$0xff]
  %v129 = vld [vmem:[%s1 + $0x50] sm:$0xff]
  %v130 = vld [vmem:[%s1 + $0x58] sm:$0xff]
  %v131 = vld [vmem:[%s1 + $0x60] sm:$0xff]
  %v132 = vld [vmem:[%s1 + $0x68] sm:$0xff]
  %v133 = vld [vmem:[%s1 + $0x70] sm:$0xff]
  %v134 = vld [vmem:[%s1 + $0x78] sm:$0xff]
  %v135 = vld [vmem:[%s2] sm:$0xff]
  %v136 = vld [vmem:[%s2 + $0x8] sm:$0xff]
  %v137 = vld [vmem:[%s2 + $0x10] sm:$0xff]
  %v138 = vld [vmem:[%s2 + $0x18] sm:$0xff]
  %v139 = vld [vmem:[%s2 + $0x20] sm:$0xff]
  %v140 = vld [vmem:[%s2 + $0x28] sm:$0xff]
  %v141 = vld [vmem:[%s2 + $0x30] sm:$0xff]
  %v142 = vld [vmem:[%s2 + $0x38] sm:$0xff]
  %v143 = vld [vmem:[%s2 + $0x40] sm:$0xff]
  %v144 = vld [vmem:[%s2 + $0x48] sm:$0xff]
  %v145 = vld [vmem:[%s2 + $0x50] sm:$0xff]
  %v146 = vld [vmem:[%s2 + $0x58] sm:$0xff]
  %v147 = vld [vmem:[%s2 + $0x60] sm:$0xff]
  %v148 = vld [vmem:[%s2 + $0x68] sm:$0xff]
  %v149 = vld [vmem:[%s2 + $0x70] sm:$0xff]
  %v150 = vld [vmem:[%s2 + $0x78] sm:$0xff]
  %v151 = vld [vmem:[%s3] sm:$0xff]
  %v152 = vld [vmem:[%s3 + $0x8] sm:$0xff]
  %v153 = vld [vmem:[%s3 + $0x10] sm:$0xff]
  %v154 = vld [vmem:[%s3 + $0x18] sm:$0xff]
  %v155 = vld [vmem:[%s3 + $0x20] sm:$0xff]
  %v156 = vld [vmem:[%s3 + $0x28] sm:$0xff]
  %v157 = vld [vmem:[%s3 + $0x30] sm:$0xff]
  %v158 = vld [vmem:[%s3 + $0x38] sm:$0xff]
  %v159 = vld [vmem:[%s3 + $0x40] sm:$0xff]
  %v160 = vld [vmem:[%s3 + $0x48] sm:$0xff]
  %v161 = vld [vmem:[%s3 + $0x50] sm:$0xff]
  %v162 = vld [vmem:[%s3 + $0x58] sm:$0xff]
  %v163 = vld [vmem:[%s3 + $0x60] sm:$0xff]
  %v164 = vld [vmem:[%s3 + $0x68] sm:$0xff]
  %v165 = vld [vmem:[%s3 + $0x70] sm:$0xff]
  %v166 = vld [vmem:[%s3 + $0x78] sm:$0xff]
  %v167 = vld [vmem:[%s5] sm:$0xff]
  %v168 = vld [vmem:[%s5 + $0x8] sm:$0xff]
  %v169 = vld [vmem:[%s5 + $0x10] sm:$0xff]
  %v170 = vld [vmem:[%s5 + $0x18] sm:$0xff]
  %v171 = vld [vmem:[%s5 + $0x20] sm:$0xff]
  %v172 = vld [vmem:[%s5 + $0x28] sm:$0xff]
  %v173 = vld [vmem:[%s5 + $0x30] sm:$0xff]
  %v174 = vld [vmem:[%s5 + $0x38] sm:$0xff]
  %v175 = vld [vmem:[%s5 + $0x40] sm:$0xff]
  %v176 = vld [vmem:[%s5 + $0x48] sm:$0xff]
  %v177 = vld [vmem:[%s5 + $0x50] sm:$0xff]
  %v178 = vld [vmem:[%s5 + $0x58] sm:$0xff]
  %v179 = vld [vmem:[%s5 + $0x60] sm:$0xff]
  %v180 = vld [vmem:[%s5 + $0x68] sm:$0xff]
  %v181 = vld [vmem:[%s5 + $0x70] sm:$0xff]
  %v182 = vld [vmem:[%s5 + $0x78] sm:$0xff]
  %v183 = vld [vmem:[%s6] sm:$0xff]
  %v184 = vld [vmem:[%s6 + $0x8] sm:$0xff]
  %v185 = vld [vmem:[%s6 + $0x10] sm:$0xff]
  %v186 = vld [vmem:[%s6 + $0x18] sm:$0xff]
  %v187 = vld [vmem:[%s6 + $0x20] sm:$0xff]
  %v188 = vld [vmem:[%s6 + $0x28] sm:$0xff]
  %v189 = vld [vmem:[%s6 + $0x30] sm:$0xff]
  %v190 = vld [vmem:[%s6 + $0x38] sm:$0xff]
  %v191 = vld [vmem:[%s6 + $0x40] sm:$0xff]
  %v192 = vld [vmem:[%s6 + $0x48] sm:$0xff]
  %v193 = vld [vmem:[%s6 + $0x50] sm:$0xff]
  %v194 = vld [vmem:[%s6 + $0x58] sm:$0xff]
  %v195 = vld [vmem:[%s6 + $0x60] sm:$0xff]
  %v196 = vld [vmem:[%s6 + $0x68] sm:$0xff]
  %v197 = vld [vmem:[%s6 + $0x70] sm:$0xff]
  %v198 = vld [vmem:[%s6 + $0x78] sm:$0xff]
  %v199 = vld [vmem:[%s4] sm:$0x1]
  %v201 = vlaneseq
  %v202 = vshrl.u32 %v201, 7
  %v203 = vsub.s32 0, %v202
  %v204 = vrot.slane %v199, %v203
  %v206 = vld [vmem:[%s7] sm:$0x1]
  %v208 = vlaneseq
  %v209 = vshrl.u32 %v208, 7
  %v210 = vsub.s32 0, %v209
  %v211 = vrot.slane %v206, %v210
  %v213 = vld [vmem:[#allocation2] sm:$0xff]
  %v214 = vld [vmem:[#allocation3] sm:$0xff]
  %v215 = vld [vmem:[#allocation4] sm:$0xff]
  %v216 = vld [vmem:[#allocation5] sm:$0xff]
  %v217 = vld [vmem:[#allocation6] sm:$0xff]
  %v218 = vld [vmem:[#allocation7] sm:$0xff]
  %v219 = vld [vmem:[#allocation8] sm:$0xff]
  %v220 = vld [vmem:[#allocation9] sm:$0xff]
  %v221 = vld [vmem:[#allocation10] sm:$0xff]
  %v222 = vld [vmem:[%s0] sm:$0xff]
  %223 = vmatprep.subr.mxu0 0.0
  %224 = vmatpush1.msra.mxu0 %v134
  %225 = vmatprep.subr.mxu0 0.0
  %226 = vmatpush1.msra.mxu0 %v133
  %227 = vmatprep.subr.mxu0 0.0
  %228 = vmatpush1.msra.mxu0 %v132
  %229 = vmatprep.subr.mxu0 0.0
  %230 = vmatpush1.msra.mxu0 %v131
  %231 = vmatprep.subr.mxu0 0.0
  %232 = vmatpush1.msra.mxu0 %v130
  %233 = vmatprep.subr.mxu0 0.0
  %234 = vmatpush1.msra.mxu0 %v129
  %235 = vmatprep.subr.mxu0 0.0
  %236 = vmatpush1.msra.mxu0 %v128
  %237 = vmatprep.subr.mxu0 0.0
  %238 = vmatpush1.msra.mxu0 %v127
  %239 = vmatprep.subr.mxu0 0.0
  %240 = vmatpush1.msra.mxu0 %v126
  %241 = vmatprep.subr.mxu0 0.0
  %242 = vmatpush1.msra.mxu0 %v125
  %243 = vmatprep.subr.mxu0 0.0
  %244 = vmatpush1.msra.mxu0 %v124
  %245 = vmatprep.subr.mxu0 0.0
  %246 = vmatpush1.msra.mxu0 %v123
  %247 = vmatprep.subr.mxu0 0.0
  %248 = vmatpush1.msra.mxu0 %v122
  %249 = vmatprep.subr.mxu0 0.0
  %250 = vmatpush1.msra.mxu0 %v121
  %251 = vmatprep.subr.mxu0 0.0
  %252 = vmatpush1.msra.mxu0 %v120
  %253 = vmatprep.subr.mxu0 0.0
  %254 = vmatpush1.msra.mxu0 %v119
  %255 = vmatprep.subr.mxu0 0.0
  %256 = vmatpush2.msra.mxu0 0.0
  %257 = vmatprep.subr.mxu0 0.0
  %258 = vmatpush2.msra.mxu0 0.0
  %259 = vmatprep.subr.mxu0 0.0
  %260 = vmatpush2.msra.mxu0 0.0
  %261 = vmatprep.subr.mxu0 0.0
  %262 = vmatpush2.msra.mxu0 0.0
  %263 = vmatprep.subr.mxu0 0.0
  %264 = vmatpush2.msra.mxu0 0.0
  %265 = vmatprep.subr.mxu0 0.0
  %266 = vmatpush2.msra.mxu0 0.0
  %267 = vmatprep.subr.mxu0 0.0
  %268 = vmatpush2.msra.mxu0 0.0
  %269 = vmatprep.subr.mxu0 0.0
  %270 = vmatpush2.msra.mxu0 0.0
  %271 = vmatprep.subr.mxu0 0.0
  %272 = vmatpush2.msra.mxu0 0.0
  %273 = vmatprep.subr.mxu0 0.0
  %274 = vmatpush2.msra.mxu0 0.0
  %275 = vmatprep.subr.mxu0 0.0
  %276 = vmatpush2.msra.mxu0 0.0
  %277 = vmatprep.subr.mxu0 0.0
  %278 = vmatpush2.msra.mxu0 0.0
  %279 = vmatprep.subr.mxu0 0.0
  %280 = vmatpush2.msra.mxu0 0.0
  %281 = vmatprep.subr.mxu0 0.0
  %282 = vmatpush2.msra.mxu0 0.0
  %283 = vmatprep.subr.mxu0 0.0
  %284 = vmatpush2.msra.mxu0 0.0
  %285 = vmatprep.subr.mxu0 0.0
  %286 = vmatpush2.msra.mxu0 0.0
  %287 = vmatprep.mubr.f32.mxu0 0.0
  %288 = vmatmul.mubr.f32.gmra.mxu0 %v214
  %v289 = vpop.f32.mrf.mxu0
  %v290 = vadd.f32 0.0, %v289
  %v291 = vpop.f32.mrf.mxu0
  %292 = vdwg.mxu0
  %v293 = vadd.f32 %v222, %v290
  %v294 = vmul.f32 %v73, %v215
  %v295 = vmul.f32 %v78, %v214
  %v296 = vadd.f32 %v294, %v295
  %v297 = vmul.f32 %v296, 1.8
  %v298 = vadd.f32 %v297, 0.01
  %v299 = vmul.f32 %v213, %v63
  %v300 = vmul.f32 %v68, %v293
  %v301 = vadd.f32 %v299, %v300
  %v302 = vmul.f32 %v298, %v214
  %v303 = vsub.f32 %v301, %v302
  %v304 = vsub.f32 %v303, %v298
  %vm305 = vcmp.gt.f32.partialorder %v304, 0.0
  %v306 = vsel %vm305, 1, 0
  %v307 = vcvt.s32.f32 %v306
  %308 = vmatprep.subr.mxu0 0.0
  %309 = vmatpush1.msra.mxu0 %v166
  %310 = vmatprep.subr.mxu0 0.0
  %311 = vmatpush1.msra.mxu0 %v165
  %312 = vmatprep.subr.mxu0 0.0
  %313 = vmatpush1.msra.mxu0 %v164
  %314 = vmatprep.subr.mxu0 0.0
  %315 = vmatpush1.msra.mxu0 %v163
  %316 = vmatprep.subr.mxu0 0.0
  %317 = vmatpush1.msra.mxu0 %v162
  %318 = vmatprep.subr.mxu0 0.0
  %319 = vmatpush1.msra.mxu0 %v161
  %320 = vmatprep.subr.mxu0 0.0
  %321 = vmatpush1.msra.mxu0 %v160
  %322 = vmatprep.subr.mxu0 0.0
  %323 = vmatpush1.msra.mxu0 %v159
  %324 = vmatprep.subr.mxu0 0.0
  %325 = vmatpush1.msra.mxu0 %v158
  %326 = vmatprep.subr.mxu0 0.0
  %327 = vmatpush1.msra.mxu0 %v157
  %328 = vmatprep.subr.mxu0 0.0
  %329 = vmatpush1.msra.mxu0 %v156
  %330 = vmatprep.subr.mxu0 0.0
  %331 = vmatpush1.msra.mxu0 %v155
  %332 = vmatprep.subr.mxu0 0.0
  %333 = vmatpush1.msra.mxu0 %v154
  %334 = vmatprep.subr.mxu0 0.0
  %335 = vmatpush1.msra.mxu0 %v153
  %336 = vmatprep.subr.mxu0 0.0
  %337 = vmatpush1.msra.mxu0 %v152
  %338 = vmatprep.subr.mxu0 0.0
  %339 = vmatpush1.msra.mxu0 %v151
  %340 = vmatprep.subr.mxu0 0.0
  %341 = vmatpush2.msra.mxu0 0.0
  %342 = vmatprep.subr.mxu0 0.0
  %343 = vmatpush2.msra.mxu0 0.0
  %344 = vmatprep.subr.mxu0 0.0
  %345 = vmatpush2.msra.mxu0 0.0
  %346 = vmatprep.subr.mxu0 0.0
  %347 = vmatpush2.msra.mxu0 0.0
  %348 = vmatprep.subr.mxu0 0.0
  %349 = vmatpush2.msra.mxu0 0.0
  %350 = vmatprep.subr.mxu0 0.0
  %351 = vmatpush2.msra.mxu0 0.0
  %352 = vmatprep.subr.mxu0 0.0
  %353 = vmatpush2.msra.mxu0 0.0
  %354 = vmatprep.subr.mxu0 0.0
  %355 = vmatpush2.msra.mxu0 0.0
  %356 = vmatprep.subr.mxu0 0.0
  %357 = vmatpush2.msra.mxu0 0.0
  %358 = vmatprep.subr.mxu0 0.0
  %359 = vmatpush2.msra.mxu0 0.0
  %360 = vmatprep.subr.mxu0 0.0
  %361 = vmatpush2.msra.mxu0 0.0
  %362 = vmatprep.subr.mxu0 0.0
  %363 = vmatpush2.msra.mxu0 0.0
  %364 = vmatprep.subr.mxu0 0.0
  %365 = vmatpush2.msra.mxu0 0.0
  %366 = vmatprep.subr.mxu0 0.0
  %367 = vmatpush2.msra.mxu0 0.0
  %368 = vmatprep.subr.mxu0 0.0
  %369 = vmatpush2.msra.mxu0 0.0
  %370 = vmatprep.subr.mxu0 0.0
  %371 = vmatpush2.msra.mxu0 0.0
  %372 = vmatprep.mubr.f32.mxu0 0.0
  %373 = vmatmul.mubr.f32.gmra.mxu0 %v217
  %v374 = vpop.f32.mrf.mxu0
  %v375 = vadd.f32 0.0, %v374
  %v376 = vpop.f32.mrf.mxu0
  %377 = vdwg.mxu0
  %378 = vmatprep.subr.mxu0 0.0
  %379 = vmatpush1.msra.mxu0 %v150
  %380 = vmatprep.subr.mxu0 0.0
  %381 = vmatpush1.msra.mxu0 %v149
  %382 = vmatprep.subr.mxu0 0.0
  %383 = vmatpush1.msra.mxu0 %v148
  %384 = vmatprep.subr.mxu0 0.0
  %385 = vmatpush1.msra.mxu0 %v147
  %386 = vmatprep.subr.mxu0 0.0
  %387 = vmatpush1.msra.mxu0 %v146
  %388 = vmatprep.subr.mxu0 0.0
  %389 = vmatpush1.msra.mxu0 %v145
  %390 = vmatprep.subr.mxu0 0.0
  %391 = vmatpush1.msra.mxu0 %v144
  %392 = vmatprep.subr.mxu0 0.0
  %393 = vmatpush1.msra.mxu0 %v143
  %394 = vmatprep.subr.mxu0 0.0
  %395 = vmatpush1.msra.mxu0 %v142
  %396 = vmatprep.subr.mxu0 0.0
  %397 = vmatpush1.msra.mxu0 %v141
  %398 = vmatprep.subr.mxu0 0.0
  %399 = vmatpush1.msra.mxu0 %v140
  %400 = vmatprep.subr.mxu0 0.0
  %401 = vmatpush1.msra.mxu0 %v139
  %402 = vmatprep.subr.mxu0 0.0
  %403 = vmatpush1.msra.mxu0 %v138
  %404 = vmatprep.subr.mxu0 0.0
  %405 = vmatpush1.msra.mxu0 %v137
  %406 = vmatprep.subr.mxu0 0.0
  %407 = vmatpush1.msra.mxu0 %v136
  %408 = vmatprep.subr.mxu0 0.0
  %409 = vmatpush1.msra.mxu0 %v135
  %410 = vmatprep.subr.mxu0 0.0
  %411 = vmatpush2.msra.mxu0 0.0
  %412 = vmatprep.subr.mxu0 0.0
  %413 = vmatpush2.msra.mxu0 0.0
  %414 = vmatprep.subr.mxu0 0.0
  %415 = vmatpush2.msra.mxu0 0.0
  %416 = vmatprep.subr.mxu0 0.0
  %417 = vmatpush2.msra.mxu0 0.0
  %418 = vmatprep.subr.mxu0 0.0
  %419 = vmatpush2.msra.mxu0 0.0
  %420 = vmatprep.subr.mxu0 0.0
  %421 = vmatpush2.msra.mxu0 0.0
  %422 = vmatprep.subr.mxu0 0.0
  %423 = vmatpush2.msra.mxu0 0.0
  %424 = vmatprep.subr.mxu0 0.0
  %425 = vmatpush2.msra.mxu0 0.0
  %426 = vmatprep.subr.mxu0 0.0
  %427 = vmatpush2.msra.mxu0 0.0
  %428 = vmatprep.subr.mxu0 0.0
  %429 = vmatpush2.msra.mxu0 0.0
  %430 = vmatprep.subr.mxu0 0.0
  %431 = vmatpush2.msra.mxu0 0.0
  %432 = vmatprep.subr.mxu0 0.0
  %433 = vmatpush2.msra.mxu0 0.0
  %434 = vmatprep.subr.mxu0 0.0
  %435 = vmatpush2.msra.mxu0 0.0
  %436 = vmatprep.subr.mxu0 0.0
  %437 = vmatpush2.msra.mxu0 0.0
  %438 = vmatprep.subr.mxu0 0.0
  %439 = vmatpush2.msra.mxu0 0.0
  %440 = vmatprep.subr.mxu0 0.0
  %441 = vmatpush2.msra.mxu0 0.0
  %442 = vmatprep.mubr.f32.mxu0 0.0
  %443 = vmatmul.mubr.f32.gmra.mxu0 %v307
  %v444 = vpop.f32.mrf.mxu0
  %v445 = vadd.f32 %v375, %v444
  %v446 = vpop.f32.mrf.mxu0
  %447 = vdwg.mxu0
  %v448 = vadd.f32 %v445, %v204
  %v449 = vmul.f32 %v93, %v218
  %v450 = vmul.f32 %v98, %v217
  %v451 = vadd.f32 %v449, %v450
  %v452 = vmul.f32 %v451, 1.8
  %v453 = vadd.f32 %v452, 0.01
  %v454 = vmul.f32 %v216, %v83
  %v455 = vmul.f32 %v88, %v448
  %v456 = vadd.f32 %v454, %v455
  %v457 = vmul.f32 %v453, %v217
  %v458 = vsub.f32 %v456, %v457
  %v459 = vsub.f32 %v458, %v453
  %vm460 = vcmp.gt.f32.partialorder %v459, 0.0
  %v461 = vsel %vm460, 1, 0
  %v462 = vcvt.s32.f32 %v461
  %463 = vmatprep.subr.mxu0 0.0
  %464 = vmatpush1.msra.mxu0 %v198
  %465 = vmatprep.subr.mxu0 0.0
  %466 = vmatpush1.msra.mxu0 %v197
  %467 = vmatprep.subr.mxu0 0.0
  %468 = vmatpush1.msra.mxu0 %v196
  %469 = vmatprep.subr.mxu0 0.0
  %470 = vmatpush1.msra.mxu0 %v195
  %471 = vmatprep.subr.mxu0 0.0
  %472 = vmatpush1.msra.mxu0 %v194
  %473 = vmatprep.subr.mxu0 0.0
  %474 = vmatpush1.msra.mxu0 %v193
  %475 = vmatprep.subr.mxu0 0.0
  %476 = vmatpush1.msra.mxu0 %v192
  %477 = vmatprep.subr.mxu0 0.0
  %478 = vmatpush1.msra.mxu0 %v191
  %479 = vmatprep.subr.mxu0 0.0
  %480 = vmatpush1.msra.mxu0 %v190
  %481 = vmatprep.subr.mxu0 0.0
  %482 = vmatpush1.msra.mxu0 %v189
  %483 = vmatprep.subr.mxu0 0.0
  %484 = vmatpush1.msra.mxu0 %v188
  %485 = vmatprep.subr.mxu0 0.0
  %486 = vmatpush1.msra.mxu0 %v187
  %487 = vmatprep.subr.mxu0 0.0
  %488 = vmatpush1.msra.mxu0 %v186
  %489 = vmatprep.subr.mxu0 0.0
  %490 = vmatpush1.msra.mxu0 %v185
  %491 = vmatprep.subr.mxu0 0.0
  %492 = vmatpush1.msra.mxu0 %v184
  %493 = vmatprep.subr.mxu0 0.0
  %494 = vmatpush1.msra.mxu0 %v183
  %495 = vmatprep.subr.mxu0 0.0
  %496 = vmatpush2.msra.mxu0 0.0
  %497 = vmatprep.subr.mxu0 0.0
  %498 = vmatpush2.msra.mxu0 0.0
  %499 = vmatprep.subr.mxu0 0.0
  %500 = vmatpush2.msra.mxu0 0.0
  %501 = vmatprep.subr.mxu0 0.0
  %502 = vmatpush2.msra.mxu0 0.0
  %503 = vmatprep.subr.mxu0 0.0
  %504 = vmatpush2.msra.mxu0 0.0
  %505 = vmatprep.subr.mxu0 0.0
  %506 = vmatpush2.msra.mxu0 0.0
  %507 = vmatprep.subr.mxu0 0.0
  %508 = vmatpush2.msra.mxu0 0.0
  %509 = vmatprep.subr.mxu0 0.0
  %510 = vmatpush2.msra.mxu0 0.0
  %511 = vmatprep.subr.mxu0 0.0
  %512 = vmatpush2.msra.mxu0 0.0
  %513 = vmatprep.subr.mxu0 0.0
  %514 = vmatpush2.msra.mxu0 0.0
  %515 = vmatprep.subr.mxu0 0.0
  %516 = vmatpush2.msra.mxu0 0.0
  %517 = vmatprep.subr.mxu0 0.0
  %518 = vmatpush2.msra.mxu0 0.0
  %519 = vmatprep.subr.mxu0 0.0
  %520 = vmatpush2.msra.mxu0 0.0
  %521 = vmatprep.subr.mxu0 0.0
  %522 = vmatpush2.msra.mxu0 0.0
  %523 = vmatprep.subr.mxu0 0.0
  %524 = vmatpush2.msra.mxu0 0.0
  %525 = vmatprep.subr.mxu0 0.0
  %526 = vmatpush2.msra.mxu0 0.0
  %527 = vmatprep.mubr.f32.mxu0 0.0
  %528 = vmatmul.mubr.f32.gmra.mxu0 %v220
  %v529 = vpop.f32.mrf.mxu0
  %v530 = vadd.f32 0.0, %v529
  %v531 = vpop.f32.mrf.mxu0
  %532 = vdwg.mxu0
  %533 = vmatprep.subr.mxu0 0.0
  %534 = vmatpush1.msra.mxu0 %v182
  %535 = vmatprep.subr.mxu0 0.0
  %536 = vmatpush1.msra.mxu0 %v181
  %537 = vmatprep.subr.mxu0 0.0
  %538 = vmatpush1.msra.mxu0 %v180
  %539 = vmatprep.subr.mxu0 0.0
  %540 = vmatpush1.msra.mxu0 %v179
  %541 = vmatprep.subr.mxu0 0.0
  %542 = vmatpush1.msra.mxu0 %v178
  %543 = vmatprep.subr.mxu0 0.0
  %544 = vmatpush1.msra.mxu0 %v177
  %545 = vmatprep.subr.mxu0 0.0
  %546 = vmatpush1.msra.mxu0 %v176
  %547 = vmatprep.subr.mxu0 0.0
  %548 = vmatpush1.msra.mxu0 %v175
  %549 = vmatprep.subr.mxu0 0.0
  %550 = vmatpush1.msra.mxu0 %v174
  %551 = vmatprep.subr.mxu0 0.0
  %552 = vmatpush1.msra.mxu0 %v173
  %553 = vmatprep.subr.mxu0 0.0
  %554 = vmatpush1.msra.mxu0 %v172
  %555 = vmatprep.subr.mxu0 0.0
  %556 = vmatpush1.msra.mxu0 %v171
  %557 = vmatprep.subr.mxu0 0.0
  %558 = vmatpush1.msra.mxu0 %v170
  %559 = vmatprep.subr.mxu0 0.0
  %560 = vmatpush1.msra.mxu0 %v169
  %561 = vmatprep.subr.mxu0 0.0
  %562 = vmatpush1.msra.mxu0 %v168
  %563 = vmatprep.subr.mxu0 0.0
  %564 = vmatpush1.msra.mxu0 %v167
  %565 = vmatprep.subr.mxu0 0.0
  %566 = vmatpush2.msra.mxu0 0.0
  %567 = vmatprep.subr.mxu0 0.0
  %568 = vmatpush2.msra.mxu0 0.0
  %569 = vmatprep.subr.mxu0 0.0
  %570 = vmatpush2.msra.mxu0 0.0
  %571 = vmatprep.subr.mxu0 0.0
  %572 = vmatpush2.msra.mxu0 0.0
  %573 = vmatprep.subr.mxu0 0.0
  %574 = vmatpush2.msra.mxu0 0.0
  %575 = vmatprep.subr.mxu0 0.0
  %576 = vmatpush2.msra.mxu0 0.0
  %577 = vmatprep.subr.mxu0 0.0
  %578 = vmatpush2.msra.mxu0 0.0
  %579 = vmatprep.subr.mxu0 0.0
  %580 = vmatpush2.msra.mxu0 0.0
  %581 = vmatprep.subr.mxu0 0.0
  %582 = vmatpush2.msra.mxu0 0.0
  %583 = vmatprep.subr.mxu0 0.0
  %584 = vmatpush2.msra.mxu0 0.0
  %585 = vmatprep.subr.mxu0 0.0
  %586 = vmatpush2.msra.mxu0 0.0
  %587 = vmatprep.subr.mxu0 0.0
  %588 = vmatpush2.msra.mxu0 0.0
  %589 = vmatprep.subr.mxu0 0.0
  %590 = vmatpush2.msra.mxu0 0.0
  %591 = vmatprep.subr.mxu0 0.0
  %592 = vmatpush2.msra.mxu0 0.0
  %593 = vmatprep.subr.mxu0 0.0
  %594 = vmatpush2.msra.mxu0 0.0
  %595 = vmatprep.subr.mxu0 0.0
  %596 = vmatpush2.msra.mxu0 0.0
  %597 = vmatprep.mubr.f32.mxu0 0.0
  %598 = vmatmul.mubr.f32.gmra.mxu0 %v462
  %v599 = vpop.f32.mrf.mxu0
  %v600 = vadd.f32 %v530, %v599
  %v601 = vpop.f32.mrf.mxu0
  %602 = vdwg.mxu0
  %v603 = vadd.f32 %v600, %v211
  %v604 = vmul.f32 %v113, %v221
  %v605 = vmul.f32 %v118, %v220
  %v606 = vadd.f32 %v604, %v605
  %v607 = vmul.f32 %v606, 1.8
  %v608 = vadd.f32 %v607, 0.01
  %v609 = vmul.f32 %v219, %v103
  %v610 = vmul.f32 %v108, %v603
  %v611 = vadd.f32 %v609, %v610
  %v612 = vmul.f32 %v608, %v220
  %v613 = vsub.f32 %v611, %v612
  %v614 = vsub.f32 %v613, %v608
  %vm615 = vcmp.gt.f32.partialorder %v614, 0.0
  %v616 = vsel %vm615, 1, 0
  %v617 = vcvt.s32.f32 %v616
  %618 = vst [vmem:[%s11] sm:$0xff] %v613
  %619 = vst [vmem:[%s11 + $0x8] sm:$0xff] %v617
  %s620 = scalar_lea.vmem %s0, 8
  %v621 = vld [vmem:[%s620] sm:$0xff]
  %622 = vmatprep.subr.mxu0 0.0
  %623 = vmatpush1.msra.mxu0 %v134
  %624 = vmatprep.subr.mxu0 0.0
  %625 = vmatpush1.msra.mxu0 %v133
  %626 = vmatprep.subr.mxu0 0.0
  %627 = vmatpush1.msra.mxu0 %v132
  %628 = vmatprep.subr.mxu0 0.0
  %629 = vmatpush1.msra.mxu0 %v131
  %630 = vmatprep.subr.mxu0 0.0
  %631 = vmatpush1.msra.mxu0 %v130
  %632 = vmatprep.subr.mxu0 0.0
  %633 = vmatpush1.msra.mxu0 %v129
  %634 = vmatprep.subr.mxu0 0.0
  %635 = vmatpush1.msra.mxu0 %v128
  %636 = vmatprep.subr.mxu0 0.0
  %637 = vmatpush1.msra.mxu0 %v127
  %638 = vmatprep.subr.mxu0 0.0
  %639 = vmatpush1.msra.mxu0 %v126
  %640 = vmatprep.subr.mxu0 0.0
  %641 = vmatpush1.msra.mxu0 %v125
  %642 = vmatprep.subr.mxu0 0.0
  %643 = vmatpush1.msra.mxu0 %v124
  %644 = vmatprep.subr.mxu0 0.0
  %645 = vmatpush1.msra.mxu0 %v123
  %646 = vmatprep.subr.mxu0 0.0
  %647 = vmatpush1.msra.mxu0 %v122
  %648 = vmatprep.subr.mxu0 0.0
  %649 = vmatpush1.msra.mxu0 %v121
  %650 = vmatprep.subr.mxu0 0.0
  %651 = vmatpush1.msra.mxu0 %v120
  %652 = vmatprep.subr.mxu0 0.0
  %653 = vmatpush1.msra.mxu0 %v119
  %654 = vmatprep.subr.mxu0 0.0
  %655 = vmatpush2.msra.mxu0 0.0
  %656 = vmatprep.subr.mxu0 0.0
  %657 = vmatpush2.msra.mxu0 0.0
  %658 = vmatprep.subr.mxu0 0.0
  %659 = vmatpush2.msra.mxu0 0.0
  %660 = vmatprep.subr.mxu0 0.0
  %661 = vmatpush2.msra.mxu0 0.0
  %662 = vmatprep.subr.mxu0 0.0
  %663 = vmatpush2.msra.mxu0 0.0
  %664 = vmatprep.subr.mxu0 0.0
  %665 = vmatpush2.msra.mxu0 0.0
  %666 = vmatprep.subr.mxu0 0.0
  %667 = vmatpush2.msra.mxu0 0.0
  %668 = vmatprep.subr.mxu0 0.0
  %669 = vmatpush2.msra.mxu0 0.0
  %670 = vmatprep.subr.mxu0 0.0
  %671 = vmatpush2.msra.mxu0 0.0
  %672 = vmatprep.subr.mxu0 0.0
  %673 = vmatpush2.msra.mxu0 0.0
  %674 = vmatprep.subr.mxu0 0.0
  %675 = vmatpush2.msra.mxu0 0.0
  %676 = vmatprep.subr.mxu0 0.0
  %677 = vmatpush2.msra.mxu0 0.0
  %678 = vmatprep.subr.mxu0 0.0
  %679 = vmatpush2.msra.mxu0 0.0
  %680 = vmatprep.subr.mxu0 0.0
  %681 = vmatpush2.msra.mxu0 0.0
  %682 = vmatprep.subr.mxu0 0.0
  %683 = vmatpush2.msra.mxu0 0.0
  %684 = vmatprep.subr.mxu0 0.0
  %685 = vmatpush2.msra.mxu0 0.0
  %686 = vmatprep.mubr.f32.mxu0 0.0
  %687 = vmatmul.mubr.f32.gmra.mxu0 %v307
  %v688 = vpop.f32.mrf.mxu0
  %v689 = vadd.f32 0.0, %v688
  %v690 = vpop.f32.mrf.mxu0
  %691 = vdwg.mxu0
  %v692 = vadd.f32 %v621, %v689
  %v693 = vmul.f32 %v73, %v296
  %v694 = vmul.f32 %v78, %v307
  %v695 = vadd.f32 %v693, %v694
  %v696 = vmul.f32 %v695, 1.8
  %v697 = vadd.f32 %v696, 0.01
  %v698 = vmul.f32 %v303, %v63
  %v699 = vmul.f32 %v68, %v692
  %v700 = vadd.f32 %v698, %v699
  %v701 = vmul.f32 %v697, %v307
  %v702 = vsub.f32 %v700, %v701
  %v703 = vsub.f32 %v702, %v697
  %vm704 = vcmp.gt.f32.partialorder %v703, 0.0
  %v705 = vsel %vm704, 1, 0
  %v706 = vcvt.s32.f32 %v705
  %707 = vmatprep.subr.mxu0 0.0
  %708 = vmatpush1.msra.mxu0 %v166
  %709 = vmatprep.subr.mxu0 0.0
  %710 = vmatpush1.msra.mxu0 %v165
  %711 = vmatprep.subr.mxu0 0.0
  %712 = vmatpush1.msra.mxu0 %v164
  %713 = vmatprep.subr.mxu0 0.0
  %714 = vmatpush1.msra.mxu0 %v163
  %715 = vmatprep.subr.mxu0 0.0
  %716 = vmatpush1.msra.mxu0 %v162
  %717 = vmatprep.subr.mxu0 0.0
  %718 = vmatpush1.msra.mxu0 %v161
  %719 = vmatprep.subr.mxu0 0.0
  %720 = vmatpush1.msra.mxu0 %v160
  %721 = vmatprep.subr.mxu0 0.0
  %722 = vmatpush1.msra.mxu0 %v159
  %723 = vmatprep.subr.mxu0 0.0
  %724 = vmatpush1.msra.mxu0 %v158
  %725 = vmatprep.subr.mxu0 0.0
  %726 = vmatpush1.msra.mxu0 %v157
  %727 = vmatprep.subr.mxu0 0.0
  %728 = vmatpush1.msra.mxu0 %v156
  %729 = vmatprep.subr.mxu0 0.0
  %730 = vmatpush1.msra.mxu0 %v155
  %731 = vmatprep.subr.mxu0 0.0
  %732 = vmatpush1.msra.mxu0 %v154
  %733 = vmatprep.subr.mxu0 0.0
  %734 = vmatpush1.msra.mxu0 %v153
  %735 = vmatprep.subr.mxu0 0.0
  %736 = vmatpush1.msra.mxu0 %v152
  %737 = vmatprep.subr.mxu0 0.0
  %738 = vmatpush1.msra.mxu0 %v151
  %739 = vmatprep.subr.mxu0 0.0
  %740 = vmatpush2.msra.mxu0 0.0
  %741 = vmatprep.subr.mxu0 0.0
  %742 = vmatpush2.msra.mxu0 0.0
  %743 = vmatprep.subr.mxu0 0.0
  %744 = vmatpush2.msra.mxu0 0.0
  %745 = vmatprep.subr.mxu0 0.0
  %746 = vmatpush2.msra.mxu0 0.0
  %747 = vmatprep.subr.mxu0 0.0
  %748 = vmatpush2.msra.mxu0 0.0
  %749 = vmatprep.subr.mxu0 0.0
  %750 = vmatpush2.msra.mxu0 0.0
  %751 = vmatprep.subr.mxu0 0.0
  %752 = vmatpush2.msra.mxu0 0.0
  %753 = vmatprep.subr.mxu0 0.0
  %754 = vmatpush2.msra.mxu0 0.0
  %755 = vmatprep.subr.mxu0 0.0
  %756 = vmatpush2.msra.mxu0 0.0
  %757 = vmatprep.subr.mxu0 0.0
  %758 = vmatpush2.msra.mxu0 0.0
  %759 = vmatprep.subr.mxu0 0.0
  %760 = vmatpush2.msra.mxu0 0.0
  %761 = vmatprep.subr.mxu0 0.0
  %762 = vmatpush2.msra.mxu0 0.0
  %763 = vmatprep.subr.mxu0 0.0
  %764 = vmatpush2.msra.mxu0 0.0
  %765 = vmatprep.subr.mxu0 0.0
  %766 = vmatpush2.msra.mxu0 0.0
  %767 = vmatprep.subr.mxu0 0.0
  %768 = vmatpush2.msra.mxu0 0.0
  %769 = vmatprep.subr.mxu0 0.0
  %770 = vmatpush2.msra.mxu0 0.0
  %771 = vmatprep.mubr.f32.mxu0 0.0
  %772 = vmatmul.mubr.f32.gmra.mxu0 %v462
  %v773 = vpop.f32.mrf.mxu0
  %v774 = vadd.f32 0.0, %v773
  %v775 = vpop.f32.mrf.mxu0
  %776 = vdwg.mxu0
  %777 = vmatprep.subr.mxu0 0.0
  %778 = vmatpush1.msra.mxu0 %v150
  %779 = vmatprep.subr.mxu0 0.0
  %780 = vmatpush1.msra.mxu0 %v149
  %781 = vmatprep.subr.mxu0 0.0
  %782 = vmatpush1.msra.mxu0 %v148
  %783 = vmatprep.subr.mxu0 0.0
  %784 = vmatpush1.msra.mxu0 %v147
  %785 = vmatprep.subr.mxu0 0.0
  %786 = vmatpush1.msra.mxu0 %v146
  %787 = vmatprep.subr.mxu0 0.0
  %788 = vmatpush1.msra.mxu0 %v145
  %789 = vmatprep.subr.mxu0 0.0
  %790 = vmatpush1.msra.mxu0 %v144
  %791 = vmatprep.subr.mxu0 0.0
  %792 = vmatpush1.msra.mxu0 %v143
  %793 = vmatprep.subr.mxu0 0.0
  %794 = vmatpush1.msra.mxu0 %v142
  %795 = vmatprep.subr.mxu0 0.0
  %796 = vmatpush1.msra.mxu0 %v141
  %797 = vmatprep.subr.mxu0 0.0
  %798 = vmatpush1.msra.mxu0 %v140
  %799 = vmatprep.subr.mxu0 0.0
  %800 = vmatpush1.msra.mxu0 %v139
  %801 = vmatprep.subr.mxu0 0.0
  %802 = vmatpush1.msra.mxu0 %v138
  %803 = vmatprep.subr.mxu0 0.0
  %804 = vmatpush1.msra.mxu0 %v137
  %805 = vmatprep.subr.mxu0 0.0
  %806 = vmatpush1.msra.mxu0 %v136
  %807 = vmatprep.subr.mxu0 0.0
  %808 = vmatpush1.msra.mxu0 %v135
  %809 = vmatprep.subr.mxu0 0.0
  %810 = vmatpush2.msra.mxu0 0.0
  %811 = vmatprep.subr.mxu0 0.0
  %812 = vmatpush2.msra.mxu0 0.0
  %813 = vmatprep.subr.mxu0 0.0
  %814 = vmatpush2.msra.mxu0 0.0
  %815 = vmatprep.subr.mxu0 0.0
  %816 = vmatpush2.msra.mxu0 0.0
  %817 = vmatprep.subr.mxu0 0.0
  %818 = vmatpush2.msra.mxu0 0.0
  %819 = vmatprep.subr.mxu0 0.0
  %820 = vmatpush2.msra.mxu0 0.0
  %821 = vmatprep.subr.mxu0 0.0
  %822 = vmatpush2.msra.mxu0 0.0
  %823 = vmatprep.subr.mxu0 0.0
  %824 = vmatpush2.msra.mxu0 0.0
  %825 = vmatprep.subr.mxu0 0.0
  %826 = vmatpush2.msra.mxu0 0.0
  %827 = vmatprep.subr.mxu0 0.0
  %828 = vmatpush2.msra.mxu0 0.0
  %829 = vmatprep.subr.mxu0 0.0
  %830 = vmatpush2.msra.mxu0 0.0
  %831 = vmatprep.subr.mxu0 0.0
  %832 = vmatpush2.msra.mxu0 0.0
  %833 = vmatprep.subr.mxu0 0.0
  %834 = vmatpush2.msra.mxu0 0.0
  %835 = vmatprep.subr.mxu0 0.0
  %836 = vmatpush2.msra.mxu0 0.0
  %837 = vmatprep.subr.mxu0 0.0
  %838 = vmatpush2.msra.mxu0 0.0
  %839 = vmatprep.subr.mxu0 0.0
  %840 = vmatpush2.msra.mxu0 0.0
  %841 = vmatprep.mubr.f32.mxu0 0.0
  %842 = vmatmul.mubr.f32.gmra.mxu0 %v706
  %v843 = vpop.f32.mrf.mxu0
  %v844 = vadd.f32 %v774, %v843
  %v845 = vpop.f32.mrf.mxu0
  %846 = vdwg.mxu0
  %v847 = vadd.f32 %v844, %v204
  %v848 = vmul.f32 %v93, %v451
  %v849 = vmul.f32 %v98, %v462
  %v850 = vadd.f32 %v848, %v849
  %v851 = vmul.f32 %v850, 1.8
  %v852 = vadd.f32 %v851, 0.01
  %v853 = vmul.f32 %v458, %v83
  %v854 = vmul.f32 %v88, %v847
  %v855 = vadd.f32 %v853, %v854
  %v856 = vmul.f32 %v852, %v462
  %v857 = vsub.f32 %v855, %v856
  %v858 = vsub.f32 %v857, %v852
  %vm859 = vcmp.gt.f32.partialorder %v858, 0.0
  %v860 = vsel %vm859, 1, 0
  %v861 = vcvt.s32.f32 %v860
  %862 = vmatprep.subr.mxu0 0.0
  %863 = vmatpush1.msra.mxu0 %v198
  %864 = vmatprep.subr.mxu0 0.0
  %865 = vmatpush1.msra.mxu0 %v197
  %866 = vmatprep.subr.mxu0 0.0
  %867 = vmatpush1.msra.mxu0 %v196
  %868 = vmatprep.subr.mxu0 0.0
  %869 = vmatpush1.msra.mxu0 %v195
  %870 = vmatprep.subr.mxu0 0.0
  %871 = vmatpush1.msra.mxu0 %v194
  %872 = vmatprep.subr.mxu0 0.0
  %873 = vmatpush1.msra.mxu0 %v193
  %874 = vmatprep.subr.mxu0 0.0
  %875 = vmatpush1.msra.mxu0 %v192
  %876 = vmatprep.subr.mxu0 0.0
  %877 = vmatpush1.msra.mxu0 %v191
  %878 = vmatprep.subr.mxu0 0.0
  %879 = vmatpush1.msra.mxu0 %v190
  %880 = vmatprep.subr.mxu0 0.0
  %881 = vmatpush1.msra.mxu0 %v189
  %882 = vmatprep.subr.mxu0 0.0
  %883 = vmatpush1.msra.mxu0 %v188
  %884 = vmatprep.subr.mxu0 0.0
  %885 = vmatpush1.msra.mxu0 %v187
  %886 = vmatprep.subr.mxu0 0.0
  %887 = vmatpush1.msra.mxu0 %v186
  %888 = vmatprep.subr.mxu0 0.0
  %889 = vmatpush1.msra.mxu0 %v185
  %890 = vmatprep.subr.mxu0 0.0
  %891 = vmatpush1.msra.mxu0 %v184
  %892 = vmatprep.subr.mxu0 0.0
  %893 = vmatpush1.msra.mxu0 %v183
  %894 = vmatprep.subr.mxu0 0.0
  %895 = vmatpush2.msra.mxu0 0.0
  %896 = vmatprep.subr.mxu0 0.0
  %897 = vmatpush2.msra.mxu0 0.0
  %898 = vmatprep.subr.mxu0 0.0
  %899 = vmatpush2.msra.mxu0 0.0
  %900 = vmatprep.subr.mxu0 0.0
  %901 = vmatpush2.msra.mxu0 0.0
  %902 = vmatprep.subr.mxu0 0.0
  %903 = vmatpush2.msra.mxu0 0.0
  %904 = vmatprep.subr.mxu0 0.0
  %905 = vmatpush2.msra.mxu0 0.0
  %906 = vmatprep.subr.mxu0 0.0
  %907 = vmatpush2.msra.mxu0 0.0
  %908 = vmatprep.subr.mxu0 0.0
  %909 = vmatpush2.msra.mxu0 0.0
  %910 = vmatprep.subr.mxu0 0.0
  %911 = vmatpush2.msra.mxu0 0.0
  %912 = vmatprep.subr.mxu0 0.0
  %913 = vmatpush2.msra.mxu0 0.0
  %914 = vmatprep.subr.mxu0 0.0
  %915 = vmatpush2.msra.mxu0 0.0
  %916 = vmatprep.subr.mxu0 0.0
  %917 = vmatpush2.msra.mxu0 0.0
  %918 = vmatprep.subr.mxu0 0.0
  %919 = vmatpush2.msra.mxu0 0.0
  %920 = vmatprep.subr.mxu0 0.0
  %921 = vmatpush2.msra.mxu0 0.0
  %922 = vmatprep.subr.mxu0 0.0
  %923 = vmatpush2.msra.mxu0 0.0
  %924 = vmatprep.subr.mxu0 0.0
  %925 = vmatpush2.msra.mxu0 0.0
  %926 = vmatprep.mubr.f32.mxu0 0.0
  %927 = vmatmul.mubr.f32.gmra.mxu0 %v617
  %v928 = vpop.f32.mrf.mxu0
  %v929 = vadd.f32 0.0, %v928
  %v930 = vpop.f32.mrf.mxu0
  %931 = vdwg.mxu0
  %932 = vmatprep.subr.mxu0 0.0
  %933 = vmatpush1.msra.mxu0 %v182
  %934 = vmatprep.subr.mxu0 0.0
  %935 = vmatpush1.msra.mxu0 %v181
  %936 = vmatprep.subr.mxu0 0.0
  %937 = vmatpush1.msra.mxu0 %v180
  %938 = vmatprep.subr.mxu0 0.0
  %939 = vmatpush1.msra.mxu0 %v179
  %940 = vmatprep.subr.mxu0 0.0
  %941 = vmatpush1.msra.mxu0 %v178
  %942 = vmatprep.subr.mxu0 0.0
  %943 = vmatpush1.msra.mxu0 %v177
  %944 = vmatprep.subr.mxu0 0.0
  %945 = vmatpush1.msra.mxu0 %v176
  %946 = vmatprep.subr.mxu0 0.0
  %947 = vmatpush1.msra.mxu0 %v175
  %948 = vmatprep.subr.mxu0 0.0
  %949 = vmatpush1.msra.mxu0 %v174
  %950 = vmatprep.subr.mxu0 0.0
  %951 = vmatpush1.msra.mxu0 %v173
  %952 = vmatprep.subr.mxu0 0.0
  %953 = vmatpush1.msra.mxu0 %v172
  %954 = vmatprep.subr.mxu0 0.0
  %955 = vmatpush1.msra.mxu0 %v171
  %956 = vmatprep.subr.mxu0 0.0
  %957 = vmatpush1.msra.mxu0 %v170
  %958 = vmatprep.subr.mxu0 0.0
  %959 = vmatpush1.msra.mxu0 %v169
  %960 = vmatprep.subr.mxu0 0.0
  %961 = vmatpush1.msra.mxu0 %v168
  %962 = vmatprep.subr.mxu0 0.0
  %963 = vmatpush1.msra.mxu0 %v167
  %964 = vmatprep.subr.mxu0 0.0
  %965 = vmatpush2.msra.mxu0 0.0
  %966 = vmatprep.subr.mxu0 0.0
  %967 = vmatpush2.msra.mxu0 0.0
  %968 = vmatprep.subr.mxu0 0.0
  %969 = vmatpush2.msra.mxu0 0.0
  %970 = vmatprep.subr.mxu0 0.0
  %971 = vmatpush2.msra.mxu0 0.0
  %972 = vmatprep.subr.mxu0 0.0
  %973 = vmatpush2.msra.mxu0 0.0
  %974 = vmatprep.subr.mxu0 0.0
  %975 = vmatpush2.msra.mxu0 0.0
  %976 = vmatprep.subr.mxu0 0.0
  %977 = vmatpush2.msra.mxu0 0.0
  %978 = vmatprep.subr.mxu0 0.0
  %979 = vmatpush2.msra.mxu0 0.0
  %980 = vmatprep.subr.mxu0 0.0
  %981 = vmatpush2.msra.mxu0 0.0
  %982 = vmatprep.subr.mxu0 0.0
  %983 = vmatpush2.msra.mxu0 0.0
  %984 = vmatprep.subr.mxu0 0.0
  %985 = vmatpush2.msra.mxu0 0.0
  %986 = vmatprep.subr.mxu0 0.0
  %987 = vmatpush2.msra.mxu0 0.0
  %988 = vmatprep.subr.mxu0 0.0
  %989 = vmatpush2.msra.mxu0 0.0
  %990 = vmatprep.subr.mxu0 0.0
  %991 = vmatpush2.msra.mxu0 0.0
  %992 = vmatprep.subr.mxu0 0.0
  %993 = vmatpush2.msra.mxu0 0.0
  %994 = vmatprep.subr.mxu0 0.0
  %995 = vmatpush2.msra.mxu0 0.0
  %996 = vmatprep.mubr.f32.mxu0 0.0
  %997 = vmatmul.mubr.f32.gmra.mxu0 %v861
  %v998 = vpop.f32.mrf.mxu0
  %v999 = vadd.f32 %v929, %v998
  %v1000 = vpop.f32.mrf.mxu0
  %1001 = vdwg.mxu0
  %v1002 = vadd.f32 %v999, %v211
  %v1003 = vmul.f32 %v113, %v606
  %v1004 = vmul.f32 %v118, %v617
  %v1005 = vadd.f32 %v1003, %v1004
  %v1006 = vmul.f32 %v1005, 1.8
  %v1007 = vadd.f32 %v1006, 0.01
  %v1008 = vmul.f32 %v613, %v103
  %v1009 = vmul.f32 %v108, %v1002
  %v1010 = vadd.f32 %v1008, %v1009
  %v1011 = vmul.f32 %v1007, %v617
  %v1012 = vsub.f32 %v1010, %v1011
  %v1013 = vsub.f32 %v1012, %v1007
  %vm1014 = vcmp.gt.f32.partialorder %v1013, 0.0
  %v1015 = vsel %vm1014, 1, 0
  %v1016 = vcvt.s32.f32 %v1015
  %s1017 = scalar_lea.vmem %s11, 16
  %1018 = vst [vmem:[%s1017] sm:$0xff] %v1012
  %1019 = vst [vmem:[%s1017 + $0x8] sm:$0xff] %v1016
  %s1020 = scalar_lea.vmem %s0, 16
  %v1021 = vld [vmem:[%s1020] sm:$0xff]
  %1022 = vmatprep.subr.mxu0 0.0
  %1023 = vmatpush1.msra.mxu0 %v134
  %1024 = vmatprep.subr.mxu0 0.0
  %1025 = vmatpush1.msra.mxu0 %v133
  %1026 = vmatprep.subr.mxu0 0.0
  %1027 = vmatpush1.msra.mxu0 %v132
  %1028 = vmatprep.subr.mxu0 0.0
  %1029 = vmatpush1.msra.mxu0 %v131
  %1030 = vmatprep.subr.mxu0 0.0
  %1031 = vmatpush1.msra.mxu0 %v130
  %1032 = vmatprep.subr.mxu0 0.0
  %1033 = vmatpush1.msra.mxu0 %v129
  %1034 = vmatprep.subr.mxu0 0.0
  %1035 = vmatpush1.msra.mxu0 %v128
  %1036 = vmatprep.subr.mxu0 0.0
  %1037 = vmatpush1.msra.mxu0 %v127
  %1038 = vmatprep.subr.mxu0 0.0
  %1039 = vmatpush1.msra.mxu0 %v126
  %1040 = vmatprep.subr.mxu0 0.0
  %1041 = vmatpush1.msra.mxu0 %v125
  %1042 = vmatprep.subr.mxu0 0.0
  %1043 = vmatpush1.msra.mxu0 %v124
  %1044 = vmatprep.subr.mxu0 0.0
  %1045 = vmatpush1.msra.mxu0 %v123
  %1046 = vmatprep.subr.mxu0 0.0
  %1047 = vmatpush1.msra.mxu0 %v122
  %1048 = vmatprep.subr.mxu0 0.0
  %1049 = vmatpush1.msra.mxu0 %v121
  %1050 = vmatprep.subr.mxu0 0.0
  %1051 = vmatpush1.msra.mxu0 %v120
  %1052 = vmatprep.subr.mxu0 0.0
  %1053 = vmatpush1.msra.mxu0 %v119
  %1054 = vmatprep.subr.mxu0 0.0
  %1055 = vmatpush2.msra.mxu0 0.0
  %1056 = vmatprep.subr.mxu0 0.0
  %1057 = vmatpush2.msra.mxu0 0.0
  %1058 = vmatprep.subr.mxu0 0.0
  %1059 = vmatpush2.msra.mxu0 0.0
  %1060 = vmatprep.subr.mxu0 0.0
  %1061 = vmatpush2.msra.mxu0 0.0
  %1062 = vmatprep.subr.mxu0 0.0
  %1063 = vmatpush2.msra.mxu0 0.0
  %1064 = vmatprep.subr.mxu0 0.0
  %1065 = vmatpush2.msra.mxu0 0.0
  %1066 = vmatprep.subr.mxu0 0.0
  %1067 = vmatpush2.msra.mxu0 0.0
  %1068 = vmatprep.subr.mxu0 0.0
  %1069 = vmatpush2.msra.mxu0 0.0
  %1070 = vmatprep.subr.mxu0 0.0
  %1071 = vmatpush2.msra.mxu0 0.0
  %1072 = vmatprep.subr.mxu0 0.0
  %1073 = vmatpush2.msra.mxu0 0.0
  %1074 = vmatprep.subr.mxu0 0.0
  %1075 = vmatpush2.msra.mxu0 0.0
  %1076 = vmatprep.subr.mxu0 0.0
  %1077 = vmatpush2.msra.mxu0 0.0
  %1078 = vmatprep.subr.mxu0 0.0
  %1079 = vmatpush2.msra.mxu0 0.0
  %1080 = vmatprep.subr.mxu0 0.0
  %1081 = vmatpush2.msra.mxu0 0.0
  %1082 = vmatprep.subr.mxu0 0.0
  %1083 = vmatpush2.msra.mxu0 0.0
  %1084 = vmatprep.subr.mxu0 0.0
  %1085 = vmatpush2.msra.mxu0 0.0
  %1086 = vmatprep.mubr.f32.mxu0 0.0
  %1087 = vmatmul.mubr.f32.gmra.mxu0 %v706
  %v1088 = vpop.f32.mrf.mxu0
  %v1089 = vadd.f32 0.0, %v1088
  %v1090 = vpop.f32.mrf.mxu0
  %1091 = vdwg.mxu0
  %v1092 = vadd.f32 %v1021, %v1089
  %v1093 = vmul.f32 %v73, %v695
  %v1094 = vmul.f32 %v78, %v706
  %v1095 = vadd.f32 %v1093, %v1094
  %v1096 = vmul.f32 %v1095, 1.8
  %v1097 = vadd.f32 %v1096, 0.01
  %v1098 = vmul.f32 %v702, %v63
  %v1099 = vmul.f32 %v68, %v1092
  %v1100 = vadd.f32 %v1098, %v1099
  %v1101 = vmul.f32 %v1097, %v706
  %v1102 = vsub.f32 %v1100, %v1101
  %v1103 = vsub.f32 %v1102, %v1097
  %vm1104 = vcmp.gt.f32.partialorder %v1103, 0.0
  %v1105 = vsel %vm1104, 1, 0
  %v1106 = vcvt.s32.f32 %v1105
  %1107 = vmatprep.subr.mxu0 0.0
  %1108 = vmatpush1.msra.mxu0 %v166
  %1109 = vmatprep.subr.mxu0 0.0
  %1110 = vmatpush1.msra.mxu0 %v165
  %1111 = vmatprep.subr.mxu0 0.0
  %1112 = vmatpush1.msra.mxu0 %v164
  %1113 = vmatprep.subr.mxu0 0.0
  %1114 = vmatpush1.msra.mxu0 %v163
  %1115 = vmatprep.subr.mxu0 0.0
  %1116 = vmatpush1.msra.mxu0 %v162
  %1117 = vmatprep.subr.mxu0 0.0
  %1118 = vmatpush1.msra.mxu0 %v161
  %1119 = vmatprep.subr.mxu0 0.0
  %1120 = vmatpush1.msra.mxu0 %v160
  %1121 = vmatprep.subr.mxu0 0.0
  %1122 = vmatpush1.msra.mxu0 %v159
  %1123 = vmatprep.subr.mxu0 0.0
  %1124 = vmatpush1.msra.mxu0 %v158
  %1125 = vmatprep.subr.mxu0 0.0
  %1126 = vmatpush1.msra.mxu0 %v157
  %1127 = vmatprep.subr.mxu0 0.0
  %1128 = vmatpush1.msra.mxu0 %v156
  %1129 = vmatprep.subr.mxu0 0.0
  %1130 = vmatpush1.msra.mxu0 %v155
  %1131 = vmatprep.subr.mxu0 0.0
  %1132 = vmatpush1.msra.mxu0 %v154
  %1133 = vmatprep.subr.mxu0 0.0
  %1134 = vmatpush1.msra.mxu0 %v153
  %1135 = vmatprep.subr.mxu0 0.0
  %1136 = vmatpush1.msra.mxu0 %v152
  %1137 = vmatprep.subr.mxu0 0.0
  %1138 = vmatpush1.msra.mxu0 %v151
  %1139 = vmatprep.subr.mxu0 0.0
  %1140 = vmatpush2.msra.mxu0 0.0
  %1141 = vmatprep.subr.mxu0 0.0
  %1142 = vmatpush2.msra.mxu0 0.0
  %1143 = vmatprep.subr.mxu0 0.0
  %1144 = vmatpush2.msra.mxu0 0.0
  %1145 = vmatprep.subr.mxu0 0.0
  %1146 = vmatpush2.msra.mxu0 0.0
  %1147 = vmatprep.subr.mxu0 0.0
  %1148 = vmatpush2.msra.mxu0 0.0
  %1149 = vmatprep.subr.mxu0 0.0
  %1150 = vmatpush2.msra.mxu0 0.0
  %1151 = vmatprep.subr.mxu0 0.0
  %1152 = vmatpush2.msra.mxu0 0.0
  %1153 = vmatprep.subr.mxu0 0.0
  %1154 = vmatpush2.msra.mxu0 0.0
  %1155 = vmatprep.subr.mxu0 0.0
  %1156 = vmatpush2.msra.mxu0 0.0
  %1157 = vmatprep.subr.mxu0 0.0
  %1158 = vmatpush2.msra.mxu0 0.0
  %1159 = vmatprep.subr.mxu0 0.0
  %1160 = vmatpush2.msra.mxu0 0.0
  %1161 = vmatprep.subr.mxu0 0.0
  %1162 = vmatpush2.msra.mxu0 0.0
  %1163 = vmatprep.subr.mxu0 0.0
  %1164 = vmatpush2.msra.mxu0 0.0
  %1165 = vmatprep.subr.mxu0 0.0
  %1166 = vmatpush2.msra.mxu0 0.0
  %1167 = vmatprep.subr.mxu0 0.0
  %1168 = vmatpush2.msra.mxu0 0.0
  %1169 = vmatprep.subr.mxu0 0.0
  %1170 = vmatpush2.msra.mxu0 0.0
  %1171 = vmatprep.mubr.f32.mxu0 0.0
  %1172 = vmatmul.mubr.f32.gmra.mxu0 %v861
  %v1173 = vpop.f32.mrf.mxu0
  %v1174 = vadd.f32 0.0, %v1173
  %v1175 = vpop.f32.mrf.mxu0
  %1176 = vdwg.mxu0
  %1177 = vmatprep.subr.mxu0 0.0
  %1178 = vmatpush1.msra.mxu0 %v150
  %1179 = vmatprep.subr.mxu0 0.0
  %1180 = vmatpush1.msra.mxu0 %v149
  %1181 = vmatprep.subr.mxu0 0.0
  %1182 = vmatpush1.msra.mxu0 %v148
  %1183 = vmatprep.subr.mxu0 0.0
  %1184 = vmatpush1.msra.mxu0 %v147
  %1185 = vmatprep.subr.mxu0 0.0
  %1186 = vmatpush1.msra.mxu0 %v146
  %1187 = vmatprep.subr.mxu0 0.0
  %1188 = vmatpush1.msra.mxu0 %v145
  %1189 = vmatprep.subr.mxu0 0.0
  %1190 = vmatpush1.msra.mxu0 %v144
  %1191 = vmatprep.subr.mxu0 0.0
  %1192 = vmatpush1.msra.mxu0 %v143
  %1193 = vmatprep.subr.mxu0 0.0
  %1194 = vmatpush1.msra.mxu0 %v142
  %1195 = vmatprep.subr.mxu0 0.0
  %1196 = vmatpush1.msra.mxu0 %v141
  %1197 = vmatprep.subr.mxu0 0.0
  %1198 = vmatpush1.msra.mxu0 %v140
  %1199 = vmatprep.subr.mxu0 0.0
  %1200 = vmatpush1.msra.mxu0 %v139
  %1201 = vmatprep.subr.mxu0 0.0
  %1202 = vmatpush1.msra.mxu0 %v138
  %1203 = vmatprep.subr.mxu0 0.0
  %1204 = vmatpush1.msra.mxu0 %v137
  %1205 = vmatprep.subr.mxu0 0.0
  %1206 = vmatpush1.msra.mxu0 %v136
  %1207 = vmatprep.subr.mxu0 0.0
  %1208 = vmatpush1.msra.mxu0 %v135
  %1209 = vmatprep.subr.mxu0 0.0
  %1210 = vmatpush2.msra.mxu0 0.0
  %1211 = vmatprep.subr.mxu0 0.0
  %1212 = vmatpush2.msra.mxu0 0.0
  %1213 = vmatprep.subr.mxu0 0.0
  %1214 = vmatpush2.msra.mxu0 0.0
  %1215 = vmatprep.subr.mxu0 0.0
  %1216 = vmatpush2.msra.mxu0 0.0
  %1217 = vmatprep.subr.mxu0 0.0
  %1218 = vmatpush2.msra.mxu0 0.0
  %1219 = vmatprep.subr.mxu0 0.0
  %1220 = vmatpush2.msra.mxu0 0.0
  %1221 = vmatprep.subr.mxu0 0.0
  %1222 = vmatpush2.msra.mxu0 0.0
  %1223 = vmatprep.subr.mxu0 0.0
  %1224 = vmatpush2.msra.mxu0 0.0
  %1225 = vmatprep.subr.mxu0 0.0
  %1226 = vmatpush2.msra.mxu0 0.0
  %1227 = vmatprep.subr.mxu0 0.0
  %1228 = vmatpush2.msra.mxu0 0.0
  %1229 = vmatprep.subr.mxu0 0.0
  %1230 = vmatpush2.msra.mxu0 0.0
  %1231 = vmatprep.subr.mxu0 0.0
  %1232 = vmatpush2.msra.mxu0 0.0
  %1233 = vmatprep.subr.mxu0 0.0
  %1234 = vmatpush2.msra.mxu0 0.0
  %1235 = vmatprep.subr.mxu0 0.0
  %1236 = vmatpush2.msra.mxu0 0.0
  %1237 = vmatprep.subr.mxu0 0.0
  %1238 = vmatpush2.msra.mxu0 0.0
  %1239 = vmatprep.subr.mxu0 0.0
  %1240 = vmatpush2.msra.mxu0 0.0
  %1241 = vmatprep.mubr.f32.mxu0 0.0
  %1242 = vmatmul.mubr.f32.gmra.mxu0 %v1106
  %v1243 = vpop.f32.mrf.mxu0
  %v1244 = vadd.f32 %v1174, %v1243
  %v1245 = vpop.f32.mrf.mxu0
  %1246 = vdwg.mxu0
  %v1247 = vadd.f32 %v1244, %v204
  %v1248 = vmul.f32 %v93, %v850
  %v1249 = vmul.f32 %v98, %v861
  %v1250 = vadd.f32 %v1248, %v1249
  %v1251 = vmul.f32 %v1250, 1.8
  %v1252 = vadd.f32 %v1251, 0.01
  %v1253 = vmul.f32 %v857, %v83
  %v1254 = vmul.f32 %v88, %v1247
  %v1255 = vadd.f32 %v1253, %v1254
  %v1256 = vmul.f32 %v1252, %v861
  %v1257 = vsub.f32 %v1255, %v1256
  %v1258 = vsub.f32 %v1257, %v1252
  %vm1259 = vcmp.gt.f32.partialorder %v1258, 0.0
  %v1260 = vsel %vm1259, 1, 0
  %v1261 = vcvt.s32.f32 %v1260
  %1262 = vmatprep.subr.mxu0 0.0
  %1263 = vmatpush1.msra.mxu0 %v198
  %1264 = vmatprep.subr.mxu0 0.0
  %1265 = vmatpush1.msra.mxu0 %v197
  %1266 = vmatprep.subr.mxu0 0.0
  %1267 = vmatpush1.msra.mxu0 %v196
  %1268 = vmatprep.subr.mxu0 0.0
  %1269 = vmatpush1.msra.mxu0 %v195
  %1270 = vmatprep.subr.mxu0 0.0
  %1271 = vmatpush1.msra.mxu0 %v194
  %1272 = vmatprep.subr.mxu0 0.0
  %1273 = vmatpush1.msra.mxu0 %v193
  %1274 = vmatprep.subr.mxu0 0.0
  %1275 = vmatpush1.msra.mxu0 %v192
  %1276 = vmatprep.subr.mxu0 0.0
  %1277 = vmatpush1.msra.mxu0 %v191
  %1278 = vmatprep.subr.mxu0 0.0
  %1279 = vmatpush1.msra.mxu0 %v190
  %1280 = vmatprep.subr.mxu0 0.0
  %1281 = vmatpush1.msra.mxu0 %v189
  %1282 = vmatprep.subr.mxu0 0.0
  %1283 = vmatpush1.msra.mxu0 %v188
  %1284 = vmatprep.subr.mxu0 0.0
  %1285 = vmatpush1.msra.mxu0 %v187
  %1286 = vmatprep.subr.mxu0 0.0
  %1287 = vmatpush1.msra.mxu0 %v186
  %1288 = vmatprep.subr.mxu0 0.0
  %1289 = vmatpush1.msra.mxu0 %v185
  %1290 = vmatprep.subr.mxu0 0.0
  %1291 = vmatpush1.msra.mxu0 %v184
  %1292 = vmatprep.subr.mxu0 0.0
  %1293 = vmatpush1.msra.mxu0 %v183
  %1294 = vmatprep.subr.mxu0 0.0
  %1295 = vmatpush2.msra.mxu0 0.0
  %1296 = vmatprep.subr.mxu0 0.0
  %1297 = vmatpush2.msra.mxu0 0.0
  %1298 = vmatprep.subr.mxu0 0.0
  %1299 = vmatpush2.msra.mxu0 0.0
  %1300 = vmatprep.subr.mxu0 0.0
  %1301 = vmatpush2.msra.mxu0 0.0
  %1302 = vmatprep.subr.mxu0 0.0
  %1303 = vmatpush2.msra.mxu0 0.0
  %1304 = vmatprep.subr.mxu0 0.0
  %1305 = vmatpush2.msra.mxu0 0.0
  %1306 = vmatprep.subr.mxu0 0.0
  %1307 = vmatpush2.msra.mxu0 0.0
  %1308 = vmatprep.subr.mxu0 0.0
  %1309 = vmatpush2.msra.mxu0 0.0
  %1310 = vmatprep.subr.mxu0 0.0
  %1311 = vmatpush2.msra.mxu0 0.0
  %1312 = vmatprep.subr.mxu0 0.0
  %1313 = vmatpush2.msra.mxu0 0.0
  %1314 = vmatprep.subr.mxu0 0.0
  %1315 = vmatpush2.msra.mxu0 0.0
  %1316 = vmatprep.subr.mxu0 0.0
  %1317 = vmatpush2.msra.mxu0 0.0
  %1318 = vmatprep.subr.mxu0 0.0
  %1319 = vmatpush2.msra.mxu0 0.0
  %1320 = vmatprep.subr.mxu0 0.0
  %1321 = vmatpush2.msra.mxu0 0.0
  %1322 = vmatprep.subr.mxu0 0.0
  %1323 = vmatpush2.msra.mxu0 0.0
  %1324 = vmatprep.subr.mxu0 0.0
  %1325 = vmatpush2.msra.mxu0 0.0
  %1326 = vmatprep.mubr.f32.mxu0 0.0
  %1327 = vmatmul.mubr.f32.gmra.mxu0 %v1016
  %v1328 = vpop.f32.mrf.mxu0
  %v1329 = vadd.f32 0.0, %v1328
  %v1330 = vpop.f32.mrf.mxu0
  %1331 = vdwg.mxu0
  %1332 = vmatprep.subr.mxu0 0.0
  %1333 = vmatpush1.msra.mxu0 %v182
  %1334 = vmatprep.subr.mxu0 0.0
  %1335 = vmatpush1.msra.mxu0 %v181
  %1336 = vmatprep.subr.mxu0 0.0
  %1337 = vmatpush1.msra.mxu0 %v180
  %1338 = vmatprep.subr.mxu0 0.0
  %1339 = vmatpush1.msra.mxu0 %v179
  %1340 = vmatprep.subr.mxu0 0.0
  %1341 = vmatpush1.msra.mxu0 %v178
  %1342 = vmatprep.subr.mxu0 0.0
  %1343 = vmatpush1.msra.mxu0 %v177
  %1344 = vmatprep.subr.mxu0 0.0
  %1345 = vmatpush1.msra.mxu0 %v176
  %1346 = vmatprep.subr.mxu0 0.0
  %1347 = vmatpush1.msra.mxu0 %v175
  %1348 = vmatprep.subr.mxu0 0.0
  %1349 = vmatpush1.msra.mxu0 %v174
  %1350 = vmatprep.subr.mxu0 0.0
  %1351 = vmatpush1.msra.mxu0 %v173
  %1352 = vmatprep.subr.mxu0 0.0
  %1353 = vmatpush1.msra.mxu0 %v172
  %1354 = vmatprep.subr.mxu0 0.0
  %1355 = vmatpush1.msra.mxu0 %v171
  %1356 = vmatprep.subr.mxu0 0.0
  %1357 = vmatpush1.msra.mxu0 %v170
  %1358 = vmatprep.subr.mxu0 0.0
  %1359 = vmatpush1.msra.mxu0 %v169
  %1360 = vmatprep.subr.mxu0 0.0
  %1361 = vmatpush1.msra.mxu0 %v168
  %1362 = vmatprep.subr.mxu0 0.0
  %1363 = vmatpush1.msra.mxu0 %v167
  %1364 = vmatprep.subr.mxu0 0.0
  %1365 = vmatpush2.msra.mxu0 0.0
  %1366 = vmatprep.subr.mxu0 0.0
  %1367 = vmatpush2.msra.mxu0 0.0
  %1368 = vmatprep.subr.mxu0 0.0
  %1369 = vmatpush2.msra.mxu0 0.0
  %1370 = vmatprep.subr.mxu0 0.0
  %1371 = vmatpush2.msra.mxu0 0.0
  %1372 = vmatprep.subr.mxu0 0.0
  %1373 = vmatpush2.msra.mxu0 0.0
  %1374 = vmatprep.subr.mxu0 0.0
  %1375 = vmatpush2.msra.mxu0 0.0
  %1376 = vmatprep.subr.mxu0 0.0
  %1377 = vmatpush2.msra.mxu0 0.0
  %1378 = vmatprep.subr.mxu0 0.0
  %1379 = vmatpush2.msra.mxu0 0.0
  %1380 = vmatprep.subr.mxu0 0.0
  %1381 = vmatpush2.msra.mxu0 0.0
  %1382 = vmatprep.subr.mxu0 0.0
  %1383 = vmatpush2.msra.mxu0 0.0
  %1384 = vmatprep.subr.mxu0 0.0
  %1385 = vmatpush2.msra.mxu0 0.0
  %1386 = vmatprep.subr.mxu0 0.0
  %1387 = vmatpush2.msra.mxu0 0.0
  %1388 = vmatprep.subr.mxu0 0.0
  %1389 = vmatpush2.msra.mxu0 0.0
  %1390 = vmatprep.subr.mxu0 0.0
  %1391 = vmatpush2.msra.mxu0 0.0
  %1392 = vmatprep.subr.mxu0 0.0
  %1393 = vmatpush2.msra.mxu0 0.0
  %1394 = vmatprep.subr.mxu0 0.0
  %1395 = vmatpush2.msra.mxu0 0.0
  %1396 = vmatprep.mubr.f32.mxu0 0.0
  %1397 = vmatmul.mubr.f32.gmra.mxu0 %v1261
  %v1398 = vpop.f32.mrf.mxu0
  %v1399 = vadd.f32 %v1329, %v1398
  %v1400 = vpop.f32.mrf.mxu0
  %1401 = vdwg.mxu0
  %v1402 = vadd.f32 %v1399, %v211
  %v1403 = vmul.f32 %v113, %v1005
  %v1404 = vmul.f32 %v118, %v1016
  %v1405 = vadd.f32 %v1403, %v1404
  %v1406 = vmul.f32 %v1405, 1.8
  %v1407 = vadd.f32 %v1406, 0.01
  %v1408 = vmul.f32 %v1012, %v103
  %v1409 = vmul.f32 %v108, %v1402
  %v1410 = vadd.f32 %v1408, %v1409
  %v1411 = vmul.f32 %v1407, %v1016
  %v1412 = vsub.f32 %v1410, %v1411
  %v1413 = vsub.f32 %v1412, %v1407
  %vm1414 = vcmp.gt.f32.partialorder %v1413, 0.0
  %v1415 = vsel %vm1414, 1, 0
  %v1416 = vcvt.s32.f32 %v1415
  %s1417 = scalar_lea.vmem %s11, 32
  %1418 = vst [vmem:[%s1417] sm:$0xff] %v1412
  %1419 = vst [vmem:[%s1417 + $0x8] sm:$0xff] %v1416
  %s1420 = scalar_lea.vmem %s0, 24
  %v1421 = vld [vmem:[%s1420] sm:$0xff]
  %1422 = vmatprep.subr.mxu0 0.0
  %1423 = vmatpush1.msra.mxu0 %v134
  %1424 = vmatprep.subr.mxu0 0.0
  %1425 = vmatpush1.msra.mxu0 %v133
  %1426 = vmatprep.subr.mxu0 0.0
  %1427 = vmatpush1.msra.mxu0 %v132
  %1428 = vmatprep.subr.mxu0 0.0
  %1429 = vmatpush1.msra.mxu0 %v131
  %1430 = vmatprep.subr.mxu0 0.0
  %1431 = vmatpush1.msra.mxu0 %v130
  %1432 = vmatprep.subr.mxu0 0.0
  %1433 = vmatpush1.msra.mxu0 %v129
  %1434 = vmatprep.subr.mxu0 0.0
  %1435 = vmatpush1.msra.mxu0 %v128
  %1436 = vmatprep.subr.mxu0 0.0
  %1437 = vmatpush1.msra.mxu0 %v127
  %1438 = vmatprep.subr.mxu0 0.0
  %1439 = vmatpush1.msra.mxu0 %v126
  %1440 = vmatprep.subr.mxu0 0.0
  %1441 = vmatpush1.msra.mxu0 %v125
  %1442 = vmatprep.subr.mxu0 0.0
  %1443 = vmatpush1.msra.mxu0 %v124
  %1444 = vmatprep.subr.mxu0 0.0
  %1445 = vmatpush1.msra.mxu0 %v123
  %1446 = vmatprep.subr.mxu0 0.0
  %1447 = vmatpush1.msra.mxu0 %v122
  %1448 = vmatprep.subr.mxu0 0.0
  %1449 = vmatpush1.msra.mxu0 %v121
  %1450 = vmatprep.subr.mxu0 0.0
  %1451 = vmatpush1.msra.mxu0 %v120
  %1452 = vmatprep.subr.mxu0 0.0
  %1453 = vmatpush1.msra.mxu0 %v119
  %1454 = vmatprep.subr.mxu0 0.0
  %1455 = vmatpush2.msra.mxu0 0.0
  %1456 = vmatprep.subr.mxu0 0.0
  %1457 = vmatpush2.msra.mxu0 0.0
  %1458 = vmatprep.subr.mxu0 0.0
  %1459 = vmatpush2.msra.mxu0 0.0
  %1460 = vmatprep.subr.mxu0 0.0
  %1461 = vmatpush2.msra.mxu0 0.0
  %1462 = vmatprep.subr.mxu0 0.0
  %1463 = vmatpush2.msra.mxu0 0.0
  %1464 = vmatprep.subr.mxu0 0.0
  %1465 = vmatpush2.msra.mxu0 0.0
  %1466 = vmatprep.subr.mxu0 0.0
  %1467 = vmatpush2.msra.mxu0 0.0
  %1468 = vmatprep.subr.mxu0 0.0
  %1469 = vmatpush2.msra.mxu0 0.0
  %1470 = vmatprep.subr.mxu0 0.0
  %1471 = vmatpush2.msra.mxu0 0.0
  %1472 = vmatprep.subr.mxu0 0.0
  %1473 = vmatpush2.msra.mxu0 0.0
  %1474 = vmatprep.subr.mxu0 0.0
  %1475 = vmatpush2.msra.mxu0 0.0
  %1476 = vmatprep.subr.mxu0 0.0
  %1477 = vmatpush2.msra.mxu0 0.0
  %1478 = vmatprep.subr.mxu0 0.0
  %1479 = vmatpush2.msra.mxu0 0.0
  %1480 = vmatprep.subr.mxu0 0.0
  %1481 = vmatpush2.msra.mxu0 0.0
  %1482 = vmatprep.subr.mxu0 0.0
  %1483 = vmatpush2.msra.mxu0 0.0
  %1484 = vmatprep.subr.mxu0 0.0
  %1485 = vmatpush2.msra.mxu0 0.0
  %1486 = vmatprep.mubr.f32.mxu0 0.0
  %1487 = vmatmul.mubr.f32.gmra.mxu0 %v1106
  %v1488 = vpop.f32.mrf.mxu0
  %v1489 = vadd.f32 0.0, %v1488
  %v1490 = vpop.f32.mrf.mxu0
  %1491 = vdwg.mxu0
  %v1492 = vadd.f32 %v1421, %v1489
  %v1493 = vmul.f32 %v73, %v1095
  %v1494 = vmul.f32 %v78, %v1106
  %v1495 = vadd.f32 %v1493, %v1494
  %v1496 = vmul.f32 %v1495, 1.8
  %v1497 = vadd.f32 %v1496, 0.01
  %v1498 = vmul.f32 %v1102, %v63
  %v1499 = vmul.f32 %v68, %v1492
  %v1500 = vadd.f32 %v1498, %v1499
  %v1501 = vmul.f32 %v1497, %v1106
  %v1502 = vsub.f32 %v1500, %v1501
  %v1503 = vsub.f32 %v1502, %v1497
  %vm1504 = vcmp.gt.f32.partialorder %v1503, 0.0
  %v1505 = vsel %vm1504, 1, 0
  %v1506 = vcvt.s32.f32 %v1505
  %1507 = vmatprep.subr.mxu0 0.0
  %1508 = vmatpush1.msra.mxu0 %v166
  %1509 = vmatprep.subr.mxu0 0.0
  %1510 = vmatpush1.msra.mxu0 %v165
  %1511 = vmatprep.subr.mxu0 0.0
  %1512 = vmatpush1.msra.mxu0 %v164
  %1513 = vmatprep.subr.mxu0 0.0
  %1514 = vmatpush1.msra.mxu0 %v163
  %1515 = vmatprep.subr.mxu0 0.0
  %1516 = vmatpush1.msra.mxu0 %v162
  %1517 = vmatprep.subr.mxu0 0.0
  %1518 = vmatpush1.msra.mxu0 %v161
  %1519 = vmatprep.subr.mxu0 0.0
  %1520 = vmatpush1.msra.mxu0 %v160
  %1521 = vmatprep.subr.mxu0 0.0
  %1522 = vmatpush1.msra.mxu0 %v159
  %1523 = vmatprep.subr.mxu0 0.0
  %1524 = vmatpush1.msra.mxu0 %v158
  %1525 = vmatprep.subr.mxu0 0.0
  %1526 = vmatpush1.msra.mxu0 %v157
  %1527 = vmatprep.subr.mxu0 0.0
  %1528 = vmatpush1.msra.mxu0 %v156
  %1529 = vmatprep.subr.mxu0 0.0
  %1530 = vmatpush1.msra.mxu0 %v155
  %1531 = vmatprep.subr.mxu0 0.0
  %1532 = vmatpush1.msra.mxu0 %v154
  %1533 = vmatprep.subr.mxu0 0.0
  %1534 = vmatpush1.msra.mxu0 %v153
  %1535 = vmatprep.subr.mxu0 0.0
  %1536 = vmatpush1.msra.mxu0 %v152
  %1537 = vmatprep.subr.mxu0 0.0
  %1538 = vmatpush1.msra.mxu0 %v151
  %1539 = vmatprep.subr.mxu0 0.0
  %1540 = vmatpush2.msra.mxu0 0.0
  %1541 = vmatprep.subr.mxu0 0.0
  %1542 = vmatpush2.msra.mxu0 0.0
  %1543 = vmatprep.subr.mxu0 0.0
  %1544 = vmatpush2.msra.mxu0 0.0
  %1545 = vmatprep.subr.mxu0 0.0
  %1546 = vmatpush2.msra.mxu0 0.0
  %1547 = vmatprep.subr.mxu0 0.0
  %1548 = vmatpush2.msra.mxu0 0.0
  %1549 = vmatprep.subr.mxu0 0.0
  %1550 = vmatpush2.msra.mxu0 0.0
  %1551 = vmatprep.subr.mxu0 0.0
  %1552 = vmatpush2.msra.mxu0 0.0
  %1553 = vmatprep.subr.mxu0 0.0
  %1554 = vmatpush2.msra.mxu0 0.0
  %1555 = vmatprep.subr.mxu0 0.0
  %1556 = vmatpush2.msra.mxu0 0.0
  %1557 = vmatprep.subr.mxu0 0.0
  %1558 = vmatpush2.msra.mxu0 0.0
  %1559 = vmatprep.subr.mxu0 0.0
  %1560 = vmatpush2.msra.mxu0 0.0
  %1561 = vmatprep.subr.mxu0 0.0
  %1562 = vmatpush2.msra.mxu0 0.0
  %1563 = vmatprep.subr.mxu0 0.0
  %1564 = vmatpush2.msra.mxu0 0.0
  %1565 = vmatprep.subr.mxu0 0.0
  %1566 = vmatpush2.msra.mxu0 0.0
  %1567 = vmatprep.subr.mxu0 0.0
  %1568 = vmatpush2.msra.mxu0 0.0
  %1569 = vmatprep.subr.mxu0 0.0
  %1570 = vmatpush2.msra.mxu0 0.0
  %1571 = vmatprep.mubr.f32.mxu0 0.0
  %1572 = vmatmul.mubr.f32.gmra.mxu0 %v1261
  %v1573 = vpop.f32.mrf.mxu0
  %v1574 = vadd.f32 0.0, %v1573
  %v1575 = vpop.f32.mrf.mxu0
  %1576 = vdwg.mxu0
  %1577 = vmatprep.subr.mxu0 0.0
  %1578 = vmatpush1.msra.mxu0 %v150
  %1579 = vmatprep.subr.mxu0 0.0
  %1580 = vmatpush1.msra.mxu0 %v149
  %1581 = vmatprep.subr.mxu0 0.0
  %1582 = vmatpush1.msra.mxu0 %v148
  %1583 = vmatprep.subr.mxu0 0.0
  %1584 = vmatpush1.msra.mxu0 %v147
  %1585 = vmatprep.subr.mxu0 0.0
  %1586 = vmatpush1.msra.mxu0 %v146
  %1587 = vmatprep.subr.mxu0 0.0
  %1588 = vmatpush1.msra.mxu0 %v145
  %1589 = vmatprep.subr.mxu0 0.0
  %1590 = vmatpush1.msra.mxu0 %v144
  %1591 = vmatprep.subr.mxu0 0.0
  %1592 = vmatpush1.msra.mxu0 %v143
  %1593 = vmatprep.subr.mxu0 0.0
  %1594 = vmatpush1.msra.mxu0 %v142
  %1595 = vmatprep.subr.mxu0 0.0
  %1596 = vmatpush1.msra.mxu0 %v141
  %1597 = vmatprep.subr.mxu0 0.0
  %1598 = vmatpush1.msra.mxu0 %v140
  %1599 = vmatprep.subr.mxu0 0.0
  %1600 = vmatpush1.msra.mxu0 %v139
  %1601 = vmatprep.subr.mxu0 0.0
  %1602 = vmatpush1.msra.mxu0 %v138
  %1603 = vmatprep.subr.mxu0 0.0
  %1604 = vmatpush1.msra.mxu0 %v137
  %1605 = vmatprep.subr.mxu0 0.0
  %1606 = vmatpush1.msra.mxu0 %v136
  %1607 = vmatprep.subr.mxu0 0.0
  %1608 = vmatpush1.msra.mxu0 %v135
  %1609 = vmatprep.subr.mxu0 0.0
  %1610 = vmatpush2.msra.mxu0 0.0
  %1611 = vmatprep.subr.mxu0 0.0
  %1612 = vmatpush2.msra.mxu0 0.0
  %1613 = vmatprep.subr.mxu0 0.0
  %1614 = vmatpush2.msra.mxu0 0.0
  %1615 = vmatprep.subr.mxu0 0.0
  %1616 = vmatpush2.msra.mxu0 0.0
  %1617 = vmatprep.subr.mxu0 0.0
  %1618 = vmatpush2.msra.mxu0 0.0
  %1619 = vmatprep.subr.mxu0 0.0
  %1620 = vmatpush2.msra.mxu0 0.0
  %1621 = vmatprep.subr.mxu0 0.0
  %1622 = vmatpush2.msra.mxu0 0.0
  %1623 = vmatprep.subr.mxu0 0.0
  %1624 = vmatpush2.msra.mxu0 0.0
  %1625 = vmatprep.subr.mxu0 0.0
  %1626 = vmatpush2.msra.mxu0 0.0
  %1627 = vmatprep.subr.mxu0 0.0
  %1628 = vmatpush2.msra.mxu0 0.0
  %1629 = vmatprep.subr.mxu0 0.0
  %1630 = vmatpush2.msra.mxu0 0.0
  %1631 = vmatprep.subr.mxu0 0.0
  %1632 = vmatpush2.msra.mxu0 0.0
  %1633 = vmatprep.subr.mxu0 0.0
  %1634 = vmatpush2.msra.mxu0 0.0
  %1635 = vmatprep.subr.mxu0 0.0
  %1636 = vmatpush2.msra.mxu0 0.0
  %1637 = vmatprep.subr.mxu0 0.0
  %1638 = vmatpush2.msra.mxu0 0.0
  %1639 = vmatprep.subr.mxu0 0.0
  %1640 = vmatpush2.msra.mxu0 0.0
  %1641 = vmatprep.mubr.f32.mxu0 0.0
  %1642 = vmatmul.mubr.f32.gmra.mxu0 %v1506
  %v1643 = vpop.f32.mrf.mxu0
  %v1644 = vadd.f32 %v1574, %v1643
  %v1645 = vpop.f32.mrf.mxu0
  %1646 = vdwg.mxu0
  %v1647 = vadd.f32 %v1644, %v204
  %v1648 = vmul.f32 %v93, %v1250
  %v1649 = vmul.f32 %v98, %v1261
  %v1650 = vadd.f32 %v1648, %v1649
  %v1651 = vmul.f32 %v1650, 1.8
  %v1652 = vadd.f32 %v1651, 0.01
  %v1653 = vmul.f32 %v1257, %v83
  %v1654 = vmul.f32 %v88, %v1647
  %v1655 = vadd.f32 %v1653, %v1654
  %v1656 = vmul.f32 %v1652, %v1261
  %v1657 = vsub.f32 %v1655, %v1656
  %v1658 = vsub.f32 %v1657, %v1652
  %vm1659 = vcmp.gt.f32.partialorder %v1658, 0.0
  %v1660 = vsel %vm1659, 1, 0
  %v1661 = vcvt.s32.f32 %v1660
  %1662 = vmatprep.subr.mxu0 0.0
  %1663 = vmatpush1.msra.mxu0 %v198
  %1664 = vmatprep.subr.mxu0 0.0
  %1665 = vmatpush1.msra.mxu0 %v197
  %1666 = vmatprep.subr.mxu0 0.0
  %1667 = vmatpush1.msra.mxu0 %v196
  %1668 = vmatprep.subr.mxu0 0.0
  %1669 = vmatpush1.msra.mxu0 %v195
  %1670 = vmatprep.subr.mxu0 0.0
  %1671 = vmatpush1.msra.mxu0 %v194
  %1672 = vmatprep.subr.mxu0 0.0
  %1673 = vmatpush1.msra.mxu0 %v193
  %1674 = vmatprep.subr.mxu0 0.0
  %1675 = vmatpush1.msra.mxu0 %v192
  %1676 = vmatprep.subr.mxu0 0.0
  %1677 = vmatpush1.msra.mxu0 %v191
  %1678 = vmatprep.subr.mxu0 0.0
  %1679 = vmatpush1.msra.mxu0 %v190
  %1680 = vmatprep.subr.mxu0 0.0
  %1681 = vmatpush1.msra.mxu0 %v189
  %1682 = vmatprep.subr.mxu0 0.0
  %1683 = vmatpush1.msra.mxu0 %v188
  %1684 = vmatprep.subr.mxu0 0.0
  %1685 = vmatpush1.msra.mxu0 %v187
  %1686 = vmatprep.subr.mxu0 0.0
  %1687 = vmatpush1.msra.mxu0 %v186
  %1688 = vmatprep.subr.mxu0 0.0
  %1689 = vmatpush1.msra.mxu0 %v185
  %1690 = vmatprep.subr.mxu0 0.0
  %1691 = vmatpush1.msra.mxu0 %v184
  %1692 = vmatprep.subr.mxu0 0.0
  %1693 = vmatpush1.msra.mxu0 %v183
  %1694 = vmatprep.subr.mxu0 0.0
  %1695 = vmatpush2.msra.mxu0 0.0
  %1696 = vmatprep.subr.mxu0 0.0
  %1697 = vmatpush2.msra.mxu0 0.0
  %1698 = vmatprep.subr.mxu0 0.0
  %1699 = vmatpush2.msra.mxu0 0.0
  %1700 = vmatprep.subr.mxu0 0.0
  %1701 = vmatpush2.msra.mxu0 0.0
  %1702 = vmatprep.subr.mxu0 0.0
  %1703 = vmatpush2.msra.mxu0 0.0
  %1704 = vmatprep.subr.mxu0 0.0
  %1705 = vmatpush2.msra.mxu0 0.0
  %1706 = vmatprep.subr.mxu0 0.0
  %1707 = vmatpush2.msra.mxu0 0.0
  %1708 = vmatprep.subr.mxu0 0.0
  %1709 = vmatpush2.msra.mxu0 0.0
  %1710 = vmatprep.subr.mxu0 0.0
  %1711 = vmatpush2.msra.mxu0 0.0
  %1712 = vmatprep.subr.mxu0 0.0
  %1713 = vmatpush2.msra.mxu0 0.0
  %1714 = vmatprep.subr.mxu0 0.0
  %1715 = vmatpush2.msra.mxu0 0.0
  %1716 = vmatprep.subr.mxu0 0.0
  %1717 = vmatpush2.msra.mxu0 0.0
  %1718 = vmatprep.subr.mxu0 0.0
  %1719 = vmatpush2.msra.mxu0 0.0
  %1720 = vmatprep.subr.mxu0 0.0
  %1721 = vmatpush2.msra.mxu0 0.0
  %1722 = vmatprep.subr.mxu0 0.0
  %1723 = vmatpush2.msra.mxu0 0.0
  %1724 = vmatprep.subr.mxu0 0.0
  %1725 = vmatpush2.msra.mxu0 0.0
  %1726 = vmatprep.mubr.f32.mxu0 0.0
  %1727 = vmatmul.mubr.f32.gmra.mxu0 %v1416
  %v1728 = vpop.f32.mrf.mxu0
  %v1729 = vadd.f32 0.0, %v1728
  %v1730 = vpop.f32.mrf.mxu0
  %1731 = vdwg.mxu0
  %1732 = vmatprep.subr.mxu0 0.0
  %1733 = vmatpush1.msra.mxu0 %v182
  %1734 = vmatprep.subr.mxu0 0.0
  %1735 = vmatpush1.msra.mxu0 %v181
  %1736 = vmatprep.subr.mxu0 0.0
  %1737 = vmatpush1.msra.mxu0 %v180
  %1738 = vmatprep.subr.mxu0 0.0
  %1739 = vmatpush1.msra.mxu0 %v179
  %1740 = vmatprep.subr.mxu0 0.0
  %1741 = vmatpush1.msra.mxu0 %v178
  %1742 = vmatprep.subr.mxu0 0.0
  %1743 = vmatpush1.msra.mxu0 %v177
  %1744 = vmatprep.subr.mxu0 0.0
  %1745 = vmatpush1.msra.mxu0 %v176
  %1746 = vmatprep.subr.mxu0 0.0
  %1747 = vmatpush1.msra.mxu0 %v175
  %1748 = vmatprep.subr.mxu0 0.0
  %1749 = vmatpush1.msra.mxu0 %v174
  %1750 = vmatprep.subr.mxu0 0.0
  %1751 = vmatpush1.msra.mxu0 %v173
  %1752 = vmatprep.subr.mxu0 0.0
  %1753 = vmatpush1.msra.mxu0 %v172
  %1754 = vmatprep.subr.mxu0 0.0
  %1755 = vmatpush1.msra.mxu0 %v171
  %1756 = vmatprep.subr.mxu0 0.0
  %1757 = vmatpush1.msra.mxu0 %v170
  %1758 = vmatprep.subr.mxu0 0.0
  %1759 = vmatpush1.msra.mxu0 %v169
  %1760 = vmatprep.subr.mxu0 0.0
  %1761 = vmatpush1.msra.mxu0 %v168
  %1762 = vmatprep.subr.mxu0 0.0
  %1763 = vmatpush1.msra.mxu0 %v167
  %1764 = vmatprep.subr.mxu0 0.0
  %1765 = vmatpush2.msra.mxu0 0.0
  %1766 = vmatprep.subr.mxu0 0.0
  %1767 = vmatpush2.msra.mxu0 0.0
  %1768 = vmatprep.subr.mxu0 0.0
  %1769 = vmatpush2.msra.mxu0 0.0
  %1770 = vmatprep.subr.mxu0 0.0
  %1771 = vmatpush2.msra.mxu0 0.0
  %1772 = vmatprep.subr.mxu0 0.0
  %1773 = vmatpush2.msra.mxu0 0.0
  %1774 = vmatprep.subr.mxu0 0.0
  %1775 = vmatpush2.msra.mxu0 0.0
  %1776 = vmatprep.subr.mxu0 0.0
  %1777 = vmatpush2.msra.mxu0 0.0
  %1778 = vmatprep.subr.mxu0 0.0
  %1779 = vmatpush2.msra.mxu0 0.0
  %1780 = vmatprep.subr.mxu0 0.0
  %1781 = vmatpush2.msra.mxu0 0.0
  %1782 = vmatprep.subr.mxu0 0.0
  %1783 = vmatpush2.msra.mxu0 0.0
  %1784 = vmatprep.subr.mxu0 0.0
  %1785 = vmatpush2.msra.mxu0 0.0
  %1786 = vmatprep.subr.mxu0 0.0
  %1787 = vmatpush2.msra.mxu0 0.0
  %1788 = vmatprep.subr.mxu0 0.0
  %1789 = vmatpush2.msra.mxu0 0.0
  %1790 = vmatprep.subr.mxu0 0.0
  %1791 = vmatpush2.msra.mxu0 0.0
  %1792 = vmatprep.subr.mxu0 0.0
  %1793 = vmatpush2.msra.mxu0 0.0
  %1794 = vmatprep.subr.mxu0 0.0
  %1795 = vmatpush2.msra.mxu0 0.0
  %1796 = vmatprep.mubr.f32.mxu0 0.0
  %1797 = vmatmul.mubr.f32.gmra.mxu0 %v1661
  %v1798 = vpop.f32.mrf.mxu0
  %v1799 = vadd.f32 %v1729, %v1798
  %v1800 = vpop.f32.mrf.mxu0
  %1801 = vdwg.mxu0
  %v1802 = vadd.f32 %v1799, %v211
  %v1803 = vmul.f32 %v113, %v1405
  %v1804 = vmul.f32 %v118, %v1416
  %v1805 = vadd.f32 %v1803, %v1804
  %v1806 = vmul.f32 %v1805, 1.8
  %v1807 = vadd.f32 %v1806, 0.01
  %v1808 = vmul.f32 %v1412, %v103
  %v1809 = vmul.f32 %v108, %v1802
  %v1810 = vadd.f32 %v1808, %v1809
  %v1811 = vmul.f32 %v1807, %v1416
  %v1812 = vsub.f32 %v1810, %v1811
  %v1813 = vsub.f32 %v1812, %v1807
  %vm1814 = vcmp.gt.f32.partialorder %v1813, 0.0
  %v1815 = vsel %vm1814, 1, 0
  %v1816 = vcvt.s32.f32 %v1815
  %s1817 = scalar_lea.vmem %s11, 48
  %1818 = vst [vmem:[%s1817] sm:$0xff] %v1812
  %1819 = vst [vmem:[%s1817 + $0x8] sm:$0xff] %v1816
  %s1820 = scalar_lea.vmem %s0, 32
  %v1821 = vld [vmem:[%s1820] sm:$0xff]
  %1822 = vmatprep.subr.mxu0 0.0
  %1823 = vmatpush1.msra.mxu0 %v134
  %1824 = vmatprep.subr.mxu0 0.0
  %1825 = vmatpush1.msra.mxu0 %v133
  %1826 = vmatprep.subr.mxu0 0.0
  %1827 = vmatpush1.msra.mxu0 %v132
  %1828 = vmatprep.subr.mxu0 0.0
  %1829 = vmatpush1.msra.mxu0 %v131
  %1830 = vmatprep.subr.mxu0 0.0
  %1831 = vmatpush1.msra.mxu0 %v130
  %1832 = vmatprep.subr.mxu0 0.0
  %1833 = vmatpush1.msra.mxu0 %v129
  %1834 = vmatprep.subr.mxu0 0.0
  %1835 = vmatpush1.msra.mxu0 %v128
  %1836 = vmatprep.subr.mxu0 0.0
  %1837 = vmatpush1.msra.mxu0 %v127
  %1838 = vmatprep.subr.mxu0 0.0
  %1839 = vmatpush1.msra.mxu0 %v126
  %1840 = vmatprep.subr.mxu0 0.0
  %1841 = vmatpush1.msra.mxu0 %v125
  %1842 = vmatprep.subr.mxu0 0.0
  %1843 = vmatpush1.msra.mxu0 %v124
  %1844 = vmatprep.subr.mxu0 0.0
  %1845 = vmatpush1.msra.mxu0 %v123
  %1846 = vmatprep.subr.mxu0 0.0
  %1847 = vmatpush1.msra.mxu0 %v122
  %1848 = vmatprep.subr.mxu0 0.0
  %1849 = vmatpush1.msra.mxu0 %v121
  %1850 = vmatprep.subr.mxu0 0.0
  %1851 = vmatpush1.msra.mxu0 %v120
  %1852 = vmatprep.subr.mxu0 0.0
  %1853 = vmatpush1.msra.mxu0 %v119
  %1854 = vmatprep.subr.mxu0 0.0
  %1855 = vmatpush2.msra.mxu0 0.0
  %1856 = vmatprep.subr.mxu0 0.0
  %1857 = vmatpush2.msra.mxu0 0.0
  %1858 = vmatprep.subr.mxu0 0.0
  %1859 = vmatpush2.msra.mxu0 0.0
  %1860 = vmatprep.subr.mxu0 0.0
  %1861 = vmatpush2.msra.mxu0 0.0
  %1862 = vmatprep.subr.mxu0 0.0
  %1863 = vmatpush2.msra.mxu0 0.0
  %1864 = vmatprep.subr.mxu0 0.0
  %1865 = vmatpush2.msra.mxu0 0.0
  %1866 = vmatprep.subr.mxu0 0.0
  %1867 = vmatpush2.msra.mxu0 0.0
  %1868 = vmatprep.subr.mxu0 0.0
  %1869 = vmatpush2.msra.mxu0 0.0
  %1870 = vmatprep.subr.mxu0 0.0
  %1871 = vmatpush2.msra.mxu0 0.0
  %1872 = vmatprep.subr.mxu0 0.0
  %1873 = vmatpush2.msra.mxu0 0.0
  %1874 = vmatprep.subr.mxu0 0.0
  %1875 = vmatpush2.msra.mxu0 0.0
  %1876 = vmatprep.subr.mxu0 0.0
  %1877 = vmatpush2.msra.mxu0 0.0
  %1878 = vmatprep.subr.mxu0 0.0
  %1879 = vmatpush2.msra.mxu0 0.0
  %1880 = vmatprep.subr.mxu0 0.0
  %1881 = vmatpush2.msra.mxu0 0.0
  %1882 = vmatprep.subr.mxu0 0.0
  %1883 = vmatpush2.msra.mxu0 0.0
  %1884 = vmatprep.subr.mxu0 0.0
  %1885 = vmatpush2.msra.mxu0 0.0
  %1886 = vmatprep.mubr.f32.mxu0 0.0
  %1887 = vmatmul.mubr.f32.gmra.mxu0 %v1506
  %v1888 = vpop.f32.mrf.mxu0
  %v1889 = vadd.f32 0.0, %v1888
  %v1890 = vpop.f32.mrf.mxu0
  %1891 = vdwg.mxu0
  %v1892 = vadd.f32 %v1821, %v1889
  %v1893 = vmul.f32 %v73, %v1495
  %v1894 = vmul.f32 %v78, %v1506
  %v1895 = vadd.f32 %v1893, %v1894
  %v1896 = vmul.f32 %v1895, 1.8
  %v1897 = vadd.f32 %v1896, 0.01
  %v1898 = vmul.f32 %v1502, %v63
  %v1899 = vmul.f32 %v68, %v1892
  %v1900 = vadd.f32 %v1898, %v1899
  %v1901 = vmul.f32 %v1897, %v1506
  %v1902 = vsub.f32 %v1900, %v1901
  %v1903 = vsub.f32 %v1902, %v1897
  %vm1904 = vcmp.gt.f32.partialorder %v1903, 0.0
  %v1905 = vsel %vm1904, 1, 0
  %v1906 = vcvt.s32.f32 %v1905
  %1907 = vmatprep.subr.mxu0 0.0
  %1908 = vmatpush1.msra.mxu0 %v166
  %1909 = vmatprep.subr.mxu0 0.0
  %1910 = vmatpush1.msra.mxu0 %v165
  %1911 = vmatprep.subr.mxu0 0.0
  %1912 = vmatpush1.msra.mxu0 %v164
  %1913 = vmatprep.subr.mxu0 0.0
  %1914 = vmatpush1.msra.mxu0 %v163
  %1915 = vmatprep.subr.mxu0 0.0
  %1916 = vmatpush1.msra.mxu0 %v162
  %1917 = vmatprep.subr.mxu0 0.0
  %1918 = vmatpush1.msra.mxu0 %v161
  %1919 = vmatprep.subr.mxu0 0.0
  %1920 = vmatpush1.msra.mxu0 %v160
  %1921 = vmatprep.subr.mxu0 0.0
  %1922 = vmatpush1.msra.mxu0 %v159
  %1923 = vmatprep.subr.mxu0 0.0
  %1924 = vmatpush1.msra.mxu0 %v158
  %1925 = vmatprep.subr.mxu0 0.0
  %1926 = vmatpush1.msra.mxu0 %v157
  %1927 = vmatprep.subr.mxu0 0.0
  %1928 = vmatpush1.msra.mxu0 %v156
  %1929 = vmatprep.subr.mxu0 0.0
  %1930 = vmatpush1.msra.mxu0 %v155
  %1931 = vmatprep.subr.mxu0 0.0
  %1932 = vmatpush1.msra.mxu0 %v154
  %1933 = vmatprep.subr.mxu0 0.0
  %1934 = vmatpush1.msra.mxu0 %v153
  %1935 = vmatprep.subr.mxu0 0.0
  %1936 = vmatpush1.msra.mxu0 %v152
  %1937 = vmatprep.subr.mxu0 0.0
  %1938 = vmatpush1.msra.mxu0 %v151
  %1939 = vmatprep.subr.mxu0 0.0
  %1940 = vmatpush2.msra.mxu0 0.0
  %1941 = vmatprep.subr.mxu0 0.0
  %1942 = vmatpush2.msra.mxu0 0.0
  %1943 = vmatprep.subr.mxu0 0.0
  %1944 = vmatpush2.msra.mxu0 0.0
  %1945 = vmatprep.subr.mxu0 0.0
  %1946 = vmatpush2.msra.mxu0 0.0
  %1947 = vmatprep.subr.mxu0 0.0
  %1948 = vmatpush2.msra.mxu0 0.0
  %1949 = vmatprep.subr.mxu0 0.0
  %1950 = vmatpush2.msra.mxu0 0.0
  %1951 = vmatprep.subr.mxu0 0.0
  %1952 = vmatpush2.msra.mxu0 0.0
  %1953 = vmatprep.subr.mxu0 0.0
  %1954 = vmatpush2.msra.mxu0 0.0
  %1955 = vmatprep.subr.mxu0 0.0
  %1956 = vmatpush2.msra.mxu0 0.0
  %1957 = vmatprep.subr.mxu0 0.0
  %1958 = vmatpush2.msra.mxu0 0.0
  %1959 = vmatprep.subr.mxu0 0.0
  %1960 = vmatpush2.msra.mxu0 0.0
  %1961 = vmatprep.subr.mxu0 0.0
  %1962 = vmatpush2.msra.mxu0 0.0
  %1963 = vmatprep.subr.mxu0 0.0
  %1964 = vmatpush2.msra.mxu0 0.0
  %1965 = vmatprep.subr.mxu0 0.0
  %1966 = vmatpush2.msra.mxu0 0.0
  %1967 = vmatprep.subr.mxu0 0.0
  %1968 = vmatpush2.msra.mxu0 0.0
  %1969 = vmatprep.subr.mxu0 0.0
  %1970 = vmatpush2.msra.mxu0 0.0
  %1971 = vmatprep.mubr.f32.mxu0 0.0
  %1972 = vmatmul.mubr.f32.gmra.mxu0 %v1661
  %v1973 = vpop.f32.mrf.mxu0
  %v1974 = vadd.f32 0.0, %v1973
  %v1975 = vpop.f32.mrf.mxu0
  %1976 = vdwg.mxu0
  %1977 = vmatprep.subr.mxu0 0.0
  %1978 = vmatpush1.msra.mxu0 %v150
  %1979 = vmatprep.subr.mxu0 0.0
  %1980 = vmatpush1.msra.mxu0 %v149
  %1981 = vmatprep.subr.mxu0 0.0
  %1982 = vmatpush1.msra.mxu0 %v148
  %1983 = vmatprep.subr.mxu0 0.0
  %1984 = vmatpush1.msra.mxu0 %v147
  %1985 = vmatprep.subr.mxu0 0.0
  %1986 = vmatpush1.msra.mxu0 %v146
  %1987 = vmatprep.subr.mxu0 0.0
  %1988 = vmatpush1.msra.mxu0 %v145
  %1989 = vmatprep.subr.mxu0 0.0
  %1990 = vmatpush1.msra.mxu0 %v144
  %1991 = vmatprep.subr.mxu0 0.0
  %1992 = vmatpush1.msra.mxu0 %v143
  %1993 = vmatprep.subr.mxu0 0.0
  %1994 = vmatpush1.msra.mxu0 %v142
  %1995 = vmatprep.subr.mxu0 0.0
  %1996 = vmatpush1.msra.mxu0 %v141
  %1997 = vmatprep.subr.mxu0 0.0
  %1998 = vmatpush1.msra.mxu0 %v140
  %1999 = vmatprep.subr.mxu0 0.0
  %2000 = vmatpush1.msra.mxu0 %v139
  %2001 = vmatprep.subr.mxu0 0.0
  %2002 = vmatpush1.msra.mxu0 %v138
  %2003 = vmatprep.subr.mxu0 0.0
  %2004 = vmatpush1.msra.mxu0 %v137
  %2005 = vmatprep.subr.mxu0 0.0
  %2006 = vmatpush1.msra.mxu0 %v136
  %2007 = vmatprep.subr.mxu0 0.0
  %2008 = vmatpush1.msra.mxu0 %v135
  %2009 = vmatprep.subr.mxu0 0.0
  %2010 = vmatpush2.msra.mxu0 0.0
  %2011 = vmatprep.subr.mxu0 0.0
  %2012 = vmatpush2.msra.mxu0 0.0
  %2013 = vmatprep.subr.mxu0 0.0
  %2014 = vmatpush2.msra.mxu0 0.0
  %2015 = vmatprep.subr.mxu0 0.0
  %2016 = vmatpush2.msra.mxu0 0.0
  %2017 = vmatprep.subr.mxu0 0.0
  %2018 = vmatpush2.msra.mxu0 0.0
  %2019 = vmatprep.subr.mxu0 0.0
  %2020 = vmatpush2.msra.mxu0 0.0
  %2021 = vmatprep.subr.mxu0 0.0
  %2022 = vmatpush2.msra.mxu0 0.0
  %2023 = vmatprep.subr.mxu0 0.0
  %2024 = vmatpush2.msra.mxu0 0.0
  %2025 = vmatprep.subr.mxu0 0.0
  %2026 = vmatpush2.msra.mxu0 0.0
  %2027 = vmatprep.subr.mxu0 0.0
  %2028 = vmatpush2.msra.mxu0 0.0
  %2029 = vmatprep.subr.mxu0 0.0
  %2030 = vmatpush2.msra.mxu0 0.0
  %2031 = vmatprep.subr.mxu0 0.0
  %2032 = vmatpush2.msra.mxu0 0.0
  %2033 = vmatprep.subr.mxu0 0.0
  %2034 = vmatpush2.msra.mxu0 0.0
  %2035 = vmatprep.subr.mxu0 0.0
  %2036 = vmatpush2.msra.mxu0 0.0
  %2037 = vmatprep.subr.mxu0 0.0
  %2038 = vmatpush2.msra.mxu0 0.0
  %2039 = vmatprep.subr.mxu0 0.0
  %2040 = vmatpush2.msra.mxu0 0.0
  %2041 = vmatprep.mubr.f32.mxu0 0.0
  %2042 = vmatmul.mubr.f32.gmra.mxu0 %v1906
  %v2043 = vpop.f32.mrf.mxu0
  %v2044 = vadd.f32 %v1974, %v2043
  %v2045 = vpop.f32.mrf.mxu0
  %2046 = vdwg.mxu0
  %v2047 = vadd.f32 %v2044, %v204
  %v2048 = vmul.f32 %v93, %v1650
  %v2049 = vmul.f32 %v98, %v1661
  %v2050 = vadd.f32 %v2048, %v2049
  %v2051 = vmul.f32 %v2050, 1.8
  %v2052 = vadd.f32 %v2051, 0.01
  %v2053 = vmul.f32 %v1657, %v83
  %v2054 = vmul.f32 %v88, %v2047
  %v2055 = vadd.f32 %v2053, %v2054
  %v2056 = vmul.f32 %v2052, %v1661
  %v2057 = vsub.f32 %v2055, %v2056
  %v2058 = vsub.f32 %v2057, %v2052
  %vm2059 = vcmp.gt.f32.partialorder %v2058, 0.0
  %v2060 = vsel %vm2059, 1, 0
  %v2061 = vcvt.s32.f32 %v2060
  %2062 = vmatprep.subr.mxu0 0.0
  %2063 = vmatpush1.msra.mxu0 %v198
  %2064 = vmatprep.subr.mxu0 0.0
  %2065 = vmatpush1.msra.mxu0 %v197
  %2066 = vmatprep.subr.mxu0 0.0
  %2067 = vmatpush1.msra.mxu0 %v196
  %2068 = vmatprep.subr.mxu0 0.0
  %2069 = vmatpush1.msra.mxu0 %v195
  %2070 = vmatprep.subr.mxu0 0.0
  %2071 = vmatpush1.msra.mxu0 %v194
  %2072 = vmatprep.subr.mxu0 0.0
  %2073 = vmatpush1.msra.mxu0 %v193
  %2074 = vmatprep.subr.mxu0 0.0
  %2075 = vmatpush1.msra.mxu0 %v192
  %2076 = vmatprep.subr.mxu0 0.0
  %2077 = vmatpush1.msra.mxu0 %v191
  %2078 = vmatprep.subr.mxu0 0.0
  %2079 = vmatpush1.msra.mxu0 %v190
  %2080 = vmatprep.subr.mxu0 0.0
  %2081 = vmatpush1.msra.mxu0 %v189
  %2082 = vmatprep.subr.mxu0 0.0
  %2083 = vmatpush1.msra.mxu0 %v188
  %2084 = vmatprep.subr.mxu0 0.0
  %2085 = vmatpush1.msra.mxu0 %v187
  %2086 = vmatprep.subr.mxu0 0.0
  %2087 = vmatpush1.msra.mxu0 %v186
  %2088 = vmatprep.subr.mxu0 0.0
  %2089 = vmatpush1.msra.mxu0 %v185
  %2090 = vmatprep.subr.mxu0 0.0
  %2091 = vmatpush1.msra.mxu0 %v184
  %2092 = vmatprep.subr.mxu0 0.0
  %2093 = vmatpush1.msra.mxu0 %v183
  %2094 = vmatprep.subr.mxu0 0.0
  %2095 = vmatpush2.msra.mxu0 0.0
  %2096 = vmatprep.subr.mxu0 0.0
  %2097 = vmatpush2.msra.mxu0 0.0
  %2098 = vmatprep.subr.mxu0 0.0
  %2099 = vmatpush2.msra.mxu0 0.0
  %2100 = vmatprep.subr.mxu0 0.0
  %2101 = vmatpush2.msra.mxu0 0.0
  %2102 = vmatprep.subr.mxu0 0.0
  %2103 = vmatpush2.msra.mxu0 0.0
  %2104 = vmatprep.subr.mxu0 0.0
  %2105 = vmatpush2.msra.mxu0 0.0
  %2106 = vmatprep.subr.mxu0 0.0
  %2107 = vmatpush2.msra.mxu0 0.0
  %2108 = vmatprep.subr.mxu0 0.0
  %2109 = vmatpush2.msra.mxu0 0.0
  %2110 = vmatprep.subr.mxu0 0.0
  %2111 = vmatpush2.msra.mxu0 0.0
  %2112 = vmatprep.subr.mxu0 0.0
  %2113 = vmatpush2.msra.mxu0 0.0
  %2114 = vmatprep.subr.mxu0 0.0
  %2115 = vmatpush2.msra.mxu0 0.0
  %2116 = vmatprep.subr.mxu0 0.0
  %2117 = vmatpush2.msra.mxu0 0.0
  %2118 = vmatprep.subr.mxu0 0.0
  %2119 = vmatpush2.msra.mxu0 0.0
  %2120 = vmatprep.subr.mxu0 0.0
  %2121 = vmatpush2.msra.mxu0 0.0
  %2122 = vmatprep.subr.mxu0 0.0
  %2123 = vmatpush2.msra.mxu0 0.0
  %2124 = vmatprep.subr.mxu0 0.0
  %2125 = vmatpush2.msra.mxu0 0.0
  %2126 = vmatprep.mubr.f32.mxu0 0.0
  %2127 = vmatmul.mubr.f32.gmra.mxu0 %v1816
  %v2128 = vpop.f32.mrf.mxu0
  %v2129 = vadd.f32 0.0, %v2128
  %v2130 = vpop.f32.mrf.mxu0
  %2131 = vdwg.mxu0
  %2132 = vmatprep.subr.mxu0 0.0
  %2133 = vmatpush1.msra.mxu0 %v182
  %2134 = vmatprep.subr.mxu0 0.0
  %2135 = vmatpush1.msra.mxu0 %v181
  %2136 = vmatprep.subr.mxu0 0.0
  %2137 = vmatpush1.msra.mxu0 %v180
  %2138 = vmatprep.subr.mxu0 0.0
  %2139 = vmatpush1.msra.mxu0 %v179
  %2140 = vmatprep.subr.mxu0 0.0
  %2141 = vmatpush1.msra.mxu0 %v178
  %2142 = vmatprep.subr.mxu0 0.0
  %2143 = vmatpush1.msra.mxu0 %v177
  %2144 = vmatprep.subr.mxu0 0.0
  %2145 = vmatpush1.msra.mxu0 %v176
  %2146 = vmatprep.subr.mxu0 0.0
  %2147 = vmatpush1.msra.mxu0 %v175
  %2148 = vmatprep.subr.mxu0 0.0
  %2149 = vmatpush1.msra.mxu0 %v174
  %2150 = vmatprep.subr.mxu0 0.0
  %2151 = vmatpush1.msra.mxu0 %v173
  %2152 = vmatprep.subr.mxu0 0.0
  %2153 = vmatpush1.msra.mxu0 %v172
  %2154 = vmatprep.subr.mxu0 0.0
  %2155 = vmatpush1.msra.mxu0 %v171
  %2156 = vmatprep.subr.mxu0 0.0
  %2157 = vmatpush1.msra.mxu0 %v170
  %2158 = vmatprep.subr.mxu0 0.0
  %2159 = vmatpush1.msra.mxu0 %v169
  %2160 = vmatprep.subr.mxu0 0.0
  %2161 = vmatpush1.msra.mxu0 %v168
  %2162 = vmatprep.subr.mxu0 0.0
  %2163 = vmatpush1.msra.mxu0 %v167
  %2164 = vmatprep.subr.mxu0 0.0
  %2165 = vmatpush2.msra.mxu0 0.0
  %2166 = vmatprep.subr.mxu0 0.0
  %2167 = vmatpush2.msra.mxu0 0.0
  %2168 = vmatprep.subr.mxu0 0.0
  %2169 = vmatpush2.msra.mxu0 0.0
  %2170 = vmatprep.subr.mxu0 0.0
  %2171 = vmatpush2.msra.mxu0 0.0
  %2172 = vmatprep.subr.mxu0 0.0
  %2173 = vmatpush2.msra.mxu0 0.0
  %2174 = vmatprep.subr.mxu0 0.0
  %2175 = vmatpush2.msra.mxu0 0.0
  %2176 = vmatprep.subr.mxu0 0.0
  %2177 = vmatpush2.msra.mxu0 0.0
  %2178 = vmatprep.subr.mxu0 0.0
  %2179 = vmatpush2.msra.mxu0 0.0
  %2180 = vmatprep.subr.mxu0 0.0
  %2181 = vmatpush2.msra.mxu0 0.0
  %2182 = vmatprep.subr.mxu0 0.0
  %2183 = vmatpush2.msra.mxu0 0.0
  %2184 = vmatprep.subr.mxu0 0.0
  %2185 = vmatpush2.msra.mxu0 0.0
  %2186 = vmatprep.subr.mxu0 0.0
  %2187 = vmatpush2.msra.mxu0 0.0
  %2188 = vmatprep.subr.mxu0 0.0
  %2189 = vmatpush2.msra.mxu0 0.0
  %2190 = vmatprep.subr.mxu0 0.0
  %2191 = vmatpush2.msra.mxu0 0.0
  %2192 = vmatprep.subr.mxu0 0.0
  %2193 = vmatpush2.msra.mxu0 0.0
  %2194 = vmatprep.subr.mxu0 0.0
  %2195 = vmatpush2.msra.mxu0 0.0
  %2196 = vmatprep.mubr.f32.mxu0 0.0
  %2197 = vmatmul.mubr.f32.gmra.mxu0 %v2061
  %v2198 = vpop.f32.mrf.mxu0
  %v2199 = vadd.f32 %v2129, %v2198
  %v2200 = vpop.f32.mrf.mxu0
  %2201 = vdwg.mxu0
  %v2202 = vadd.f32 %v2199, %v211
  %v2203 = vmul.f32 %v113, %v1805
  %v2204 = vmul.f32 %v118, %v1816
  %v2205 = vadd.f32 %v2203, %v2204
  %v2206 = vmul.f32 %v2205, 1.8
  %v2207 = vadd.f32 %v2206, 0.01
  %v2208 = vmul.f32 %v1812, %v103
  %v2209 = vmul.f32 %v108, %v2202
  %v2210 = vadd.f32 %v2208, %v2209
  %v2211 = vmul.f32 %v2207, %v1816
  %v2212 = vsub.f32 %v2210, %v2211
  %v2213 = vsub.f32 %v2212, %v2207
  %vm2214 = vcmp.gt.f32.partialorder %v2213, 0.0
  %v2215 = vsel %vm2214, 1, 0
  %v2216 = vcvt.s32.f32 %v2215
  %s2217 = scalar_lea.vmem %s11, 64
  %2218 = vst [vmem:[%s2217] sm:$0xff] %v2212
  %2219 = vst [vmem:[%s2217 + $0x8] sm:$0xff] %v2216
  %s2220 = scalar_lea.vmem %s0, 40
  %v2221 = vld [vmem:[%s2220] sm:$0xff]
  %2222 = vmatprep.subr.mxu0 0.0
  %2223 = vmatpush1.msra.mxu0 %v134
  %2224 = vmatprep.subr.mxu0 0.0
  %2225 = vmatpush1.msra.mxu0 %v133
  %2226 = vmatprep.subr.mxu0 0.0
  %2227 = vmatpush1.msra.mxu0 %v132
  %2228 = vmatprep.subr.mxu0 0.0
  %2229 = vmatpush1.msra.mxu0 %v131
  %2230 = vmatprep.subr.mxu0 0.0
  %2231 = vmatpush1.msra.mxu0 %v130
  %2232 = vmatprep.subr.mxu0 0.0
  %2233 = vmatpush1.msra.mxu0 %v129
  %2234 = vmatprep.subr.mxu0 0.0
  %2235 = vmatpush1.msra.mxu0 %v128
  %2236 = vmatprep.subr.mxu0 0.0
  %2237 = vmatpush1.msra.mxu0 %v127
  %2238 = vmatprep.subr.mxu0 0.0
  %2239 = vmatpush1.msra.mxu0 %v126
  %2240 = vmatprep.subr.mxu0 0.0
  %2241 = vmatpush1.msra.mxu0 %v125
  %2242 = vmatprep.subr.mxu0 0.0
  %2243 = vmatpush1.msra.mxu0 %v124
  %2244 = vmatprep.subr.mxu0 0.0
  %2245 = vmatpush1.msra.mxu0 %v123
  %2246 = vmatprep.subr.mxu0 0.0
  %2247 = vmatpush1.msra.mxu0 %v122
  %2248 = vmatprep.subr.mxu0 0.0
  %2249 = vmatpush1.msra.mxu0 %v121
  %2250 = vmatprep.subr.mxu0 0.0
  %2251 = vmatpush1.msra.mxu0 %v120
  %2252 = vmatprep.subr.mxu0 0.0
  %2253 = vmatpush1.msra.mxu0 %v119
  %2254 = vmatprep.subr.mxu0 0.0
  %2255 = vmatpush2.msra.mxu0 0.0
  %2256 = vmatprep.subr.mxu0 0.0
  %2257 = vmatpush2.msra.mxu0 0.0
  %2258 = vmatprep.subr.mxu0 0.0
  %2259 = vmatpush2.msra.mxu0 0.0
  %2260 = vmatprep.subr.mxu0 0.0
  %2261 = vmatpush2.msra.mxu0 0.0
  %2262 = vmatprep.subr.mxu0 0.0
  %2263 = vmatpush2.msra.mxu0 0.0
  %2264 = vmatprep.subr.mxu0 0.0
  %2265 = vmatpush2.msra.mxu0 0.0
  %2266 = vmatprep.subr.mxu0 0.0
  %2267 = vmatpush2.msra.mxu0 0.0
  %2268 = vmatprep.subr.mxu0 0.0
  %2269 = vmatpush2.msra.mxu0 0.0
  %2270 = vmatprep.subr.mxu0 0.0
  %2271 = vmatpush2.msra.mxu0 0.0
  %2272 = vmatprep.subr.mxu0 0.0
  %2273 = vmatpush2.msra.mxu0 0.0
  %2274 = vmatprep.subr.mxu0 0.0
  %2275 = vmatpush2.msra.mxu0 0.0
  %2276 = vmatprep.subr.mxu0 0.0
  %2277 = vmatpush2.msra.mxu0 0.0
  %2278 = vmatprep.subr.mxu0 0.0
  %2279 = vmatpush2.msra.mxu0 0.0
  %2280 = vmatprep.subr.mxu0 0.0
  %2281 = vmatpush2.msra.mxu0 0.0
  %2282 = vmatprep.subr.mxu0 0.0
  %2283 = vmatpush2.msra.mxu0 0.0
  %2284 = vmatprep.subr.mxu0 0.0
  %2285 = vmatpush2.msra.mxu0 0.0
  %2286 = vmatprep.mubr.f32.mxu0 0.0
  %2287 = vmatmul.mubr.f32.gmra.mxu0 %v1906
  %v2288 = vpop.f32.mrf.mxu0
  %v2289 = vadd.f32 0.0, %v2288
  %v2290 = vpop.f32.mrf.mxu0
  %2291 = vdwg.mxu0
  %v2292 = vadd.f32 %v2221, %v2289
  %v2293 = vmul.f32 %v73, %v1895
  %v2294 = vmul.f32 %v78, %v1906
  %v2295 = vadd.f32 %v2293, %v2294
  %v2296 = vmul.f32 %v2295, 1.8
  %v2297 = vadd.f32 %v2296, 0.01
  %v2298 = vmul.f32 %v1902, %v63
  %v2299 = vmul.f32 %v68, %v2292
  %v2300 = vadd.f32 %v2298, %v2299
  %v2301 = vmul.f32 %v2297, %v1906
  %v2302 = vsub.f32 %v2300, %v2301
  %v2303 = vsub.f32 %v2302, %v2297
  %vm2304 = vcmp.gt.f32.partialorder %v2303, 0.0
  %v2305 = vsel %vm2304, 1, 0
  %v2306 = vcvt.s32.f32 %v2305
  %2307 = vmatprep.subr.mxu0 0.0
  %2308 = vmatpush1.msra.mxu0 %v166
  %2309 = vmatprep.subr.mxu0 0.0
  %2310 = vmatpush1.msra.mxu0 %v165
  %2311 = vmatprep.subr.mxu0 0.0
  %2312 = vmatpush1.msra.mxu0 %v164
  %2313 = vmatprep.subr.mxu0 0.0
  %2314 = vmatpush1.msra.mxu0 %v163
  %2315 = vmatprep.subr.mxu0 0.0
  %2316 = vmatpush1.msra.mxu0 %v162
  %2317 = vmatprep.subr.mxu0 0.0
  %2318 = vmatpush1.msra.mxu0 %v161
  %2319 = vmatprep.subr.mxu0 0.0
  %2320 = vmatpush1.msra.mxu0 %v160
  %2321 = vmatprep.subr.mxu0 0.0
  %2322 = vmatpush1.msra.mxu0 %v159
  %2323 = vmatprep.subr.mxu0 0.0
  %2324 = vmatpush1.msra.mxu0 %v158
  %2325 = vmatprep.subr.mxu0 0.0
  %2326 = vmatpush1.msra.mxu0 %v157
  %2327 = vmatprep.subr.mxu0 0.0
  %2328 = vmatpush1.msra.mxu0 %v156
  %2329 = vmatprep.subr.mxu0 0.0
  %2330 = vmatpush1.msra.mxu0 %v155
  %2331 = vmatprep.subr.mxu0 0.0
  %2332 = vmatpush1.msra.mxu0 %v154
  %2333 = vmatprep.subr.mxu0 0.0
  %2334 = vmatpush1.msra.mxu0 %v153
  %2335 = vmatprep.subr.mxu0 0.0
  %2336 = vmatpush1.msra.mxu0 %v152
  %2337 = vmatprep.subr.mxu0 0.0
  %2338 = vmatpush1.msra.mxu0 %v151
  %2339 = vmatprep.subr.mxu0 0.0
  %2340 = vmatpush2.msra.mxu0 0.0
  %2341 = vmatprep.subr.mxu0 0.0
  %2342 = vmatpush2.msra.mxu0 0.0
  %2343 = vmatprep.subr.mxu0 0.0
  %2344 = vmatpush2.msra.mxu0 0.0
  %2345 = vmatprep.subr.mxu0 0.0
  %2346 = vmatpush2.msra.mxu0 0.0
  %2347 = vmatprep.subr.mxu0 0.0
  %2348 = vmatpush2.msra.mxu0 0.0
  %2349 = vmatprep.subr.mxu0 0.0
  %2350 = vmatpush2.msra.mxu0 0.0
  %2351 = vmatprep.subr.mxu0 0.0
  %2352 = vmatpush2.msra.mxu0 0.0
  %2353 = vmatprep.subr.mxu0 0.0
  %2354 = vmatpush2.msra.mxu0 0.0
  %2355 = vmatprep.subr.mxu0 0.0
  %2356 = vmatpush2.msra.mxu0 0.0
  %2357 = vmatprep.subr.mxu0 0.0
  %2358 = vmatpush2.msra.mxu0 0.0
  %2359 = vmatprep.subr.mxu0 0.0
  %2360 = vmatpush2.msra.mxu0 0.0
  %2361 = vmatprep.subr.mxu0 0.0
  %2362 = vmatpush2.msra.mxu0 0.0
  %2363 = vmatprep.subr.mxu0 0.0
  %2364 = vmatpush2.msra.mxu0 0.0
  %2365 = vmatprep.subr.mxu0 0.0
  %2366 = vmatpush2.msra.mxu0 0.0
  %2367 = vmatprep.subr.mxu0 0.0
  %2368 = vmatpush2.msra.mxu0 0.0
  %2369 = vmatprep.subr.mxu0 0.0
  %2370 = vmatpush2.msra.mxu0 0.0
  %2371 = vmatprep.mubr.f32.mxu0 0.0
  %2372 = vmatmul.mubr.f32.gmra.mxu0 %v2061
  %v2373 = vpop.f32.mrf.mxu0
  %v2374 = vadd.f32 0.0, %v2373
  %v2375 = vpop.f32.mrf.mxu0
  %2376 = vdwg.mxu0
  %2377 = vmatprep.subr.mxu0 0.0
  %2378 = vmatpush1.msra.mxu0 %v150
  %2379 = vmatprep.subr.mxu0 0.0
  %2380 = vmatpush1.msra.mxu0 %v149
  %2381 = vmatprep.subr.mxu0 0.0
  %2382 = vmatpush1.msra.mxu0 %v148
  %2383 = vmatprep.subr.mxu0 0.0
  %2384 = vmatpush1.msra.mxu0 %v147
  %2385 = vmatprep.subr.mxu0 0.0
  %2386 = vmatpush1.msra.mxu0 %v146
  %2387 = vmatprep.subr.mxu0 0.0
  %2388 = vmatpush1.msra.mxu0 %v145
  %2389 = vmatprep.subr.mxu0 0.0
  %2390 = vmatpush1.msra.mxu0 %v144
  %2391 = vmatprep.subr.mxu0 0.0
  %2392 = vmatpush1.msra.mxu0 %v143
  %2393 = vmatprep.subr.mxu0 0.0
  %2394 = vmatpush1.msra.mxu0 %v142
  %2395 = vmatprep.subr.mxu0 0.0
  %2396 = vmatpush1.msra.mxu0 %v141
  %2397 = vmatprep.subr.mxu0 0.0
  %2398 = vmatpush1.msra.mxu0 %v140
  %2399 = vmatprep.subr.mxu0 0.0
  %2400 = vmatpush1.msra.mxu0 %v139
  %2401 = vmatprep.subr.mxu0 0.0
  %2402 = vmatpush1.msra.mxu0 %v138
  %2403 = vmatprep.subr.mxu0 0.0
  %2404 = vmatpush1.msra.mxu0 %v137
  %2405 = vmatprep.subr.mxu0 0.0
  %2406 = vmatpush1.msra.mxu0 %v136
  %2407 = vmatprep.subr.mxu0 0.0
  %2408 = vmatpush1.msra.mxu0 %v135
  %2409 = vmatprep.subr.mxu0 0.0
  %2410 = vmatpush2.msra.mxu0 0.0
  %2411 = vmatprep.subr.mxu0 0.0
  %2412 = vmatpush2.msra.mxu0 0.0
  %2413 = vmatprep.subr.mxu0 0.0
  %2414 = vmatpush2.msra.mxu0 0.0
  %2415 = vmatprep.subr.mxu0 0.0
  %2416 = vmatpush2.msra.mxu0 0.0
  %2417 = vmatprep.subr.mxu0 0.0
  %2418 = vmatpush2.msra.mxu0 0.0
  %2419 = vmatprep.subr.mxu0 0.0
  %2420 = vmatpush2.msra.mxu0 0.0
  %2421 = vmatprep.subr.mxu0 0.0
  %2422 = vmatpush2.msra.mxu0 0.0
  %2423 = vmatprep.subr.mxu0 0.0
  %2424 = vmatpush2.msra.mxu0 0.0
  %2425 = vmatprep.subr.mxu0 0.0
  %2426 = vmatpush2.msra.mxu0 0.0
  %2427 = vmatprep.subr.mxu0 0.0
  %2428 = vmatpush2.msra.mxu0 0.0
  %2429 = vmatprep.subr.mxu0 0.0
  %2430 = vmatpush2.msra.mxu0 0.0
  %2431 = vmatprep.subr.mxu0 0.0
  %2432 = vmatpush2.msra.mxu0 0.0
  %2433 = vmatprep.subr.mxu0 0.0
  %2434 = vmatpush2.msra.mxu0 0.0
  %2435 = vmatprep.subr.mxu0 0.0
  %2436 = vmatpush2.msra.mxu0 0.0
  %2437 = vmatprep.subr.mxu0 0.0
  %2438 = vmatpush2.msra.mxu0 0.0
  %2439 = vmatprep.subr.mxu0 0.0
  %2440 = vmatpush2.msra.mxu0 0.0
  %2441 = vmatprep.mubr.f32.mxu0 0.0
  %2442 = vmatmul.mubr.f32.gmra.mxu0 %v2306
  %v2443 = vpop.f32.mrf.mxu0
  %v2444 = vadd.f32 %v2374, %v2443
  %v2445 = vpop.f32.mrf.mxu0
  %2446 = vdwg.mxu0
  %v2447 = vadd.f32 %v2444, %v204
  %v2448 = vmul.f32 %v93, %v2050
  %v2449 = vmul.f32 %v98, %v2061
  %v2450 = vadd.f32 %v2448, %v2449
  %v2451 = vmul.f32 %v2450, 1.8
  %v2452 = vadd.f32 %v2451, 0.01
  %v2453 = vmul.f32 %v2057, %v83
  %v2454 = vmul.f32 %v88, %v2447
  %v2455 = vadd.f32 %v2453, %v2454
  %v2456 = vmul.f32 %v2452, %v2061
  %v2457 = vsub.f32 %v2455, %v2456
  %v2458 = vsub.f32 %v2457, %v2452
  %vm2459 = vcmp.gt.f32.partialorder %v2458, 0.0
  %v2460 = vsel %vm2459, 1, 0
  %v2461 = vcvt.s32.f32 %v2460
  %2462 = vmatprep.subr.mxu0 0.0
  %2463 = vmatpush1.msra.mxu0 %v198
  %2464 = vmatprep.subr.mxu0 0.0
  %2465 = vmatpush1.msra.mxu0 %v197
  %2466 = vmatprep.subr.mxu0 0.0
  %2467 = vmatpush1.msra.mxu0 %v196
  %2468 = vmatprep.subr.mxu0 0.0
  %2469 = vmatpush1.msra.mxu0 %v195
  %2470 = vmatprep.subr.mxu0 0.0
  %2471 = vmatpush1.msra.mxu0 %v194
  %2472 = vmatprep.subr.mxu0 0.0
  %2473 = vmatpush1.msra.mxu0 %v193
  %2474 = vmatprep.subr.mxu0 0.0
  %2475 = vmatpush1.msra.mxu0 %v192
  %2476 = vmatprep.subr.mxu0 0.0
  %2477 = vmatpush1.msra.mxu0 %v191
  %2478 = vmatprep.subr.mxu0 0.0
  %2479 = vmatpush1.msra.mxu0 %v190
  %2480 = vmatprep.subr.mxu0 0.0
  %2481 = vmatpush1.msra.mxu0 %v189
  %2482 = vmatprep.subr.mxu0 0.0
  %2483 = vmatpush1.msra.mxu0 %v188
  %2484 = vmatprep.subr.mxu0 0.0
  %2485 = vmatpush1.msra.mxu0 %v187
  %2486 = vmatprep.subr.mxu0 0.0
  %2487 = vmatpush1.msra.mxu0 %v186
  %2488 = vmatprep.subr.mxu0 0.0
  %2489 = vmatpush1.msra.mxu0 %v185
  %2490 = vmatprep.subr.mxu0 0.0
  %2491 = vmatpush1.msra.mxu0 %v184
  %2492 = vmatprep.subr.mxu0 0.0
  %2493 = vmatpush1.msra.mxu0 %v183
  %2494 = vmatprep.subr.mxu0 0.0
  %2495 = vmatpush2.msra.mxu0 0.0
  %2496 = vmatprep.subr.mxu0 0.0
  %2497 = vmatpush2.msra.mxu0 0.0
  %2498 = vmatprep.subr.mxu0 0.0
  %2499 = vmatpush2.msra.mxu0 0.0
  %2500 = vmatprep.subr.mxu0 0.0
  %2501 = vmatpush2.msra.mxu0 0.0
  %2502 = vmatprep.subr.mxu0 0.0
  %2503 = vmatpush2.msra.mxu0 0.0
  %2504 = vmatprep.subr.mxu0 0.0
  %2505 = vmatpush2.msra.mxu0 0.0
  %2506 = vmatprep.subr.mxu0 0.0
  %2507 = vmatpush2.msra.mxu0 0.0
  %2508 = vmatprep.subr.mxu0 0.0
  %2509 = vmatpush2.msra.mxu0 0.0
  %2510 = vmatprep.subr.mxu0 0.0
  %2511 = vmatpush2.msra.mxu0 0.0
  %2512 = vmatprep.subr.mxu0 0.0
  %2513 = vmatpush2.msra.mxu0 0.0
  %2514 = vmatprep.subr.mxu0 0.0
  %2515 = vmatpush2.msra.mxu0 0.0
  %2516 = vmatprep.subr.mxu0 0.0
  %2517 = vmatpush2.msra.mxu0 0.0
  %2518 = vmatprep.subr.mxu0 0.0
  %2519 = vmatpush2.msra.mxu0 0.0
  %2520 = vmatprep.subr.mxu0 0.0
  %2521 = vmatpush2.msra.mxu0 0.0
  %2522 = vmatprep.subr.mxu0 0.0
  %2523 = vmatpush2.msra.mxu0 0.0
  %2524 = vmatprep.subr.mxu0 0.0
  %2525 = vmatpush2.msra.mxu0 0.0
  %2526 = vmatprep.mubr.f32.mxu0 0.0
  %2527 = vmatmul.mubr.f32.gmra.mxu0 %v2216
  %v2528 = vpop.f32.mrf.mxu0
  %v2529 = vadd.f32 0.0, %v2528
  %v2530 = vpop.f32.mrf.mxu0
  %2531 = vdwg.mxu0
  %2532 = vmatprep.subr.mxu0 0.0
  %2533 = vmatpush1.msra.mxu0 %v182
  %2534 = vmatprep.subr.mxu0 0.0
  %2535 = vmatpush1.msra.mxu0 %v181
  %2536 = vmatprep.subr.mxu0 0.0
  %2537 = vmatpush1.msra.mxu0 %v180
  %2538 = vmatprep.subr.mxu0 0.0
  %2539 = vmatpush1.msra.mxu0 %v179
  %2540 = vmatprep.subr.mxu0 0.0
  %2541 = vmatpush1.msra.mxu0 %v178
  %2542 = vmatprep.subr.mxu0 0.0
  %2543 = vmatpush1.msra.mxu0 %v177
  %2544 = vmatprep.subr.mxu0 0.0
  %2545 = vmatpush1.msra.mxu0 %v176
  %2546 = vmatprep.subr.mxu0 0.0
  %2547 = vmatpush1.msra.mxu0 %v175
  %2548 = vmatprep.subr.mxu0 0.0
  %2549 = vmatpush1.msra.mxu0 %v174
  %2550 = vmatprep.subr.mxu0 0.0
  %2551 = vmatpush1.msra.mxu0 %v173
  %2552 = vmatprep.subr.mxu0 0.0
  %2553 = vmatpush1.msra.mxu0 %v172
  %2554 = vmatprep.subr.mxu0 0.0
  %2555 = vmatpush1.msra.mxu0 %v171
  %2556 = vmatprep.subr.mxu0 0.0
  %2557 = vmatpush1.msra.mxu0 %v170
  %2558 = vmatprep.subr.mxu0 0.0
  %2559 = vmatpush1.msra.mxu0 %v169
  %2560 = vmatprep.subr.mxu0 0.0
  %2561 = vmatpush1.msra.mxu0 %v168
  %2562 = vmatprep.subr.mxu0 0.0
  %2563 = vmatpush1.msra.mxu0 %v167
  %2564 = vmatprep.subr.mxu0 0.0
  %2565 = vmatpush2.msra.mxu0 0.0
  %2566 = vmatprep.subr.mxu0 0.0
  %2567 = vmatpush2.msra.mxu0 0.0
  %2568 = vmatprep.subr.mxu0 0.0
  %2569 = vmatpush2.msra.mxu0 0.0
  %2570 = vmatprep.subr.mxu0 0.0
  %2571 = vmatpush2.msra.mxu0 0.0
  %2572 = vmatprep.subr.mxu0 0.0
  %2573 = vmatpush2.msra.mxu0 0.0
  %2574 = vmatprep.subr.mxu0 0.0
  %2575 = vmatpush2.msra.mxu0 0.0
  %2576 = vmatprep.subr.mxu0 0.0
  %2577 = vmatpush2.msra.mxu0 0.0
  %2578 = vmatprep.subr.mxu0 0.0
  %2579 = vmatpush2.msra.mxu0 0.0
  %2580 = vmatprep.subr.mxu0 0.0
  %2581 = vmatpush2.msra.mxu0 0.0
  %2582 = vmatprep.subr.mxu0 0.0
  %2583 = vmatpush2.msra.mxu0 0.0
  %2584 = vmatprep.subr.mxu0 0.0
  %2585 = vmatpush2.msra.mxu0 0.0
  %2586 = vmatprep.subr.mxu0 0.0
  %2587 = vmatpush2.msra.mxu0 0.0
  %2588 = vmatprep.subr.mxu0 0.0
  %2589 = vmatpush2.msra.mxu0 0.0
  %2590 = vmatprep.subr.mxu0 0.0
  %2591 = vmatpush2.msra.mxu0 0.0
  %2592 = vmatprep.subr.mxu0 0.0
  %2593 = vmatpush2.msra.mxu0 0.0
  %2594 = vmatprep.subr.mxu0 0.0
  %2595 = vmatpush2.msra.mxu0 0.0
  %2596 = vmatprep.mubr.f32.mxu0 0.0
  %2597 = vmatmul.mubr.f32.gmra.mxu0 %v2461
  %v2598 = vpop.f32.mrf.mxu0
  %v2599 = vadd.f32 %v2529, %v2598
  %v2600 = vpop.f32.mrf.mxu0
  %2601 = vdwg.mxu0
  %v2602 = vadd.f32 %v2599, %v211
  %v2603 = vmul.f32 %v113, %v2205
  %v2604 = vmul.f32 %v118, %v2216
  %v2605 = vadd.f32 %v2603, %v2604
  %v2606 = vmul.f32 %v2605, 1.8
  %v2607 = vadd.f32 %v2606, 0.01
  %v2608 = vmul.f32 %v2212, %v103
  %v2609 = vmul.f32 %v108, %v2602
  %v2610 = vadd.f32 %v2608, %v2609
  %v2611 = vmul.f32 %v2607, %v2216
  %v2612 = vsub.f32 %v2610, %v2611
  %v2613 = vsub.f32 %v2612, %v2607
  %vm2614 = vcmp.gt.f32.partialorder %v2613, 0.0
  %v2615 = vsel %vm2614, 1, 0
  %v2616 = vcvt.s32.f32 %v2615
  %s2617 = scalar_lea.vmem %s11, 80
  %2618 = vst [vmem:[%s2617] sm:$0xff] %v2612
  %2619 = vst [vmem:[%s2617 + $0x8] sm:$0xff] %v2616
  %s2620 = scalar_lea.vmem %s0, 48
  %v2621 = vld [vmem:[%s2620] sm:$0xff]
  %2622 = vmatprep.subr.mxu0 0.0
  %2623 = vmatpush1.msra.mxu0 %v134
  %2624 = vmatprep.subr.mxu0 0.0
  %2625 = vmatpush1.msra.mxu0 %v133
  %2626 = vmatprep.subr.mxu0 0.0
  %2627 = vmatpush1.msra.mxu0 %v132
  %2628 = vmatprep.subr.mxu0 0.0
  %2629 = vmatpush1.msra.mxu0 %v131
  %2630 = vmatprep.subr.mxu0 0.0
  %2631 = vmatpush1.msra.mxu0 %v130
  %2632 = vmatprep.subr.mxu0 0.0
  %2633 = vmatpush1.msra.mxu0 %v129
  %2634 = vmatprep.subr.mxu0 0.0
  %2635 = vmatpush1.msra.mxu0 %v128
  %2636 = vmatprep.subr.mxu0 0.0
  %2637 = vmatpush1.msra.mxu0 %v127
  %2638 = vmatprep.subr.mxu0 0.0
  %2639 = vmatpush1.msra.mxu0 %v126
  %2640 = vmatprep.subr.mxu0 0.0
  %2641 = vmatpush1.msra.mxu0 %v125
  %2642 = vmatprep.subr.mxu0 0.0
  %2643 = vmatpush1.msra.mxu0 %v124
  %2644 = vmatprep.subr.mxu0 0.0
  %2645 = vmatpush1.msra.mxu0 %v123
  %2646 = vmatprep.subr.mxu0 0.0
  %2647 = vmatpush1.msra.mxu0 %v122
  %2648 = vmatprep.subr.mxu0 0.0
  %2649 = vmatpush1.msra.mxu0 %v121
  %2650 = vmatprep.subr.mxu0 0.0
  %2651 = vmatpush1.msra.mxu0 %v120
  %2652 = vmatprep.subr.mxu0 0.0
  %2653 = vmatpush1.msra.mxu0 %v119
  %2654 = vmatprep.subr.mxu0 0.0
  %2655 = vmatpush2.msra.mxu0 0.0
  %2656 = vmatprep.subr.mxu0 0.0
  %2657 = vmatpush2.msra.mxu0 0.0
  %2658 = vmatprep.subr.mxu0 0.0
  %2659 = vmatpush2.msra.mxu0 0.0
  %2660 = vmatprep.subr.mxu0 0.0
  %2661 = vmatpush2.msra.mxu0 0.0
  %2662 = vmatprep.subr.mxu0 0.0
  %2663 = vmatpush2.msra.mxu0 0.0
  %2664 = vmatprep.subr.mxu0 0.0
  %2665 = vmatpush2.msra.mxu0 0.0
  %2666 = vmatprep.subr.mxu0 0.0
  %2667 = vmatpush2.msra.mxu0 0.0
  %2668 = vmatprep.subr.mxu0 0.0
  %2669 = vmatpush2.msra.mxu0 0.0
  %2670 = vmatprep.subr.mxu0 0.0
  %2671 = vmatpush2.msra.mxu0 0.0
  %2672 = vmatprep.subr.mxu0 0.0
  %2673 = vmatpush2.msra.mxu0 0.0
  %2674 = vmatprep.subr.mxu0 0.0
  %2675 = vmatpush2.msra.mxu0 0.0
  %2676 = vmatprep.subr.mxu0 0.0
  %2677 = vmatpush2.msra.mxu0 0.0
  %2678 = vmatprep.subr.mxu0 0.0
  %2679 = vmatpush2.msra.mxu0 0.0
  %2680 = vmatprep.subr.mxu0 0.0
  %2681 = vmatpush2.msra.mxu0 0.0
  %2682 = vmatprep.subr.mxu0 0.0
  %2683 = vmatpush2.msra.mxu0 0.0
  %2684 = vmatprep.subr.mxu0 0.0
  %2685 = vmatpush2.msra.mxu0 0.0
  %2686 = vmatprep.mubr.f32.mxu0 0.0
  %2687 = vmatmul.mubr.f32.gmra.mxu0 %v2306
  %v2688 = vpop.f32.mrf.mxu0
  %v2689 = vadd.f32 0.0, %v2688
  %v2690 = vpop.f32.mrf.mxu0
  %2691 = vdwg.mxu0
  %v2692 = vadd.f32 %v2621, %v2689
  %v2693 = vmul.f32 %v73, %v2295
  %v2694 = vmul.f32 %v78, %v2306
  %v2695 = vadd.f32 %v2693, %v2694
  %v2696 = vmul.f32 %v2695, 1.8
  %v2697 = vadd.f32 %v2696, 0.01
  %v2698 = vmul.f32 %v2302, %v63
  %v2699 = vmul.f32 %v68, %v2692
  %v2700 = vadd.f32 %v2698, %v2699
  %v2701 = vmul.f32 %v2697, %v2306
  %v2702 = vsub.f32 %v2700, %v2701
  %v2703 = vsub.f32 %v2702, %v2697
  %vm2704 = vcmp.gt.f32.partialorder %v2703, 0.0
  %v2705 = vsel %vm2704, 1, 0
  %v2706 = vcvt.s32.f32 %v2705
  %2707 = vmatprep.subr.mxu0 0.0
  %2708 = vmatpush1.msra.mxu0 %v166
  %2709 = vmatprep.subr.mxu0 0.0
  %2710 = vmatpush1.msra.mxu0 %v165
  %2711 = vmatprep.subr.mxu0 0.0
  %2712 = vmatpush1.msra.mxu0 %v164
  %2713 = vmatprep.subr.mxu0 0.0
  %2714 = vmatpush1.msra.mxu0 %v163
  %2715 = vmatprep.subr.mxu0 0.0
  %2716 = vmatpush1.msra.mxu0 %v162
  %2717 = vmatprep.subr.mxu0 0.0
  %2718 = vmatpush1.msra.mxu0 %v161
  %2719 = vmatprep.subr.mxu0 0.0
  %2720 = vmatpush1.msra.mxu0 %v160
  %2721 = vmatprep.subr.mxu0 0.0
  %2722 = vmatpush1.msra.mxu0 %v159
  %2723 = vmatprep.subr.mxu0 0.0
  %2724 = vmatpush1.msra.mxu0 %v158
  %2725 = vmatprep.subr.mxu0 0.0
  %2726 = vmatpush1.msra.mxu0 %v157
  %2727 = vmatprep.subr.mxu0 0.0
  %2728 = vmatpush1.msra.mxu0 %v156
  %2729 = vmatprep.subr.mxu0 0.0
  %2730 = vmatpush1.msra.mxu0 %v155
  %2731 = vmatprep.subr.mxu0 0.0
  %2732 = vmatpush1.msra.mxu0 %v154
  %2733 = vmatprep.subr.mxu0 0.0
  %2734 = vmatpush1.msra.mxu0 %v153
  %2735 = vmatprep.subr.mxu0 0.0
  %2736 = vmatpush1.msra.mxu0 %v152
  %2737 = vmatprep.subr.mxu0 0.0
  %2738 = vmatpush1.msra.mxu0 %v151
  %2739 = vmatprep.subr.mxu0 0.0
  %2740 = vmatpush2.msra.mxu0 0.0
  %2741 = vmatprep.subr.mxu0 0.0
  %2742 = vmatpush2.msra.mxu0 0.0
  %2743 = vmatprep.subr.mxu0 0.0
  %2744 = vmatpush2.msra.mxu0 0.0
  %2745 = vmatprep.subr.mxu0 0.0
  %2746 = vmatpush2.msra.mxu0 0.0
  %2747 = vmatprep.subr.mxu0 0.0
  %2748 = vmatpush2.msra.mxu0 0.0
  %2749 = vmatprep.subr.mxu0 0.0
  %2750 = vmatpush2.msra.mxu0 0.0
  %2751 = vmatprep.subr.mxu0 0.0
  %2752 = vmatpush2.msra.mxu0 0.0
  %2753 = vmatprep.subr.mxu0 0.0
  %2754 = vmatpush2.msra.mxu0 0.0
  %2755 = vmatprep.subr.mxu0 0.0
  %2756 = vmatpush2.msra.mxu0 0.0
  %2757 = vmatprep.subr.mxu0 0.0
  %2758 = vmatpush2.msra.mxu0 0.0
  %2759 = vmatprep.subr.mxu0 0.0
  %2760 = vmatpush2.msra.mxu0 0.0
  %2761 = vmatprep.subr.mxu0 0.0
  %2762 = vmatpush2.msra.mxu0 0.0
  %2763 = vmatprep.subr.mxu0 0.0
  %2764 = vmatpush2.msra.mxu0 0.0
  %2765 = vmatprep.subr.mxu0 0.0
  %2766 = vmatpush2.msra.mxu0 0.0
  %2767 = vmatprep.subr.mxu0 0.0
  %2768 = vmatpush2.msra.mxu0 0.0
  %2769 = vmatprep.subr.mxu0 0.0
  %2770 = vmatpush2.msra.mxu0 0.0
  %2771 = vmatprep.mubr.f32.mxu0 0.0
  %2772 = vmatmul.mubr.f32.gmra.mxu0 %v2461
  %v2773 = vpop.f32.mrf.mxu0
  %v2774 = vadd.f32 0.0, %v2773
  %v2775 = vpop.f32.mrf.mxu0
  %2776 = vdwg.mxu0
  %2777 = vmatprep.subr.mxu0 0.0
  %2778 = vmatpush1.msra.mxu0 %v150
  %2779 = vmatprep.subr.mxu0 0.0
  %2780 = vmatpush1.msra.mxu0 %v149
  %2781 = vmatprep.subr.mxu0 0.0
  %2782 = vmatpush1.msra.mxu0 %v148
  %2783 = vmatprep.subr.mxu0 0.0
  %2784 = vmatpush1.msra.mxu0 %v147
  %2785 = vmatprep.subr.mxu0 0.0
  %2786 = vmatpush1.msra.mxu0 %v146
  %2787 = vmatprep.subr.mxu0 0.0
  %2788 = vmatpush1.msra.mxu0 %v145
  %2789 = vmatprep.subr.mxu0 0.0
  %2790 = vmatpush1.msra.mxu0 %v144
  %2791 = vmatprep.subr.mxu0 0.0
  %2792 = vmatpush1.msra.mxu0 %v143
  %2793 = vmatprep.subr.mxu0 0.0
  %2794 = vmatpush1.msra.mxu0 %v142
  %2795 = vmatprep.subr.mxu0 0.0
  %2796 = vmatpush1.msra.mxu0 %v141
  %2797 = vmatprep.subr.mxu0 0.0
  %2798 = vmatpush1.msra.mxu0 %v140
  %2799 = vmatprep.subr.mxu0 0.0
  %2800 = vmatpush1.msra.mxu0 %v139
  %2801 = vmatprep.subr.mxu0 0.0
  %2802 = vmatpush1.msra.mxu0 %v138
  %2803 = vmatprep.subr.mxu0 0.0
  %2804 = vmatpush1.msra.mxu0 %v137
  %2805 = vmatprep.subr.mxu0 0.0
  %2806 = vmatpush1.msra.mxu0 %v136
  %2807 = vmatprep.subr.mxu0 0.0
  %2808 = vmatpush1.msra.mxu0 %v135
  %2809 = vmatprep.subr.mxu0 0.0
  %2810 = vmatpush2.msra.mxu0 0.0
  %2811 = vmatprep.subr.mxu0 0.0
  %2812 = vmatpush2.msra.mxu0 0.0
  %2813 = vmatprep.subr.mxu0 0.0
  %2814 = vmatpush2.msra.mxu0 0.0
  %2815 = vmatprep.subr.mxu0 0.0
  %2816 = vmatpush2.msra.mxu0 0.0
  %2817 = vmatprep.subr.mxu0 0.0
  %2818 = vmatpush2.msra.mxu0 0.0
  %2819 = vmatprep.subr.mxu0 0.0
  %2820 = vmatpush2.msra.mxu0 0.0
  %2821 = vmatprep.subr.mxu0 0.0
  %2822 = vmatpush2.msra.mxu0 0.0
  %2823 = vmatprep.subr.mxu0 0.0
  %2824 = vmatpush2.msra.mxu0 0.0
  %2825 = vmatprep.subr.mxu0 0.0
  %2826 = vmatpush2.msra.mxu0 0.0
  %2827 = vmatprep.subr.mxu0 0.0
  %2828 = vmatpush2.msra.mxu0 0.0
  %2829 = vmatprep.subr.mxu0 0.0
  %2830 = vmatpush2.msra.mxu0 0.0
  %2831 = vmatprep.subr.mxu0 0.0
  %2832 = vmatpush2.msra.mxu0 0.0
  %2833 = vmatprep.subr.mxu0 0.0
  %2834 = vmatpush2.msra.mxu0 0.0
  %2835 = vmatprep.subr.mxu0 0.0
  %2836 = vmatpush2.msra.mxu0 0.0
  %2837 = vmatprep.subr.mxu0 0.0
  %2838 = vmatpush2.msra.mxu0 0.0
  %2839 = vmatprep.subr.mxu0 0.0
  %2840 = vmatpush2.msra.mxu0 0.0
  %2841 = vmatprep.mubr.f32.mxu0 0.0
  %2842 = vmatmul.mubr.f32.gmra.mxu0 %v2706
  %v2843 = vpop.f32.mrf.mxu0
  %v2844 = vadd.f32 %v2774, %v2843
  %v2845 = vpop.f32.mrf.mxu0
  %2846 = vdwg.mxu0
  %v2847 = vadd.f32 %v2844, %v204
  %v2848 = vmul.f32 %v93, %v2450
  %v2849 = vmul.f32 %v98, %v2461
  %v2850 = vadd.f32 %v2848, %v2849
  %v2851 = vmul.f32 %v2850, 1.8
  %v2852 = vadd.f32 %v2851, 0.01
  %v2853 = vmul.f32 %v2457, %v83
  %v2854 = vmul.f32 %v88, %v2847
  %v2855 = vadd.f32 %v2853, %v2854
  %v2856 = vmul.f32 %v2852, %v2461
  %v2857 = vsub.f32 %v2855, %v2856
  %v2858 = vsub.f32 %v2857, %v2852
  %vm2859 = vcmp.gt.f32.partialorder %v2858, 0.0
  %v2860 = vsel %vm2859, 1, 0
  %v2861 = vcvt.s32.f32 %v2860
  %2862 = vmatprep.subr.mxu0 0.0
  %2863 = vmatpush1.msra.mxu0 %v198
  %2864 = vmatprep.subr.mxu0 0.0
  %2865 = vmatpush1.msra.mxu0 %v197
  %2866 = vmatprep.subr.mxu0 0.0
  %2867 = vmatpush1.msra.mxu0 %v196
  %2868 = vmatprep.subr.mxu0 0.0
  %2869 = vmatpush1.msra.mxu0 %v195
  %2870 = vmatprep.subr.mxu0 0.0
  %2871 = vmatpush1.msra.mxu0 %v194
  %2872 = vmatprep.subr.mxu0 0.0
  %2873 = vmatpush1.msra.mxu0 %v193
  %2874 = vmatprep.subr.mxu0 0.0
  %2875 = vmatpush1.msra.mxu0 %v192
  %2876 = vmatprep.subr.mxu0 0.0
  %2877 = vmatpush1.msra.mxu0 %v191
  %2878 = vmatprep.subr.mxu0 0.0
  %2879 = vmatpush1.msra.mxu0 %v190
  %2880 = vmatprep.subr.mxu0 0.0
  %2881 = vmatpush1.msra.mxu0 %v189
  %2882 = vmatprep.subr.mxu0 0.0
  %2883 = vmatpush1.msra.mxu0 %v188
  %2884 = vmatprep.subr.mxu0 0.0
  %2885 = vmatpush1.msra.mxu0 %v187
  %2886 = vmatprep.subr.mxu0 0.0
  %2887 = vmatpush1.msra.mxu0 %v186
  %2888 = vmatprep.subr.mxu0 0.0
  %2889 = vmatpush1.msra.mxu0 %v185
  %2890 = vmatprep.subr.mxu0 0.0
  %2891 = vmatpush1.msra.mxu0 %v184
  %2892 = vmatprep.subr.mxu0 0.0
  %2893 = vmatpush1.msra.mxu0 %v183
  %2894 = vmatprep.subr.mxu0 0.0
  %2895 = vmatpush2.msra.mxu0 0.0
  %2896 = vmatprep.subr.mxu0 0.0
  %2897 = vmatpush2.msra.mxu0 0.0
  %2898 = vmatprep.subr.mxu0 0.0
  %2899 = vmatpush2.msra.mxu0 0.0
  %2900 = vmatprep.subr.mxu0 0.0
  %2901 = vmatpush2.msra.mxu0 0.0
  %2902 = vmatprep.subr.mxu0 0.0
  %2903 = vmatpush2.msra.mxu0 0.0
  %2904 = vmatprep.subr.mxu0 0.0
  %2905 = vmatpush2.msra.mxu0 0.0
  %2906 = vmatprep.subr.mxu0 0.0
  %2907 = vmatpush2.msra.mxu0 0.0
  %2908 = vmatprep.subr.mxu0 0.0
  %2909 = vmatpush2.msra.mxu0 0.0
  %2910 = vmatprep.subr.mxu0 0.0
  %2911 = vmatpush2.msra.mxu0 0.0
  %2912 = vmatprep.subr.mxu0 0.0
  %2913 = vmatpush2.msra.mxu0 0.0
  %2914 = vmatprep.subr.mxu0 0.0
  %2915 = vmatpush2.msra.mxu0 0.0
  %2916 = vmatprep.subr.mxu0 0.0
  %2917 = vmatpush2.msra.mxu0 0.0
  %2918 = vmatprep.subr.mxu0 0.0
  %2919 = vmatpush2.msra.mxu0 0.0
  %2920 = vmatprep.subr.mxu0 0.0
  %2921 = vmatpush2.msra.mxu0 0.0
  %2922 = vmatprep.subr.mxu0 0.0
  %2923 = vmatpush2.msra.mxu0 0.0
  %2924 = vmatprep.subr.mxu0 0.0
  %2925 = vmatpush2.msra.mxu0 0.0
  %2926 = vmatprep.mubr.f32.mxu0 0.0
  %2927 = vmatmul.mubr.f32.gmra.mxu0 %v2616
  %v2928 = vpop.f32.mrf.mxu0
  %v2929 = vadd.f32 0.0, %v2928
  %v2930 = vpop.f32.mrf.mxu0
  %2931 = vdwg.mxu0
  %2932 = vmatprep.subr.mxu0 0.0
  %2933 = vmatpush1.msra.mxu0 %v182
  %2934 = vmatprep.subr.mxu0 0.0
  %2935 = vmatpush1.msra.mxu0 %v181
  %2936 = vmatprep.subr.mxu0 0.0
  %2937 = vmatpush1.msra.mxu0 %v180
  %2938 = vmatprep.subr.mxu0 0.0
  %2939 = vmatpush1.msra.mxu0 %v179
  %2940 = vmatprep.subr.mxu0 0.0
  %2941 = vmatpush1.msra.mxu0 %v178
  %2942 = vmatprep.subr.mxu0 0.0
  %2943 = vmatpush1.msra.mxu0 %v177
  %2944 = vmatprep.subr.mxu0 0.0
  %2945 = vmatpush1.msra.mxu0 %v176
  %2946 = vmatprep.subr.mxu0 0.0
  %2947 = vmatpush1.msra.mxu0 %v175
  %2948 = vmatprep.subr.mxu0 0.0
  %2949 = vmatpush1.msra.mxu0 %v174
  %2950 = vmatprep.subr.mxu0 0.0
  %2951 = vmatpush1.msra.mxu0 %v173
  %2952 = vmatprep.subr.mxu0 0.0
  %2953 = vmatpush1.msra.mxu0 %v172
  %2954 = vmatprep.subr.mxu0 0.0
  %2955 = vmatpush1.msra.mxu0 %v171
  %2956 = vmatprep.subr.mxu0 0.0
  %2957 = vmatpush1.msra.mxu0 %v170
  %2958 = vmatprep.subr.mxu0 0.0
  %2959 = vmatpush1.msra.mxu0 %v169
  %2960 = vmatprep.subr.mxu0 0.0
  %2961 = vmatpush1.msra.mxu0 %v168
  %2962 = vmatprep.subr.mxu0 0.0
  %2963 = vmatpush1.msra.mxu0 %v167
  %2964 = vmatprep.subr.mxu0 0.0
  %2965 = vmatpush2.msra.mxu0 0.0
  %2966 = vmatprep.subr.mxu0 0.0
  %2967 = vmatpush2.msra.mxu0 0.0
  %2968 = vmatprep.subr.mxu0 0.0
  %2969 = vmatpush2.msra.mxu0 0.0
  %2970 = vmatprep.subr.mxu0 0.0
  %2971 = vmatpush2.msra.mxu0 0.0
  %2972 = vmatprep.subr.mxu0 0.0
  %2973 = vmatpush2.msra.mxu0 0.0
  %2974 = vmatprep.subr.mxu0 0.0
  %2975 = vmatpush2.msra.mxu0 0.0
  %2976 = vmatprep.subr.mxu0 0.0
  %2977 = vmatpush2.msra.mxu0 0.0
  %2978 = vmatprep.subr.mxu0 0.0
  %2979 = vmatpush2.msra.mxu0 0.0
  %2980 = vmatprep.subr.mxu0 0.0
  %2981 = vmatpush2.msra.mxu0 0.0
  %2982 = vmatprep.subr.mxu0 0.0
  %2983 = vmatpush2.msra.mxu0 0.0
  %2984 = vmatprep.subr.mxu0 0.0
  %2985 = vmatpush2.msra.mxu0 0.0
  %2986 = vmatprep.subr.mxu0 0.0
  %2987 = vmatpush2.msra.mxu0 0.0
  %2988 = vmatprep.subr.mxu0 0.0
  %2989 = vmatpush2.msra.mxu0 0.0
  %2990 = vmatprep.subr.mxu0 0.0
  %2991 = vmatpush2.msra.mxu0 0.0
  %2992 = vmatprep.subr.mxu0 0.0
  %2993 = vmatpush2.msra.mxu0 0.0
  %2994 = vmatprep.subr.mxu0 0.0
  %2995 = vmatpush2.msra.mxu0 0.0
  %2996 = vmatprep.mubr.f32.mxu0 0.0
  %2997 = vmatmul.mubr.f32.gmra.mxu0 %v2861
  %v2998 = vpop.f32.mrf.mxu0
  %v2999 = vadd.f32 %v2929, %v2998
  %v3000 = vpop.f32.mrf.mxu0
  %3001 = vdwg.mxu0
  %v3002 = vadd.f32 %v2999, %v211
  %v3003 = vmul.f32 %v113, %v2605
  %v3004 = vmul.f32 %v118, %v2616
  %v3005 = vadd.f32 %v3003, %v3004
  %v3006 = vmul.f32 %v3005, 1.8
  %v3007 = vadd.f32 %v3006, 0.01
  %v3008 = vmul.f32 %v2612, %v103
  %v3009 = vmul.f32 %v108, %v3002
  %v3010 = vadd.f32 %v3008, %v3009
  %v3011 = vmul.f32 %v3007, %v2616
  %v3012 = vsub.f32 %v3010, %v3011
  %v3013 = vsub.f32 %v3012, %v3007
  %vm3014 = vcmp.gt.f32.partialorder %v3013, 0.0
  %v3015 = vsel %vm3014, 1, 0
  %v3016 = vcvt.s32.f32 %v3015
  %s3017 = scalar_lea.vmem %s11, 96
  %3018 = vst [vmem:[%s3017] sm:$0xff] %v3012
  %3019 = vst [vmem:[%s3017 + $0x8] sm:$0xff] %v3016
  %s3020 = scalar_lea.vmem %s0, 56
  %v3021 = vld [vmem:[%s3020] sm:$0xff]
  %3022 = vmatprep.subr.mxu0 0.0
  %3023 = vmatpush1.msra.mxu0 %v134
  %3024 = vmatprep.subr.mxu0 0.0
  %3025 = vmatpush1.msra.mxu0 %v133
  %3026 = vmatprep.subr.mxu0 0.0
  %3027 = vmatpush1.msra.mxu0 %v132
  %3028 = vmatprep.subr.mxu0 0.0
  %3029 = vmatpush1.msra.mxu0 %v131
  %3030 = vmatprep.subr.mxu0 0.0
  %3031 = vmatpush1.msra.mxu0 %v130
  %3032 = vmatprep.subr.mxu0 0.0
  %3033 = vmatpush1.msra.mxu0 %v129
  %3034 = vmatprep.subr.mxu0 0.0
  %3035 = vmatpush1.msra.mxu0 %v128
  %3036 = vmatprep.subr.mxu0 0.0
  %3037 = vmatpush1.msra.mxu0 %v127
  %3038 = vmatprep.subr.mxu0 0.0
  %3039 = vmatpush1.msra.mxu0 %v126
  %3040 = vmatprep.subr.mxu0 0.0
  %3041 = vmatpush1.msra.mxu0 %v125
  %3042 = vmatprep.subr.mxu0 0.0
  %3043 = vmatpush1.msra.mxu0 %v124
  %3044 = vmatprep.subr.mxu0 0.0
  %3045 = vmatpush1.msra.mxu0 %v123
  %3046 = vmatprep.subr.mxu0 0.0
  %3047 = vmatpush1.msra.mxu0 %v122
  %3048 = vmatprep.subr.mxu0 0.0
  %3049 = vmatpush1.msra.mxu0 %v121
  %3050 = vmatprep.subr.mxu0 0.0
  %3051 = vmatpush1.msra.mxu0 %v120
  %3052 = vmatprep.subr.mxu0 0.0
  %3053 = vmatpush1.msra.mxu0 %v119
  %3054 = vmatprep.subr.mxu0 0.0
  %3055 = vmatpush2.msra.mxu0 0.0
  %3056 = vmatprep.subr.mxu0 0.0
  %3057 = vmatpush2.msra.mxu0 0.0
  %3058 = vmatprep.subr.mxu0 0.0
  %3059 = vmatpush2.msra.mxu0 0.0
  %3060 = vmatprep.subr.mxu0 0.0
  %3061 = vmatpush2.msra.mxu0 0.0
  %3062 = vmatprep.subr.mxu0 0.0
  %3063 = vmatpush2.msra.mxu0 0.0
  %3064 = vmatprep.subr.mxu0 0.0
  %3065 = vmatpush2.msra.mxu0 0.0
  %3066 = vmatprep.subr.mxu0 0.0
  %3067 = vmatpush2.msra.mxu0 0.0
  %3068 = vmatprep.subr.mxu0 0.0
  %3069 = vmatpush2.msra.mxu0 0.0
  %3070 = vmatprep.subr.mxu0 0.0
  %3071 = vmatpush2.msra.mxu0 0.0
  %3072 = vmatprep.subr.mxu0 0.0
  %3073 = vmatpush2.msra.mxu0 0.0
  %3074 = vmatprep.subr.mxu0 0.0
  %3075 = vmatpush2.msra.mxu0 0.0
  %3076 = vmatprep.subr.mxu0 0.0
  %3077 = vmatpush2.msra.mxu0 0.0
  %3078 = vmatprep.subr.mxu0 0.0
  %3079 = vmatpush2.msra.mxu0 0.0
  %3080 = vmatprep.subr.mxu0 0.0
  %3081 = vmatpush2.msra.mxu0 0.0
  %3082 = vmatprep.subr.mxu0 0.0
  %3083 = vmatpush2.msra.mxu0 0.0
  %3084 = vmatprep.subr.mxu0 0.0
  %3085 = vmatpush2.msra.mxu0 0.0
  %3086 = vmatprep.mubr.f32.mxu0 0.0
  %3087 = vmatmul.mubr.f32.gmra.mxu0 %v2706
  %v3088 = vpop.f32.mrf.mxu0
  %v3089 = vadd.f32 0.0, %v3088
  %v3090 = vpop.f32.mrf.mxu0
  %3091 = vdwg.mxu0
  %v3092 = vadd.f32 %v3021, %v3089
  %v3093 = vmul.f32 %v73, %v2695
  %v3094 = vmul.f32 %v78, %v2706
  %v3095 = vadd.f32 %v3093, %v3094
  %v3096 = vmul.f32 %v3095, 1.8
  %v3097 = vadd.f32 %v3096, 0.01
  %v3098 = vmul.f32 %v2702, %v63
  %v3099 = vmul.f32 %v68, %v3092
  %v3100 = vadd.f32 %v3098, %v3099
  %v3101 = vmul.f32 %v3097, %v2706
  %v3102 = vsub.f32 %v3100, %v3101
  %v3103 = vsub.f32 %v3102, %v3097
  %vm3104 = vcmp.gt.f32.partialorder %v3103, 0.0
  %v3105 = vsel %vm3104, 1, 0
  %v3106 = vcvt.s32.f32 %v3105
  %3107 = vmatprep.subr.mxu0 0.0
  %3108 = vmatpush1.msra.mxu0 %v166
  %3109 = vmatprep.subr.mxu0 0.0
  %3110 = vmatpush1.msra.mxu0 %v165
  %3111 = vmatprep.subr.mxu0 0.0
  %3112 = vmatpush1.msra.mxu0 %v164
  %3113 = vmatprep.subr.mxu0 0.0
  %3114 = vmatpush1.msra.mxu0 %v163
  %3115 = vmatprep.subr.mxu0 0.0
  %3116 = vmatpush1.msra.mxu0 %v162
  %3117 = vmatprep.subr.mxu0 0.0
  %3118 = vmatpush1.msra.mxu0 %v161
  %3119 = vmatprep.subr.mxu0 0.0
  %3120 = vmatpush1.msra.mxu0 %v160
  %3121 = vmatprep.subr.mxu0 0.0
  %3122 = vmatpush1.msra.mxu0 %v159
  %3123 = vmatprep.subr.mxu0 0.0
  %3124 = vmatpush1.msra.mxu0 %v158
  %3125 = vmatprep.subr.mxu0 0.0
  %3126 = vmatpush1.msra.mxu0 %v157
  %3127 = vmatprep.subr.mxu0 0.0
  %3128 = vmatpush1.msra.mxu0 %v156
  %3129 = vmatprep.subr.mxu0 0.0
  %3130 = vmatpush1.msra.mxu0 %v155
  %3131 = vmatprep.subr.mxu0 0.0
  %3132 = vmatpush1.msra.mxu0 %v154
  %3133 = vmatprep.subr.mxu0 0.0
  %3134 = vmatpush1.msra.mxu0 %v153
  %3135 = vmatprep.subr.mxu0 0.0
  %3136 = vmatpush1.msra.mxu0 %v152
  %3137 = vmatprep.subr.mxu0 0.0
  %3138 = vmatpush1.msra.mxu0 %v151
  %3139 = vmatprep.subr.mxu0 0.0
  %3140 = vmatpush2.msra.mxu0 0.0
  %3141 = vmatprep.subr.mxu0 0.0
  %3142 = vmatpush2.msra.mxu0 0.0
  %3143 = vmatprep.subr.mxu0 0.0
  %3144 = vmatpush2.msra.mxu0 0.0
  %3145 = vmatprep.subr.mxu0 0.0
  %3146 = vmatpush2.msra.mxu0 0.0
  %3147 = vmatprep.subr.mxu0 0.0
  %3148 = vmatpush2.msra.mxu0 0.0
  %3149 = vmatprep.subr.mxu0 0.0
  %3150 = vmatpush2.msra.mxu0 0.0
  %3151 = vmatprep.subr.mxu0 0.0
  %3152 = vmatpush2.msra.mxu0 0.0
  %3153 = vmatprep.subr.mxu0 0.0
  %3154 = vmatpush2.msra.mxu0 0.0
  %3155 = vmatprep.subr.mxu0 0.0
  %3156 = vmatpush2.msra.mxu0 0.0
  %3157 = vmatprep.subr.mxu0 0.0
  %3158 = vmatpush2.msra.mxu0 0.0
  %3159 = vmatprep.subr.mxu0 0.0
  %3160 = vmatpush2.msra.mxu0 0.0
  %3161 = vmatprep.subr.mxu0 0.0
  %3162 = vmatpush2.msra.mxu0 0.0
  %3163 = vmatprep.subr.mxu0 0.0
  %3164 = vmatpush2.msra.mxu0 0.0
  %3165 = vmatprep.subr.mxu0 0.0
  %3166 = vmatpush2.msra.mxu0 0.0
  %3167 = vmatprep.subr.mxu0 0.0
  %3168 = vmatpush2.msra.mxu0 0.0
  %3169 = vmatprep.subr.mxu0 0.0
  %3170 = vmatpush2.msra.mxu0 0.0
  %3171 = vmatprep.mubr.f32.mxu0 0.0
  %3172 = vmatmul.mubr.f32.gmra.mxu0 %v2861
  %v3173 = vpop.f32.mrf.mxu0
  %v3174 = vadd.f32 0.0, %v3173
  %v3175 = vpop.f32.mrf.mxu0
  %3176 = vdwg.mxu0
  %3177 = vmatprep.subr.mxu0 0.0
  %3178 = vmatpush1.msra.mxu0 %v150
  %3179 = vmatprep.subr.mxu0 0.0
  %3180 = vmatpush1.msra.mxu0 %v149
  %3181 = vmatprep.subr.mxu0 0.0
  %3182 = vmatpush1.msra.mxu0 %v148
  %3183 = vmatprep.subr.mxu0 0.0
  %3184 = vmatpush1.msra.mxu0 %v147
  %3185 = vmatprep.subr.mxu0 0.0
  %3186 = vmatpush1.msra.mxu0 %v146
  %3187 = vmatprep.subr.mxu0 0.0
  %3188 = vmatpush1.msra.mxu0 %v145
  %3189 = vmatprep.subr.mxu0 0.0
  %3190 = vmatpush1.msra.mxu0 %v144
  %3191 = vmatprep.subr.mxu0 0.0
  %3192 = vmatpush1.msra.mxu0 %v143
  %3193 = vmatprep.subr.mxu0 0.0
  %3194 = vmatpush1.msra.mxu0 %v142
  %3195 = vmatprep.subr.mxu0 0.0
  %3196 = vmatpush1.msra.mxu0 %v141
  %3197 = vmatprep.subr.mxu0 0.0
  %3198 = vmatpush1.msra.mxu0 %v140
  %3199 = vmatprep.subr.mxu0 0.0
  %3200 = vmatpush1.msra.mxu0 %v139
  %3201 = vmatprep.subr.mxu0 0.0
  %3202 = vmatpush1.msra.mxu0 %v138
  %3203 = vmatprep.subr.mxu0 0.0
  %3204 = vmatpush1.msra.mxu0 %v137
  %3205 = vmatprep.subr.mxu0 0.0
  %3206 = vmatpush1.msra.mxu0 %v136
  %3207 = vmatprep.subr.mxu0 0.0
  %3208 = vmatpush1.msra.mxu0 %v135
  %3209 = vmatprep.subr.mxu0 0.0
  %3210 = vmatpush2.msra.mxu0 0.0
  %3211 = vmatprep.subr.mxu0 0.0
  %3212 = vmatpush2.msra.mxu0 0.0
  %3213 = vmatprep.subr.mxu0 0.0
  %3214 = vmatpush2.msra.mxu0 0.0
  %3215 = vmatprep.subr.mxu0 0.0
  %3216 = vmatpush2.msra.mxu0 0.0
  %3217 = vmatprep.subr.mxu0 0.0
  %3218 = vmatpush2.msra.mxu0 0.0
  %3219 = vmatprep.subr.mxu0 0.0
  %3220 = vmatpush2.msra.mxu0 0.0
  %3221 = vmatprep.subr.mxu0 0.0
  %3222 = vmatpush2.msra.mxu0 0.0
  %3223 = vmatprep.subr.mxu0 0.0
  %3224 = vmatpush2.msra.mxu0 0.0
  %3225 = vmatprep.subr.mxu0 0.0
  %3226 = vmatpush2.msra.mxu0 0.0
  %3227 = vmatprep.subr.mxu0 0.0
  %3228 = vmatpush2.msra.mxu0 0.0
  %3229 = vmatprep.subr.mxu0 0.0
  %3230 = vmatpush2.msra.mxu0 0.0
  %3231 = vmatprep.subr.mxu0 0.0
  %3232 = vmatpush2.msra.mxu0 0.0
  %3233 = vmatprep.subr.mxu0 0.0
  %3234 = vmatpush2.msra.mxu0 0.0
  %3235 = vmatprep.subr.mxu0 0.0
  %3236 = vmatpush2.msra.mxu0 0.0
  %3237 = vmatprep.subr.mxu0 0.0
  %3238 = vmatpush2.msra.mxu0 0.0
  %3239 = vmatprep.subr.mxu0 0.0
  %3240 = vmatpush2.msra.mxu0 0.0
  %3241 = vmatprep.mubr.f32.mxu0 0.0
  %3242 = vmatmul.mubr.f32.gmra.mxu0 %v3106
  %v3243 = vpop.f32.mrf.mxu0
  %v3244 = vadd.f32 %v3174, %v3243
  %v3245 = vpop.f32.mrf.mxu0
  %3246 = vdwg.mxu0
  %v3247 = vadd.f32 %v3244, %v204
  %v3248 = vmul.f32 %v93, %v2850
  %v3249 = vmul.f32 %v98, %v2861
  %v3250 = vadd.f32 %v3248, %v3249
  %v3251 = vmul.f32 %v3250, 1.8
  %v3252 = vadd.f32 %v3251, 0.01
  %v3253 = vmul.f32 %v2857, %v83
  %v3254 = vmul.f32 %v88, %v3247
  %v3255 = vadd.f32 %v3253, %v3254
  %v3256 = vmul.f32 %v3252, %v2861
  %v3257 = vsub.f32 %v3255, %v3256
  %v3258 = vsub.f32 %v3257, %v3252
  %vm3259 = vcmp.gt.f32.partialorder %v3258, 0.0
  %v3260 = vsel %vm3259, 1, 0
  %v3261 = vcvt.s32.f32 %v3260
  %3262 = vmatprep.subr.mxu0 0.0
  %3263 = vmatpush1.msra.mxu0 %v198
  %3264 = vmatprep.subr.mxu0 0.0
  %3265 = vmatpush1.msra.mxu0 %v197
  %3266 = vmatprep.subr.mxu0 0.0
  %3267 = vmatpush1.msra.mxu0 %v196
  %3268 = vmatprep.subr.mxu0 0.0
  %3269 = vmatpush1.msra.mxu0 %v195
  %3270 = vmatprep.subr.mxu0 0.0
  %3271 = vmatpush1.msra.mxu0 %v194
  %3272 = vmatprep.subr.mxu0 0.0
  %3273 = vmatpush1.msra.mxu0 %v193
  %3274 = vmatprep.subr.mxu0 0.0
  %3275 = vmatpush1.msra.mxu0 %v192
  %3276 = vmatprep.subr.mxu0 0.0
  %3277 = vmatpush1.msra.mxu0 %v191
  %3278 = vmatprep.subr.mxu0 0.0
  %3279 = vmatpush1.msra.mxu0 %v190
  %3280 = vmatprep.subr.mxu0 0.0
  %3281 = vmatpush1.msra.mxu0 %v189
  %3282 = vmatprep.subr.mxu0 0.0
  %3283 = vmatpush1.msra.mxu0 %v188
  %3284 = vmatprep.subr.mxu0 0.0
  %3285 = vmatpush1.msra.mxu0 %v187
  %3286 = vmatprep.subr.mxu0 0.0
  %3287 = vmatpush1.msra.mxu0 %v186
  %3288 = vmatprep.subr.mxu0 0.0
  %3289 = vmatpush1.msra.mxu0 %v185
  %3290 = vmatprep.subr.mxu0 0.0
  %3291 = vmatpush1.msra.mxu0 %v184
  %3292 = vmatprep.subr.mxu0 0.0
  %3293 = vmatpush1.msra.mxu0 %v183
  %3294 = vmatprep.subr.mxu0 0.0
  %3295 = vmatpush2.msra.mxu0 0.0
  %3296 = vmatprep.subr.mxu0 0.0
  %3297 = vmatpush2.msra.mxu0 0.0
  %3298 = vmatprep.subr.mxu0 0.0
  %3299 = vmatpush2.msra.mxu0 0.0
  %3300 = vmatprep.subr.mxu0 0.0
  %3301 = vmatpush2.msra.mxu0 0.0
  %3302 = vmatprep.subr.mxu0 0.0
  %3303 = vmatpush2.msra.mxu0 0.0
  %3304 = vmatprep.subr.mxu0 0.0
  %3305 = vmatpush2.msra.mxu0 0.0
  %3306 = vmatprep.subr.mxu0 0.0
  %3307 = vmatpush2.msra.mxu0 0.0
  %3308 = vmatprep.subr.mxu0 0.0
  %3309 = vmatpush2.msra.mxu0 0.0
  %3310 = vmatprep.subr.mxu0 0.0
  %3311 = vmatpush2.msra.mxu0 0.0
  %3312 = vmatprep.subr.mxu0 0.0
  %3313 = vmatpush2.msra.mxu0 0.0
  %3314 = vmatprep.subr.mxu0 0.0
  %3315 = vmatpush2.msra.mxu0 0.0
  %3316 = vmatprep.subr.mxu0 0.0
  %3317 = vmatpush2.msra.mxu0 0.0
  %3318 = vmatprep.subr.mxu0 0.0
  %3319 = vmatpush2.msra.mxu0 0.0
  %3320 = vmatprep.subr.mxu0 0.0
  %3321 = vmatpush2.msra.mxu0 0.0
  %3322 = vmatprep.subr.mxu0 0.0
  %3323 = vmatpush2.msra.mxu0 0.0
  %3324 = vmatprep.subr.mxu0 0.0
  %3325 = vmatpush2.msra.mxu0 0.0
  %3326 = vmatprep.mubr.f32.mxu0 0.0
  %3327 = vmatmul.mubr.f32.gmra.mxu0 %v3016
  %v3328 = vpop.f32.mrf.mxu0
  %v3329 = vadd.f32 0.0, %v3328
  %v3330 = vpop.f32.mrf.mxu0
  %3331 = vdwg.mxu0
  %3332 = vmatprep.subr.mxu0 0.0
  %3333 = vmatpush1.msra.mxu0 %v182
  %3334 = vmatprep.subr.mxu0 0.0
  %3335 = vmatpush1.msra.mxu0 %v181
  %3336 = vmatprep.subr.mxu0 0.0
  %3337 = vmatpush1.msra.mxu0 %v180
  %3338 = vmatprep.subr.mxu0 0.0
  %3339 = vmatpush1.msra.mxu0 %v179
  %3340 = vmatprep.subr.mxu0 0.0
  %3341 = vmatpush1.msra.mxu0 %v178
  %3342 = vmatprep.subr.mxu0 0.0
  %3343 = vmatpush1.msra.mxu0 %v177
  %3344 = vmatprep.subr.mxu0 0.0
  %3345 = vmatpush1.msra.mxu0 %v176
  %3346 = vmatprep.subr.mxu0 0.0
  %3347 = vmatpush1.msra.mxu0 %v175
  %3348 = vmatprep.subr.mxu0 0.0
  %3349 = vmatpush1.msra.mxu0 %v174
  %3350 = vmatprep.subr.mxu0 0.0
  %3351 = vmatpush1.msra.mxu0 %v173
  %3352 = vmatprep.subr.mxu0 0.0
  %3353 = vmatpush1.msra.mxu0 %v172
  %3354 = vmatprep.subr.mxu0 0.0
  %3355 = vmatpush1.msra.mxu0 %v171
  %3356 = vmatprep.subr.mxu0 0.0
  %3357 = vmatpush1.msra.mxu0 %v170
  %3358 = vmatprep.subr.mxu0 0.0
  %3359 = vmatpush1.msra.mxu0 %v169
  %3360 = vmatprep.subr.mxu0 0.0
  %3361 = vmatpush1.msra.mxu0 %v168
  %3362 = vmatprep.subr.mxu0 0.0
  %3363 = vmatpush1.msra.mxu0 %v167
  %3364 = vmatprep.subr.mxu0 0.0
  %3365 = vmatpush2.msra.mxu0 0.0
  %3366 = vmatprep.subr.mxu0 0.0
  %3367 = vmatpush2.msra.mxu0 0.0
  %3368 = vmatprep.subr.mxu0 0.0
  %3369 = vmatpush2.msra.mxu0 0.0
  %3370 = vmatprep.subr.mxu0 0.0
  %3371 = vmatpush2.msra.mxu0 0.0
  %3372 = vmatprep.subr.mxu0 0.0
  %3373 = vmatpush2.msra.mxu0 0.0
  %3374 = vmatprep.subr.mxu0 0.0
  %3375 = vmatpush2.msra.mxu0 0.0
  %3376 = vmatprep.subr.mxu0 0.0
  %3377 = vmatpush2.msra.mxu0 0.0
  %3378 = vmatprep.subr.mxu0 0.0
  %3379 = vmatpush2.msra.mxu0 0.0
  %3380 = vmatprep.subr.mxu0 0.0
  %3381 = vmatpush2.msra.mxu0 0.0
  %3382 = vmatprep.subr.mxu0 0.0
  %3383 = vmatpush2.msra.mxu0 0.0
  %3384 = vmatprep.subr.mxu0 0.0
  %3385 = vmatpush2.msra.mxu0 0.0
  %3386 = vmatprep.subr.mxu0 0.0
  %3387 = vmatpush2.msra.mxu0 0.0
  %3388 = vmatprep.subr.mxu0 0.0
  %3389 = vmatpush2.msra.mxu0 0.0
  %3390 = vmatprep.subr.mxu0 0.0
  %3391 = vmatpush2.msra.mxu0 0.0
  %3392 = vmatprep.subr.mxu0 0.0
  %3393 = vmatpush2.msra.mxu0 0.0
  %3394 = vmatprep.subr.mxu0 0.0
  %3395 = vmatpush2.msra.mxu0 0.0
  %3396 = vmatprep.mubr.f32.mxu0 0.0
  %3397 = vmatmul.mubr.f32.gmra.mxu0 %v3261
  %v3398 = vpop.f32.mrf.mxu0
  %v3399 = vadd.f32 %v3329, %v3398
  %v3400 = vpop.f32.mrf.mxu0
  %3401 = vdwg.mxu0
  %v3402 = vadd.f32 %v3399, %v211
  %v3403 = vmul.f32 %v113, %v3005
  %v3404 = vmul.f32 %v118, %v3016
  %v3405 = vadd.f32 %v3403, %v3404
  %v3406 = vmul.f32 %v3405, 1.8
  %v3407 = vadd.f32 %v3406, 0.01
  %v3408 = vmul.f32 %v3012, %v103
  %v3409 = vmul.f32 %v108, %v3402
  %v3410 = vadd.f32 %v3408, %v3409
  %v3411 = vmul.f32 %v3407, %v3016
  %v3412 = vsub.f32 %v3410, %v3411
  %v3413 = vsub.f32 %v3412, %v3407
  %vm3414 = vcmp.gt.f32.partialorder %v3413, 0.0
  %v3415 = vsel %vm3414, 1, 0
  %v3416 = vcvt.s32.f32 %v3415
  %s3417 = scalar_lea.vmem %s11, 112
  %3418 = vst [vmem:[%s3417] sm:$0xff] %v3412
  %3419 = vst [vmem:[%s3417 + $0x8] sm:$0xff] %v3416
  %3420 = vst [vmem:[#allocation2] sm:$0xff] %v3102
  %3421 = vst [vmem:[#allocation3] sm:$0xff] %v3106
  %3422 = vst [vmem:[#allocation4] sm:$0xff] %v3095
  %3423 = vst [vmem:[#allocation5] sm:$0xff] %v3257
  %3424 = vst [vmem:[#allocation6] sm:$0xff] %v3261
  %3425 = vst [vmem:[#allocation7] sm:$0xff] %v3250
  %3426 = vst [vmem:[#allocation8] sm:$0xff] %v3412
  %3427 = vst [vmem:[#allocation9] sm:$0xff] %v3416
  %3428 = vst [vmem:[#allocation10] sm:$0xff] %v3405
  // Predicated region
  $region50: #{srnn_alif_forward.1} parent=0 // pred_check
    %p3429 = pneg %p46
  $region51: #{srnn_alif_forward.1} parent=0 // pred_check_branch
    %3431 = sbr.rel (%p3429) target = $region53
  $region52: #{srnn_alif_forward.1} parent=0 // pred_region
    %3432 = vst [vmem:[%s12] sm:$0xff] %v3102
    %3433 = vst [vmem:[%s13] sm:$0xff] %v3106
    %3434 = vst [vmem:[%s14] sm:$0xff] %v3095
    %3435 = vst [vmem:[%s15] sm:$0xff] %v3257
    %3436 = vst [vmem:[%s16] sm:$0xff] %v3261
    %3437 = vst [vmem:[%s17] sm:$0xff] %v3250
    %3438 = vst [vmem:[%s18] sm:$0xff] %v3405
  $region53: #{srnn_alif_forward.1} parent=0 // pred_fallthru
    _
  // Predicated region
  $region54: #{srnn_alif_forward.1} parent=0 // pred_check
    _
  $region55: #{srnn_alif_forward.1} parent=0 // pred_check_branch
    %3440 = sbr.rel (0) target = $region57
  $region56: #{srnn_alif_forward.1} parent=0 // pred_region
    _
  $region57: #{srnn_alif_forward.1} parent=0 // pred_fallthru
    _
  // Predicated region
  $region58: #{srnn_alif_forward.1} parent=0 // pred_check
    _
  $region59: #{srnn_alif_forward.1} parent=0 // pred_check_branch
    %3442 = sbr.rel (0) target = $region61
  $region60: #{srnn_alif_forward.1} parent=0 // pred_region
    _
  $region61: #{srnn_alif_forward.1} parent=0 // pred_fallthru
    _
  // Predicated region
  $region62: #{srnn_alif_forward.1} parent=0 // pred_check
    _
  $region63: #{srnn_alif_forward.1} parent=0 // pred_check_branch
    %3444 = sbr.rel (0) target = $region65
  $region64: #{srnn_alif_forward.1} parent=0 // pred_region
    _
  $region65: #{srnn_alif_forward.1} parent=0 // pred_fallthru
    _
  // Predicated region
  $region66: #{srnn_alif_forward.1} parent=0 // pred_check
    _
  $region67: #{srnn_alif_forward.1} parent=0 // pred_check_branch
    %3446 = sbr.rel (0) target = $region69
  $region68: #{srnn_alif_forward.1} parent=0 // pred_region
    _
  $region69: #{srnn_alif_forward.1} parent=0 // pred_fallthru
    _
  // Predicated region
  $region70: #{srnn_alif_forward.1} parent=0 // pred_check
    _
  $region71: #{srnn_alif_forward.1} parent=0 // pred_check_branch
    %3448 = sbr.rel (0) target = $region73
  $region72: #{srnn_alif_forward.1} parent=0 // pred_region
    _
  $region73: #{srnn_alif_forward.1} parent=0 // pred_fallthru
    _
  // Predicated region
  $region74: #{srnn_alif_forward.1} parent=0 // pred_check
    _
  $region75: #{srnn_alif_forward.1} parent=0 // pred_check_branch
    %3450 = sbr.rel (0) target = $region77
  $region76: #{srnn_alif_forward.1} parent=0 // pred_region
    _
  $region77: #{srnn_alif_forward.1} parent=0 // pred_fallthru
    _
  // Predicated region
  $region78: #{srnn_alif_forward.1} parent=0 // pred_check
    _
  $region79: #{srnn_alif_forward.1} parent=0 // pred_check_branch
    %3452 = sbr.rel (0) target = $region81
  $region80: #{srnn_alif_forward.1} parent=0 // pred_region
    _
  $region81: #{srnn_alif_forward.1} parent=0 // pred_fallthru
    _
  // Predicated region
  $region82: #{srnn_alif_forward.1} parent=0 // pred_check
    _
  $region83: #{srnn_alif_forward.1} parent=0 // pred_check_branch
    %3454 = sbr.rel (0) target = $region85
  $region84: #{srnn_alif_forward.1} parent=0 // pred_region
    _
  $region85: #{srnn_alif_forward.1} parent=0 // pred_fallthru
    _
  // Predicated region
  $region86: #{srnn_alif_forward.1} parent=0 // pred_check
    _
  $region87: #{srnn_alif_forward.1} parent=0 // pred_check_branch
    %3456 = sbr.rel (0) target = $region89
  $region88: #{srnn_alif_forward.1} parent=0 // pred_region
    _
  $region89: #{srnn_alif_forward.1} parent=0 // pred_fallthru
    _
  // Predicated region
  $region90: #{srnn_alif_forward.1} parent=0 // pred_check
    _
  $region91: #{srnn_alif_forward.1} parent=0 // pred_check_branch
    %3458 = sbr.rel (0) target = $region93
  $region92: #{srnn_alif_forward.1} parent=0 // pred_region
    _
  $region93: #{srnn_alif_forward.1} parent=0 // pred_fallthru
    _
  // Predicated region
  $region94: #{srnn_alif_forward.1} parent=0 // pred_check
    _
  $region95: #{srnn_alif_forward.1} parent=0 // pred_check_branch
    %3460 = sbr.rel (0) target = $region97
  $region96: #{srnn_alif_forward.1} parent=0 // pred_region
    _
  $region97: #{srnn_alif_forward.1} parent=0 // pred_fallthru
    _
  // Predicated region
  $region98: #{srnn_alif_forward.1} parent=0 // pred_check
    _
  $region99: #{srnn_alif_forward.1} parent=0 // pred_check_branch
    %3462 = sbr.rel (0) target = $region101
  $region100: #{srnn_alif_forward.1} parent=0 // pred_region
    _
  $region101: #{srnn_alif_forward.1} parent=0 // pred_fallthru
    _
  // Predicated region
  $region102: #{srnn_alif_forward.1} parent=0 // pred_check
    _
  $region103: #{srnn_alif_forward.1} parent=0 // pred_check_branch
    %3464 = sbr.rel (0) target = $region105
  $region104: #{srnn_alif_forward.1} parent=0 // pred_region
    _
  $region105: #{srnn_alif_forward.1} parent=0 // pred_fallthru
    _
  // Predicated region
  $region106: #{srnn_alif_forward.1} parent=0 // pred_check
    _
  $region107: #{srnn_alif_forward.1} parent=0 // pred_check_branch
    %3466 = sbr.rel (0) target = $region109
  $region108: #{srnn_alif_forward.1} parent=0 // pred_region
    _
  $region109: #{srnn_alif_forward.1} parent=0 // pred_fallthru
    _
  // Predicated region
  $region110: #{srnn_alif_forward.1} parent=0 // pred_check
    _
  $region111: #{srnn_alif_forward.1} parent=0 // pred_check_branch
    %3468 = sbr.rel (0) target = $region113
  $region112: #{srnn_alif_forward.1} parent=0 // pred_region
    _
  $region113: #{srnn_alif_forward.1} parent=0 // pred_fallthru
    _
  // Predicated region
  $region114: #{srnn_alif_forward.1} parent=0 // pred_check
    _
  $region115: #{srnn_alif_forward.1} parent=0 // pred_check_branch
    %3470 = sbr.rel (0) target = $region117
  $region116: #{srnn_alif_forward.1} parent=0 // pred_region
    _
  $region117: #{srnn_alif_forward.1} parent=0 // pred_fallthru
    _

</llo_original>
